<compile_context>
chip_gen: v5e
topology: v5e:2x2
jax: 0.10.0
libtpu: 0.0.40
codegen_flags: <defaults>
</compile_context>

<pallas_src>
import math

import jax
import jax.numpy as jnp
from jax.experimental import pallas as pl
from jax.experimental.pallas import tpu as pltpu

# ---------------- small synthetic config ----------------
IMG = 16          # input spatial size
PATCH = 4         # patch size
CHANNELS = 3      # input channels
HIDDEN = 32       # hidden size
HEADS = 4         # attention heads
HEAD_DIM = HIDDEN // HEADS
MLP = 64          # intermediate size
LAYERS = 2        # encoder depth
LN_EPS = 1e-12    # ViT layer_norm_eps
BATCH = 2

N_PATCHES = (IMG // PATCH) ** 2          # 16
SEQ = N_PATCHES + 1                      # 17 (CLS + patches)
SEQ_PAD = ((SEQ + 7) // 8) * 8           # 24: pad to full sublane groups

# MXU matmul input dtype. Keep f32 here so the strict 1e-4 check vs the f32
# reference passes; on v6e/v7x at real ViT sizes set this to jnp.bfloat16
# (LayerNorm stats / softmax / residuals stay f32 regardless).
MM_DTYPE = jnp.float32


# ---------------- in-kernel helpers ----------------
def _mm(a, b):
    return jnp.dot(a.astype(MM_DTYPE), b.astype(MM_DTYPE),
                   preferred_element_type=jnp.float32)


def _layer_norm(h, w, b):
    mu = jnp.mean(h, axis=-1, keepdims=True)
    var = jnp.mean((h - mu) ** 2, axis=-1, keepdims=True)
    return (h - mu) * jax.lax.rsqrt(var + LN_EPS) * w + b


def _gelu_exact(x):
    return 0.5 * x * (1.0 + jax.lax.erf(x * (1.0 / math.sqrt(2.0))))


# ---------------- fused forward kernel ----------------
def _vit_fused_kernel(
    xp_ref,                      # (B*N, C*P*P) patchified pixels
    pw_ref, pb_ref,              # (C*P*P, D), (1, D) patch embedding
    cls_ref, pos_ref,            # (1, D), (SEQ_PAD, D) (pos rows >= SEQ are zero)
    ln1w_ref, ln1b_ref,          # (L, 1, D)
    wqkv_ref, bqkv_ref,          # (L, D, 3D), (L, 1, 3D)  (softmax scale folded into Q)
    wo_ref, bo_ref,              # (L, D, D), (L, 1, D)
    ln2w_ref, ln2b_ref,          # (L, 1, D)
    w1_ref, b1_ref,              # (L, D, MLP), (L, 1, MLP)
    w2_ref, b2_ref,              # (L, MLP, D), (L, 1, D)
    lnfw_ref, lnfb_ref,          # (1, D)
    o_ref,                       # (B, SEQ_PAD, D)
):
    f32 = jnp.float32

    # --- patch embedding (Conv2d(k=P, stride=P) as one matmul) ---
    emb = _mm(xp_ref[...], pw_ref[...]) + pb_ref[...]        # (B*N, D)
    emb = emb.reshape(BATCH, N_PATCHES, HIDDEN)

    # --- build token buffer in-kernel: [CLS, patches, zero pad] + position embed ---
    cls = jnp.broadcast_to(cls_ref[...].reshape(1, 1, HIDDEN), (BATCH, 1, HIDDEN))
    pad = jnp.zeros((BATCH, SEQ_PAD - SEQ, HIDDEN), f32)
    tokens = jnp.concatenate([cls, emb, pad], axis=1)        # (B, SEQ_PAD, D)
    # interpolate_pos_encoding=True with matching grid -> identity path.
    # TODO(synk): bicubic position-embedding interpolation for mismatched resolutions.
    tokens = tokens + pos_ref[...].reshape(1, SEQ_PAD, HIDDEN)
    x = tokens.reshape(BATCH * SEQ_PAD, HIDDEN)              # residual stream, f32

    # key-padding mask: columns >= SEQ are padding (computed once, reused by all layers)
    kcol = jax.lax.broadcasted_iota(jnp.int32, (BATCH, SEQ_PAD, SEQ_PAD), 2)
    kvalid = kcol < SEQ

    for l in range(LAYERS):  # static unroll over stacked layer weights
        # ---- multi-head self attention (pre-norm) ----
        h = _layer_norm(x, ln1w_ref[l], ln1b_ref[l])
        qkv = _mm(h, wqkv_ref[l]) + bqkv_ref[l]              # (B*S, 3D), one fused matmul
        q = qkv[:, :HIDDEN].reshape(BATCH, SEQ_PAD, HIDDEN)  # Q pre-scaled by 1/sqrt(Dh)
        k = qkv[:, HIDDEN:2 * HIDDEN].reshape(BATCH, SEQ_PAD, HIDDEN)
        v = qkv[:, 2 * HIDDEN:].reshape(BATCH, SEQ_PAD, HIDDEN)

        ctx_heads = []
        for hd in range(HEADS):                              # static, lane-slice only
            sl = slice(hd * HEAD_DIM, (hd + 1) * HEAD_DIM)
            qh, kh, vh = q[:, :, sl], k[:, :, sl], v[:, :, sl]
            s = jnp.einsum('bqd,bkd->bqk', qh, kh,
                           preferred_element_type=jnp.float32)
            s = jnp.where(kvalid, s, -1e30)                  # mask padded keys
            s = s - jnp.max(s, axis=-1, keepdims=True)
            p = jnp.exp(s)
            p = p / jnp.sum(p, axis=-1, keepdims=True)
            ctx_heads.append(
                jnp.einsum('bqk,bkd->bqd', p, vh,
                           preferred_element_type=jnp.float32))
        ctx = jnp.concatenate(ctx_heads, axis=-1).reshape(BATCH * SEQ_PAD, HIDDEN)
        x = x + _mm(ctx, wo_ref[l]) + bo_ref[l]              # residual

        # ---- MLP (pre-norm) ----
        h2 = _layer_norm(x, ln2w_ref[l], ln2b_ref[l])
        m = _mm(h2, w1_ref[l]) + b1_ref[l]
        m = _gelu_exact(m)
        x = x + _mm(m, w2_ref[l]) + b2_ref[l]                # residual

    # ---- final LayerNorm ----
    x = _layer_norm(x, lnfw_ref[...], lnfb_ref[...])
    o_ref[...] = x.reshape(BATCH, SEQ_PAD, HIDDEN).astype(o_ref.dtype)


# ---------------- parameter init (deterministic, synthetic) ----------------
def init_params(key):
    std = 0.02
    ks = iter(jax.random.split(key, 8 + LAYERS * 8))
    nxt = lambda: next(ks)
    p = {
        # conv weight in PyTorch layout (D, C, P, P)
        "patch_w": jax.random.normal(nxt(), (HIDDEN, CHANNELS, PATCH, PATCH), jnp.float32) * std,
        "patch_b": jax.random.normal(nxt(), (1, HIDDEN), jnp.float32) * std,
        "cls": jax.random.normal(nxt(), (1, 1, HIDDEN), jnp.float32) * std,
        "pos": jax.random.normal(nxt(), (1, SEQ, HIDDEN), jnp.float32) * std,
        "ln_f_w": jnp.ones((1, HIDDEN), jnp.float32),
        "ln_f_b": jnp.zeros((1, HIDDEN), jnp.float32),
        "layers": [],
    }
    for _ in range(LAYERS):
        lp = {
            "ln1_w": jnp.ones((1, HIDDEN), jnp.float32),
            "ln1_b": jnp.zeros((1, HIDDEN), jnp.float32),
            "wq": jax.random.normal(nxt(), (HIDDEN, HIDDEN), jnp.float32) * std,
            "bq": jnp.zeros((1, HIDDEN), jnp.float32),
            "wk": jax.random.normal(nxt(), (HIDDEN, HIDDEN), jnp.float32) * std,
            "bk": jnp.zeros((1, HIDDEN), jnp.float32),
            "wv": jax.random.normal(nxt(), (HIDDEN, HIDDEN), jnp.float32) * std,
            "bv": jnp.zeros((1, HIDDEN), jnp.float32),
            "wo": jax.random.normal(nxt(), (HIDDEN, HIDDEN), jnp.float32) * std,
            "bo": jnp.zeros((1, HIDDEN), jnp.float32),
            "ln2_w": jnp.ones((1, HIDDEN), jnp.float32),
            "ln2_b": jnp.zeros((1, HIDDEN), jnp.float32),
            "w1": jax.random.normal(nxt(), (HIDDEN, MLP), jnp.float32) * std,
            "b1": jnp.zeros((1, MLP), jnp.float32),
            "w2": jax.random.normal(nxt(), (MLP, HIDDEN), jnp.float32) * std,
            "b2": jnp.zeros((1, HIDDEN), jnp.float32),
        }
        p["layers"].append(lp)
    return p


def pack_params(p):
    """One-time packing of logical (HF-style) params into kernel-friendly arrays:
    stacked per-layer weights, fused QKV, softmax scale folded into Q, padded pos."""
    scale = 1.0 / math.sqrt(HEAD_DIM)
    stack = lambda key: jnp.stack([lp[key] for lp in p["layers"]])
    wq = jnp.stack([lp["wq"] * scale for lp in p["layers"]])
    bq = jnp.stack([lp["bq"] * scale for lp in p["layers"]])
    wqkv = jnp.concatenate([wq, stack("wk"), stack("wv")], axis=-1)   # (L, D, 3D)
    bqkv = jnp.concatenate([bq, stack("bk"), stack("bv")], axis=-1)   # (L, 1, 3D)
    pos_pad = jnp.concatenate(
        [p["pos"][0], jnp.zeros((SEQ_PAD - SEQ, HIDDEN), jnp.float32)], axis=0)
    return {
        "xpw": p["patch_w"].reshape(HIDDEN, -1).T,   # (C*P*P, D)
        "xpb": p["patch_b"],
        "cls": p["cls"].reshape(1, HIDDEN),
        "pos": pos_pad,
        "ln1_w": stack("ln1_w"), "ln1_b": stack("ln1_b"),
        "wqkv": wqkv, "bqkv": bqkv,
        "wo": stack("wo"), "bo": stack("bo"),
        "ln2_w": stack("ln2_w"), "ln2_b": stack("ln2_b"),
        "w1": stack("w1"), "b1": stack("b1"),
        "w2": stack("w2"), "b2": stack("b2"),
        "ln_f_w": p["ln_f_w"], "ln_f_b": p["ln_f_b"],
    }


# ---------------- forward (ViT_Adapter.forward equivalent) ----------------
@jax.jit
def vit_adapter_forward(x_nchw, pk):
    b, c, hh, ww = x_nchw.shape
    gh, gw = hh // PATCH, ww // PATCH
    n = gh * gw

    # Patchify glue: NCHW -> (B*N, C*P*P); matches Conv2d(k=P, stride=P) with the
    # weight flattened over (C, ph, pw). Tiny here; at real resolutions this gather
    # would move into the kernel via index_map.
    xp = x_nchw.reshape(b, c, gh, PATCH, gw, PATCH)
    xp = jnp.transpose(xp, (0, 2, 4, 1, 3, 5)).reshape(b * n, c * PATCH * PATCH)

    # Single fused pallas_call: everything (~70 KiB of weights + 9 KiB of tokens)
    # stays resident in VMEM, no grid (one step), no intermediate HBM traffic.
    # TODO(synk): on v7x, give the second TensorCore work via a parallel batch axis
    # (pl.core_map over the 2-TC mesh) when B grows.
    out = pl.pallas_call(
        _vit_fused_kernel,
        out_shape=jax.ShapeDtypeStruct((b, SEQ_PAD, HIDDEN), jnp.float32),
    )(xp, pk["xpw"], pk["xpb"], pk["cls"], pk["pos"],
      pk["ln1_w"], pk["ln1_b"], pk["wqkv"], pk["bqkv"], pk["wo"], pk["bo"],
      pk["ln2_w"], pk["ln2_b"], pk["w1"], pk["b1"], pk["w2"], pk["b2"],
      pk["ln_f_w"], pk["ln_f_b"])

    # Drop CLS token (row 0) and the sublane padding (rows SEQ..SEQ_PAD).
    return out[:, 1:SEQ]


# ---------------- pure-JAX reference for the correctness check ----------------
def _reference_forward(x_nchw, params):
    b, c, hh, ww = x_nchw.shape
    gh, gw = hh // PATCH, ww // PATCH
    n = gh * gw
    xp = x_nchw.reshape(b, c, gh, PATCH, gw, PATCH)
    xp = jnp.transpose(xp, (0, 2, 4, 1, 3, 5)).reshape(b * n, -1)
    w_flat = params["patch_w"].reshape(HIDDEN, -1).T
    emb = (xp @ w_flat + params["patch_b"]).reshape(b, n, HIDDEN)
    cls = jnp.broadcast_to(params["cls"], (b, 1, HIDDEN))
    h = jnp.concatenate([cls, emb], axis=1) + params["pos"]

    def ln(x, w, bias):
        mu = jnp.mean(x, -1, keepdims=True)
        var = jnp.mean((x - mu) ** 2, -1, keepdims=True)
        return (x - mu) * jax.lax.rsqrt(var + LN_EPS) * w + bias

    for lp in params["layers"]:
        y = ln(h, lp["ln1_w"], lp["ln1_b"])
        q = y @ lp["wq"] + lp["bq"]
        k = y @ lp["wk"] + lp["bk"]
        v = y @ lp["wv"] + lp["bv"]
        q = q.reshape(b, SEQ, HEADS, HEAD_DIM).transpose(0, 2, 1, 3)
        k = k.reshape(b, SEQ, HEADS, HEAD_DIM).transpose(0, 2, 1, 3)
        v = v.reshape(b, SEQ, HEADS, HEAD_DIM).transpose(0, 2, 1, 3)
        s = (q @ k.transpose(0, 1, 3, 2)) / math.sqrt(HEAD_DIM)
        p = jax.nn.softmax(s, axis=-1)
        ctx = (p @ v).transpose(0, 2, 1, 3).reshape(b, SEQ, HIDDEN)
        h = h + (ctx @ lp["wo"] + lp["bo"])
        y2 = ln(h, lp["ln2_w"], lp["ln2_b"])
        m = y2 @ lp["w1"] + lp["b1"]
        m = 0.5 * m * (1.0 + jax.lax.erf(m / math.sqrt(2.0)))
        h = h + (m @ lp["w2"] + lp["b2"])
    h = ln(h, params["ln_f_w"], params["ln_f_b"])
    return h[:, 1:]


if __name__ == "__main__":
    key = jax.random.PRNGKey(0)
    kx, kp = jax.random.split(key)
    x = jax.random.normal(kx, (BATCH, CHANNELS, IMG, IMG), jnp.float32)
    params = init_params(kp)
    packed = pack_params(params)

    out = vit_adapter_forward(x, packed)
    out = jax.block_until_ready(out)
    assert out.shape == (BATCH, N_PATCHES, HIDDEN), out.shape

    ref = _reference_forward(x, params)
    err = float(jnp.max(jnp.abs(out - ref)))
    assert jnp.allclose(out, ref, atol=1e-4, rtol=1e-4), err

    print("KERNEL_OK")
</pallas_src>

<mosaic_0001>
module attributes {stable_mosaic.version = 11 : i64} {
  func.func @_vit_fused_kernel(%arg0: memref<32x48xf32, #tpu.memory_space<vmem>>, %arg1: memref<48x32xf32, #tpu.memory_space<vmem>>, %arg2: memref<1x32xf32, #tpu.memory_space<vmem>>, %arg3: memref<1x32xf32, #tpu.memory_space<vmem>>, %arg4: memref<24x32xf32, #tpu.memory_space<vmem>>, %arg5: memref<2x1x32xf32, #tpu.memory_space<vmem>>, %arg6: memref<2x1x32xf32, #tpu.memory_space<vmem>>, %arg7: memref<2x32x96xf32, #tpu.memory_space<vmem>>, %arg8: memref<2x1x96xf32, #tpu.memory_space<vmem>>, %arg9: memref<2x32x32xf32, #tpu.memory_space<vmem>>, %arg10: memref<2x1x32xf32, #tpu.memory_space<vmem>>, %arg11: memref<2x1x32xf32, #tpu.memory_space<vmem>>, %arg12: memref<2x1x32xf32, #tpu.memory_space<vmem>>, %arg13: memref<2x32x64xf32, #tpu.memory_space<vmem>>, %arg14: memref<2x1x64xf32, #tpu.memory_space<vmem>>, %arg15: memref<2x64x32xf32, #tpu.memory_space<vmem>>, %arg16: memref<2x1x32xf32, #tpu.memory_space<vmem>>, %arg17: memref<1x32xf32, #tpu.memory_space<vmem>>, %arg18: memref<1x32xf32, #tpu.memory_space<vmem>>, %arg19: memref<2x24x32xf32, #tpu.memory_space<vmem>>) attributes {dimension_semantics = [], scalar_prefetch = 0 : i64, scratch_operands = 0 : i64, tpu.core_type = #tpu.core_type<tc>} {
    %c0 = arith.constant 0 : index
    %c0_0 = arith.constant 0 : index
    %0 = vector.load %arg0[%c0, %c0_0] : memref<32x48xf32, #tpu.memory_space<vmem>>, vector<32x48xf32>
    %c0_1 = arith.constant 0 : index
    %c0_2 = arith.constant 0 : index
    %1 = vector.load %arg1[%c0_1, %c0_2] : memref<48x32xf32, #tpu.memory_space<vmem>>, vector<48x32xf32>
    %cst = arith.constant dense<0.000000e+00> : vector<32x32xf32>
    %2 = tpu.matmul %0, %1, %cst {dimension_numbers = #tpu.dot_dimension_numbers<[1], [0], [0], [1], [0, 0, 1, 1], [], []>} : vector<32x48xf32>, vector<48x32xf32>, vector<32x32xf32> -> vector<32x32xf32>
    %c0_3 = arith.constant 0 : index
    %c0_4 = arith.constant 0 : index
    %3 = vector.load %arg2[%c0_3, %c0_4] : memref<1x32xf32, #tpu.memory_space<vmem>>, vector<1x32xf32>
    %4 = vector.broadcast %3 : vector<1x32xf32> to vector<32x32xf32>
    %5 = arith.addf %2, %4 : vector<32x32xf32>
    %6 = vector.shape_cast %5 : vector<32x32xf32> to vector<2x16x32xf32>
    %c0_5 = arith.constant 0 : index
    %c0_6 = arith.constant 0 : index
    %7 = vector.load %arg3[%c0_5, %c0_6] : memref<1x32xf32, #tpu.memory_space<vmem>>, vector<1x32xf32>
    %8 = vector.shape_cast %7 : vector<1x32xf32> to vector<1x1x32xf32>
    %9 = vector.shape_cast %8 : vector<1x1x32xf32> to vector<1x1x32xf32>
    %10 = vector.broadcast %9 : vector<1x1x32xf32> to vector<2x1x32xf32>
    %cst_7 = arith.constant 0.000000e+00 : f32
    %11 = vector.broadcast %cst_7 : f32 to vector<2x7x32xf32>
    %12 = tpu.concatenate %10, %6, %11 in 1 : vector<2x1x32xf32>, vector<2x16x32xf32>, vector<2x7x32xf32> -> vector<2x24x32xf32>
    %c0_8 = arith.constant 0 : index
    %c0_9 = arith.constant 0 : index
    %13 = vector.load %arg4[%c0_8, %c0_9] : memref<24x32xf32, #tpu.memory_space<vmem>>, vector<24x32xf32>
    %14 = vector.shape_cast %13 : vector<24x32xf32> to vector<1x24x32xf32>
    %15 = vector.broadcast %14 : vector<1x24x32xf32> to vector<2x24x32xf32>
    %16 = arith.addf %12, %15 : vector<2x24x32xf32>
    %17 = vector.shape_cast %16 : vector<2x24x32xf32> to vector<48x32xf32>
    %18 = tpu.iota {dimensions = array<i32: 2>} : vector<2x24x24xi32>
    %c17_i32 = arith.constant 17 : i32
    %19 = vector.broadcast %c17_i32 : i32 to vector<2x24x24xi32>
    %20 = arith.cmpi slt, %18, %19 : vector<2x24x24xi32>
    %c0_10 = arith.constant 0 : index
    %c0_11 = arith.constant 0 : index
    %c0_12 = arith.constant 0 : index
    %21 = vector.load %arg5[%c0_10, %c0_11, %c0_12] : memref<2x1x32xf32, #tpu.memory_space<vmem>>, vector<1x1x32xf32>
    %22 = vector.shape_cast %21 : vector<1x1x32xf32> to vector<1x32xf32>
    %c0_13 = arith.constant 0 : index
    %c0_14 = arith.constant 0 : index
    %c0_15 = arith.constant 0 : index
    %23 = vector.load %arg6[%c0_13, %c0_14, %c0_15] : memref<2x1x32xf32, #tpu.memory_space<vmem>>, vector<1x1x32xf32>
    %24 = vector.shape_cast %23 : vector<1x1x32xf32> to vector<1x32xf32>
    %cst_16 = arith.constant dense<0.000000e+00> : vector<48xf32>
    %25 = vector.multi_reduction <add>, %17, %cst_16 [1] : vector<48x32xf32> to vector<48xf32>
    %26 = vector.shape_cast %25 : vector<48xf32> to vector<48x1xf32>
    %cst_17 = arith.constant 3.200000e+01 : f32
    %27 = vector.broadcast %cst_17 : f32 to vector<48x1xf32>
    %28 = arith.divf %26, %27 : vector<48x1xf32>
    %29 = vector.broadcast %28 : vector<48x1xf32> to vector<48x32xf32>
    %30 = arith.subf %17, %29 : vector<48x32xf32>
    %31 = arith.mulf %30, %30 : vector<48x32xf32>
    %cst_18 = arith.constant dense<0.000000e+00> : vector<48xf32>
    %32 = vector.multi_reduction <add>, %31, %cst_18 [1] : vector<48x32xf32> to vector<48xf32>
    %33 = vector.shape_cast %32 : vector<48xf32> to vector<48x1xf32>
    %cst_19 = arith.constant 3.200000e+01 : f32
    %34 = vector.broadcast %cst_19 : f32 to vector<48x1xf32>
    %35 = arith.divf %33, %34 : vector<48x1xf32>
    %36 = vector.broadcast %28 : vector<48x1xf32> to vector<48x32xf32>
    %37 = arith.subf %17, %36 : vector<48x32xf32>
    %cst_20 = arith.constant 9.99999996E-13 : f32
    %38 = vector.broadcast %cst_20 : f32 to vector<48x1xf32>
    %39 = arith.addf %35, %38 : vector<48x1xf32>
    %40 = math.rsqrt %39 : vector<48x1xf32>
    %41 = vector.broadcast %40 : vector<48x1xf32> to vector<48x32xf32>
    %42 = arith.mulf %37, %41 : vector<48x32xf32>
    %43 = vector.broadcast %22 : vector<1x32xf32> to vector<48x32xf32>
    %44 = arith.mulf %42, %43 : vector<48x32xf32>
    %45 = vector.broadcast %24 : vector<1x32xf32> to vector<48x32xf32>
    %46 = arith.addf %44, %45 : vector<48x32xf32>
    %c0_21 = arith.constant 0 : index
    %c0_22 = arith.constant 0 : index
    %c0_23 = arith.constant 0 : index
    %47 = vector.load %arg7[%c0_21, %c0_22, %c0_23] : memref<2x32x96xf32, #tpu.memory_space<vmem>>, vector<1x32x96xf32>
    %48 = vector.shape_cast %47 : vector<1x32x96xf32> to vector<32x96xf32>
    %cst_24 = arith.constant dense<0.000000e+00> : vector<48x96xf32>
    %49 = tpu.matmul %46, %48, %cst_24 {dimension_numbers = #tpu.dot_dimension_numbers<[1], [0], [0], [1], [0, 0, 1, 1], [], []>} : vector<48x32xf32>, vector<32x96xf32>, vector<48x96xf32> -> vector<48x96xf32>
    %c0_25 = arith.constant 0 : index
    %c0_26 = arith.constant 0 : index
    %c0_27 = arith.constant 0 : index
    %50 = vector.load %arg8[%c0_25, %c0_26, %c0_27] : memref<2x1x96xf32, #tpu.memory_space<vmem>>, vector<1x1x96xf32>
    %51 = vector.shape_cast %50 : vector<1x1x96xf32> to vector<1x96xf32>
    %52 = vector.broadcast %51 : vector<1x96xf32> to vector<48x96xf32>
    %53 = arith.addf %49, %52 : vector<48x96xf32>
    %54 = vector.extract_strided_slice %53 {offsets = [0, 0], sizes = [48, 32], strides = [1, 1]} : vector<48x96xf32> to vector<48x32xf32>
    %55 = vector.shape_cast %54 : vector<48x32xf32> to vector<2x24x32xf32>
    %56 = vector.extract_strided_slice %53 {offsets = [0, 32], sizes = [48, 32], strides = [1, 1]} : vector<48x96xf32> to vector<48x32xf32>
    %57 = vector.shape_cast %56 : vector<48x32xf32> to vector<2x24x32xf32>
    %58 = vector.extract_strided_slice %53 {offsets = [0, 64], sizes = [48, 32], strides = [1, 1]} : vector<48x96xf32> to vector<48x32xf32>
    %59 = vector.shape_cast %58 : vector<48x32xf32> to vector<2x24x32xf32>
    %60 = vector.extract_strided_slice %55 {offsets = [0, 0, 0], sizes = [2, 24, 8], strides = [1, 1, 1]} : vector<2x24x32xf32> to vector<2x24x8xf32>
    %61 = vector.extract_strided_slice %57 {offsets = [0, 0, 0], sizes = [2, 24, 8], strides = [1, 1, 1]} : vector<2x24x32xf32> to vector<2x24x8xf32>
    %62 = vector.extract_strided_slice %59 {offsets = [0, 0, 0], sizes = [2, 24, 8], strides = [1, 1, 1]} : vector<2x24x32xf32> to vector<2x24x8xf32>
    "tpu.trace_start"() <{level = 10 : i32, message = "bqd,bkd->bqk"}> : () -> ()
    %cst_28 = arith.constant dense<0.000000e+00> : vector<2x24x24xf32>
    %63 = tpu.matmul %60, %61, %cst_28 {dimension_numbers = #tpu.dot_dimension_numbers<[2], [2], [1], [1], [0, 0, 0, 1, 1, 1], [0], [0]>} : vector<2x24x8xf32>, vector<2x24x8xf32>, vector<2x24x24xf32> -> vector<2x24x24xf32>
    %cst_29 = arith.constant -1.000000e+30 : f32
    "tpu.trace_stop"() : () -> ()
    %64 = vector.broadcast %cst_29 : f32 to vector<2x24x24xf32>
    %65 = arith.select %20, %63, %64 : vector<2x24x24xi1>, vector<2x24x24xf32>
    %cst_30 = arith.constant dense<0xFF800000> : vector<2x24xf32>
    %66 = vector.multi_reduction <maximumf>, %65, %cst_30 [2] : vector<2x24x24xf32> to vector<2x24xf32>
    %67 = vector.shape_cast %66 : vector<2x24xf32> to vector<2x24x1xf32>
    %68 = vector.broadcast %67 : vector<2x24x1xf32> to vector<2x24x24xf32>
    %69 = arith.subf %65, %68 : vector<2x24x24xf32>
    %70 = math.exp %69 : vector<2x24x24xf32>
    %cst_31 = arith.constant dense<0.000000e+00> : vector<2x24xf32>
    %71 = vector.multi_reduction <add>, %70, %cst_31 [2] : vector<2x24x24xf32> to vector<2x24xf32>
    %72 = vector.shape_cast %71 : vector<2x24xf32> to vector<2x24x1xf32>
    %73 = vector.broadcast %72 : vector<2x24x1xf32> to vector<2x24x24xf32>
    %74 = arith.divf %70, %73 : vector<2x24x24xf32>
    "tpu.trace_start"() <{level = 10 : i32, message = "bqk,bkd->bqd"}> : () -> ()
    %cst_32 = arith.constant dense<0.000000e+00> : vector<2x24x8xf32>
    %75 = tpu.matmul %74, %62, %cst_32 {dimension_numbers = #tpu.dot_dimension_numbers<[2], [1], [1], [2], [0, 0, 0, 1, 1, 2], [0], [0]>} : vector<2x24x24xf32>, vector<2x24x8xf32>, vector<2x24x8xf32> -> vector<2x24x8xf32>
    "tpu.trace_stop"() : () -> ()
    %76 = vector.extract_strided_slice %55 {offsets = [0, 0, 8], sizes = [2, 24, 8], strides = [1, 1, 1]} : vector<2x24x32xf32> to vector<2x24x8xf32>
    %77 = vector.extract_strided_slice %57 {offsets = [0, 0, 8], sizes = [2, 24, 8], strides = [1, 1, 1]} : vector<2x24x32xf32> to vector<2x24x8xf32>
    %78 = vector.extract_strided_slice %59 {offsets = [0, 0, 8], sizes = [2, 24, 8], strides = [1, 1, 1]} : vector<2x24x32xf32> to vector<2x24x8xf32>
    "tpu.trace_start"() <{level = 10 : i32, message = "bqd,bkd->bqk"}> : () -> ()
    %cst_33 = arith.constant dense<0.000000e+00> : vector<2x24x24xf32>
    %79 = tpu.matmul %76, %77, %cst_33 {dimension_numbers = #tpu.dot_dimension_numbers<[2], [2], [1], [1], [0, 0, 0, 1, 1, 1], [0], [0]>} : vector<2x24x8xf32>, vector<2x24x8xf32>, vector<2x24x24xf32> -> vector<2x24x24xf32>
    %cst_34 = arith.constant -1.000000e+30 : f32
    "tpu.trace_stop"() : () -> ()
    %80 = vector.broadcast %cst_34 : f32 to vector<2x24x24xf32>
    %81 = arith.select %20, %79, %80 : vector<2x24x24xi1>, vector<2x24x24xf32>
    %cst_35 = arith.constant dense<0xFF800000> : vector<2x24xf32>
    %82 = vector.multi_reduction <maximumf>, %81, %cst_35 [2] : vector<2x24x24xf32> to vector<2x24xf32>
    %83 = vector.shape_cast %82 : vector<2x24xf32> to vector<2x24x1xf32>
    %84 = vector.broadcast %83 : vector<2x24x1xf32> to vector<2x24x24xf32>
    %85 = arith.subf %81, %84 : vector<2x24x24xf32>
    %86 = math.exp %85 : vector<2x24x24xf32>
    %cst_36 = arith.constant dense<0.000000e+00> : vector<2x24xf32>
    %87 = vector.multi_reduction <add>, %86, %cst_36 [2] : vector<2x24x24xf32> to vector<2x24xf32>
    %88 = vector.shape_cast %87 : vector<2x24xf32> to vector<2x24x1xf32>
    %89 = vector.broadcast %88 : vector<2x24x1xf32> to vector<2x24x24xf32>
    %90 = arith.divf %86, %89 : vector<2x24x24xf32>
    "tpu.trace_start"() <{level = 10 : i32, message = "bqk,bkd->bqd"}> : () -> ()
    %cst_37 = arith.constant dense<0.000000e+00> : vector<2x24x8xf32>
    %91 = tpu.matmul %90, %78, %cst_37 {dimension_numbers = #tpu.dot_dimension_numbers<[2], [1], [1], [2], [0, 0, 0, 1, 1, 2], [0], [0]>} : vector<2x24x24xf32>, vector<2x24x8xf32>, vector<2x24x8xf32> -> vector<2x24x8xf32>
    "tpu.trace_stop"() : () -> ()
    %92 = vector.extract_strided_slice %55 {offsets = [0, 0, 16], sizes = [2, 24, 8], strides = [1, 1, 1]} : vector<2x24x32xf32> to vector<2x24x8xf32>
    %93 = vector.extract_strided_slice %57 {offsets = [0, 0, 16], sizes = [2, 24, 8], strides = [1, 1, 1]} : vector<2x24x32xf32> to vector<2x24x8xf32>
    %94 = vector.extract_strided_slice %59 {offsets = [0, 0, 16], sizes = [2, 24, 8], strides = [1, 1, 1]} : vector<2x24x32xf32> to vector<2x24x8xf32>
    "tpu.trace_start"() <{level = 10 : i32, message = "bqd,bkd->bqk"}> : () -> ()
    %cst_38 = arith.constant dense<0.000000e+00> : vector<2x24x24xf32>
    %95 = tpu.matmul %92, %93, %cst_38 {dimension_numbers = #tpu.dot_dimension_numbers<[2], [2], [1], [1], [0, 0, 0, 1, 1, 1], [0], [0]>} : vector<2x24x8xf32>, vector<2x24x8xf32>, vector<2x24x24xf32> -> vector<2x24x24xf32>
    %cst_39 = arith.constant -1.000000e+30 : f32
    "tpu.trace_stop"() : () -> ()
    %96 = vector.broadcast %cst_39 : f32 to vector<2x24x24xf32>
    %97 = arith.select %20, %95, %96 : vector<2x24x24xi1>, vector<2x24x24xf32>
    %cst_40 = arith.constant dense<0xFF800000> : vector<2x24xf32>
    %98 = vector.multi_reduction <maximumf>, %97, %cst_40 [2] : vector<2x24x24xf32> to vector<2x24xf32>
    %99 = vector.shape_cast %98 : vector<2x24xf32> to vector<2x24x1xf32>
    %100 = vector.broadcast %99 : vector<2x24x1xf32> to vector<2x24x24xf32>
    %101 = arith.subf %97, %100 : vector<2x24x24xf32>
    %102 = math.exp %101 : vector<2x24x24xf32>
    %cst_41 = arith.constant dense<0.000000e+00> : vector<2x24xf32>
    %103 = vector.multi_reduction <add>, %102, %cst_41 [2] : vector<2x24x24xf32> to vector<2x24xf32>
    %104 = vector.shape_cast %103 : vector<2x24xf32> to vector<2x24x1xf32>
    %105 = vector.broadcast %104 : vector<2x24x1xf32> to vector<2x24x24xf32>
    %106 = arith.divf %102, %105 : vector<2x24x24xf32>
    "tpu.trace_start"() <{level = 10 : i32, message = "bqk,bkd->bqd"}> : () -> ()
    %cst_42 = arith.constant dense<0.000000e+00> : vector<2x24x8xf32>
    %107 = tpu.matmul %106, %94, %cst_42 {dimension_numbers = #tpu.dot_dimension_numbers<[2], [1], [1], [2], [0, 0, 0, 1, 1, 2], [0], [0]>} : vector<2x24x24xf32>, vector<2x24x8xf32>, vector<2x24x8xf32> -> vector<2x24x8xf32>
    "tpu.trace_stop"() : () -> ()
    %108 = vector.extract_strided_slice %55 {offsets = [0, 0, 24], sizes = [2, 24, 8], strides = [1, 1, 1]} : vector<2x24x32xf32> to vector<2x24x8xf32>
    %109 = vector.extract_strided_slice %57 {offsets = [0, 0, 24], sizes = [2, 24, 8], strides = [1, 1, 1]} : vector<2x24x32xf32> to vector<2x24x8xf32>
    %110 = vector.extract_strided_slice %59 {offsets = [0, 0, 24], sizes = [2, 24, 8], strides = [1, 1, 1]} : vector<2x24x32xf32> to vector<2x24x8xf32>
    "tpu.trace_start"() <{level = 10 : i32, message = "bqd,bkd->bqk"}> : () -> ()
    %cst_43 = arith.constant dense<0.000000e+00> : vector<2x24x24xf32>
    %111 = tpu.matmul %108, %109, %cst_43 {dimension_numbers = #tpu.dot_dimension_numbers<[2], [2], [1], [1], [0, 0, 0, 1, 1, 1], [0], [0]>} : vector<2x24x8xf32>, vector<2x24x8xf32>, vector<2x24x24xf32> -> vector<2x24x24xf32>
    %cst_44 = arith.constant -1.000000e+30 : f32
    "tpu.trace_stop"() : () -> ()
    %112 = vector.broadcast %cst_44 : f32 to vector<2x24x24xf32>
    %113 = arith.select %20, %111, %112 : vector<2x24x24xi1>, vector<2x24x24xf32>
    %cst_45 = arith.constant dense<0xFF800000> : vector<2x24xf32>
    %114 = vector.multi_reduction <maximumf>, %113, %cst_45 [2] : vector<2x24x24xf32> to vector<2x24xf32>
    %115 = vector.shape_cast %114 : vector<2x24xf32> to vector<2x24x1xf32>
    %116 = vector.broadcast %115 : vector<2x24x1xf32> to vector<2x24x24xf32>
    %117 = arith.subf %113, %116 : vector<2x24x24xf32>
    %118 = math.exp %117 : vector<2x24x24xf32>
    %cst_46 = arith.constant dense<0.000000e+00> : vector<2x24xf32>
    %119 = vector.multi_reduction <add>, %118, %cst_46 [2] : vector<2x24x24xf32> to vector<2x24xf32>
    %120 = vector.shape_cast %119 : vector<2x24xf32> to vector<2x24x1xf32>
    %121 = vector.broadcast %120 : vector<2x24x1xf32> to vector<2x24x24xf32>
    %122 = arith.divf %118, %121 : vector<2x24x24xf32>
    "tpu.trace_start"() <{level = 10 : i32, message = "bqk,bkd->bqd"}> : () -> ()
    %cst_47 = arith.constant dense<0.000000e+00> : vector<2x24x8xf32>
    %123 = tpu.matmul %122, %110, %cst_47 {dimension_numbers = #tpu.dot_dimension_numbers<[2], [1], [1], [2], [0, 0, 0, 1, 1, 2], [0], [0]>} : vector<2x24x24xf32>, vector<2x24x8xf32>, vector<2x24x8xf32> -> vector<2x24x8xf32>
    "tpu.trace_stop"() : () -> ()
    %124 = tpu.concatenate %75, %91, %107, %123 in 2 : vector<2x24x8xf32>, vector<2x24x8xf32>, vector<2x24x8xf32>, vector<2x24x8xf32> -> vector<2x24x32xf32>
    %125 = vector.shape_cast %124 : vector<2x24x32xf32> to vector<48x32xf32>
    %c0_48 = arith.constant 0 : index
    %c0_49 = arith.constant 0 : index
    %c0_50 = arith.constant 0 : index
    %126 = vector.load %arg9[%c0_48, %c0_49, %c0_50] : memref<2x32x32xf32, #tpu.memory_space<vmem>>, vector<1x32x32xf32>
    %127 = vector.shape_cast %126 : vector<1x32x32xf32> to vector<32x32xf32>
    %cst_51 = arith.constant dense<0.000000e+00> : vector<48x32xf32>
    %128 = tpu.matmul %125, %127, %cst_51 {dimension_numbers = #tpu.dot_dimension_numbers<[1], [0], [0], [1], [0, 0, 1, 1], [], []>} : vector<48x32xf32>, vector<32x32xf32>, vector<48x32xf32> -> vector<48x32xf32>
    %129 = arith.addf %17, %128 : vector<48x32xf32>
    %c0_52 = arith.constant 0 : index
    %c0_53 = arith.constant 0 : index
    %c0_54 = arith.constant 0 : index
    %130 = vector.load %arg10[%c0_52, %c0_53, %c0_54] : memref<2x1x32xf32, #tpu.memory_space<vmem>>, vector<1x1x32xf32>
    %131 = vector.shape_cast %130 : vector<1x1x32xf32> to vector<1x32xf32>
    %132 = vector.broadcast %131 : vector<1x32xf32> to vector<48x32xf32>
    %133 = arith.addf %129, %132 : vector<48x32xf32>
    %c0_55 = arith.constant 0 : index
    %c0_56 = arith.constant 0 : index
    %c0_57 = arith.constant 0 : index
    %134 = vector.load %arg11[%c0_55, %c0_56, %c0_57] : memref<2x1x32xf32, #tpu.memory_space<vmem>>, vector<1x1x32xf32>
    %135 = vector.shape_cast %134 : vector<1x1x32xf32> to vector<1x32xf32>
    %c0_58 = arith.constant 0 : index
    %c0_59 = arith.constant 0 : index
    %c0_60 = arith.constant 0 : index
    %136 = vector.load %arg12[%c0_58, %c0_59, %c0_60] : memref<2x1x32xf32, #tpu.memory_space<vmem>>, vector<1x1x32xf32>
    %137 = vector.shape_cast %136 : vector<1x1x32xf32> to vector<1x32xf32>
    %cst_61 = arith.constant dense<0.000000e+00> : vector<48xf32>
    %138 = vector.multi_reduction <add>, %133, %cst_61 [1] : vector<48x32xf32> to vector<48xf32>
    %139 = vector.shape_cast %138 : vector<48xf32> to vector<48x1xf32>
    %cst_62 = arith.constant 3.200000e+01 : f32
    %140 = vector.broadcast %cst_62 : f32 to vector<48x1xf32>
    %141 = arith.divf %139, %140 : vector<48x1xf32>
    %142 = vector.broadcast %141 : vector<48x1xf32> to vector<48x32xf32>
    %143 = arith.subf %133, %142 : vector<48x32xf32>
    %144 = arith.mulf %143, %143 : vector<48x32xf32>
    %cst_63 = arith.constant dense<0.000000e+00> : vector<48xf32>
    %145 = vector.multi_reduction <add>, %144, %cst_63 [1] : vector<48x32xf32> to vector<48xf32>
    %146 = vector.shape_cast %145 : vector<48xf32> to vector<48x1xf32>
    %cst_64 = arith.constant 3.200000e+01 : f32
    %147 = vector.broadcast %cst_64 : f32 to vector<48x1xf32>
    %148 = arith.divf %146, %147 : vector<48x1xf32>
    %149 = vector.broadcast %141 : vector<48x1xf32> to vector<48x32xf32>
    %150 = arith.subf %133, %149 : vector<48x32xf32>
    %cst_65 = arith.constant 9.99999996E-13 : f32
    %151 = vector.broadcast %cst_65 : f32 to vector<48x1xf32>
    %152 = arith.addf %148, %151 : vector<48x1xf32>
    %153 = math.rsqrt %152 : vector<48x1xf32>
    %154 = vector.broadcast %153 : vector<48x1xf32> to vector<48x32xf32>
    %155 = arith.mulf %150, %154 : vector<48x32xf32>
    %156 = vector.broadcast %135 : vector<1x32xf32> to vector<48x32xf32>
    %157 = arith.mulf %155, %156 : vector<48x32xf32>
    %158 = vector.broadcast %137 : vector<1x32xf32> to vector<48x32xf32>
    %159 = arith.addf %157, %158 : vector<48x32xf32>
    %c0_66 = arith.constant 0 : index
    %c0_67 = arith.constant 0 : index
    %c0_68 = arith.constant 0 : index
    %160 = vector.load %arg13[%c0_66, %c0_67, %c0_68] : memref<2x32x64xf32, #tpu.memory_space<vmem>>, vector<1x32x64xf32>
    %161 = vector.shape_cast %160 : vector<1x32x64xf32> to vector<32x64xf32>
    %cst_69 = arith.constant dense<0.000000e+00> : vector<48x64xf32>
    %162 = tpu.matmul %159, %161, %cst_69 {dimension_numbers = #tpu.dot_dimension_numbers<[1], [0], [0], [1], [0, 0, 1, 1], [], []>} : vector<48x32xf32>, vector<32x64xf32>, vector<48x64xf32> -> vector<48x64xf32>
    %c0_70 = arith.constant 0 : index
    %c0_71 = arith.constant 0 : index
    %c0_72 = arith.constant 0 : index
    %163 = vector.load %arg14[%c0_70, %c0_71, %c0_72] : memref<2x1x64xf32, #tpu.memory_space<vmem>>, vector<1x1x64xf32>
    %164 = vector.shape_cast %163 : vector<1x1x64xf32> to vector<1x64xf32>
    %165 = vector.broadcast %164 : vector<1x64xf32> to vector<48x64xf32>
    %166 = arith.addf %162, %165 : vector<48x64xf32>
    %cst_73 = arith.constant 5.000000e-01 : f32
    %167 = vector.broadcast %cst_73 : f32 to vector<48x64xf32>
    %168 = arith.mulf %167, %166 : vector<48x64xf32>
    %cst_74 = arith.constant 0.707106769 : f32
    %169 = vector.broadcast %cst_74 : f32 to vector<48x64xf32>
    %170 = arith.mulf %166, %169 : vector<48x64xf32>
    %171 = math.erf %170 : vector<48x64xf32>
    %cst_75 = arith.constant 1.000000e+00 : f32
    %172 = vector.broadcast %cst_75 : f32 to vector<48x64xf32>
    %173 = arith.addf %172, %171 : vector<48x64xf32>
    %174 = arith.mulf %168, %173 : vector<48x64xf32>
    %c0_76 = arith.constant 0 : index
    %c0_77 = arith.constant 0 : index
    %c0_78 = arith.constant 0 : index
    %175 = vector.load %arg15[%c0_76, %c0_77, %c0_78] : memref<2x64x32xf32, #tpu.memory_space<vmem>>, vector<1x64x32xf32>
    %176 = vector.shape_cast %175 : vector<1x64x32xf32> to vector<64x32xf32>
    %cst_79 = arith.constant dense<0.000000e+00> : vector<48x32xf32>
    %177 = tpu.matmul %174, %176, %cst_79 {dimension_numbers = #tpu.dot_dimension_numbers<[1], [0], [0], [1], [0, 0, 1, 1], [], []>} : vector<48x64xf32>, vector<64x32xf32>, vector<48x32xf32> -> vector<48x32xf32>
    %178 = arith.addf %133, %177 : vector<48x32xf32>
    %c0_80 = arith.constant 0 : index
    %c0_81 = arith.constant 0 : index
    %c0_82 = arith.constant 0 : index
    %179 = vector.load %arg16[%c0_80, %c0_81, %c0_82] : memref<2x1x32xf32, #tpu.memory_space<vmem>>, vector<1x1x32xf32>
    %180 = vector.shape_cast %179 : vector<1x1x32xf32> to vector<1x32xf32>
    %181 = vector.broadcast %180 : vector<1x32xf32> to vector<48x32xf32>
    %182 = arith.addf %178, %181 : vector<48x32xf32>
    %c1 = arith.constant 1 : index
    %c0_83 = arith.constant 0 : index
    %c0_84 = arith.constant 0 : index
    %183 = vector.load %arg5[%c1, %c0_83, %c0_84] : memref<2x1x32xf32, #tpu.memory_space<vmem>>, vector<1x1x32xf32>
    %184 = vector.shape_cast %183 : vector<1x1x32xf32> to vector<1x32xf32>
    %c1_85 = arith.constant 1 : index
    %c0_86 = arith.constant 0 : index
    %c0_87 = arith.constant 0 : index
    %185 = vector.load %arg6[%c1_85, %c0_86, %c0_87] : memref<2x1x32xf32, #tpu.memory_space<vmem>>, vector<1x1x32xf32>
    %186 = vector.shape_cast %185 : vector<1x1x32xf32> to vector<1x32xf32>
    %cst_88 = arith.constant dense<0.000000e+00> : vector<48xf32>
    %187 = vector.multi_reduction <add>, %182, %cst_88 [1] : vector<48x32xf32> to vector<48xf32>
    %188 = vector.shape_cast %187 : vector<48xf32> to vector<48x1xf32>
    %cst_89 = arith.constant 3.200000e+01 : f32
    %189 = vector.broadcast %cst_89 : f32 to vector<48x1xf32>
    %190 = arith.divf %188, %189 : vector<48x1xf32>
    %191 = vector.broadcast %190 : vector<48x1xf32> to vector<48x32xf32>
    %192 = arith.subf %182, %191 : vector<48x32xf32>
    %193 = arith.mulf %192, %192 : vector<48x32xf32>
    %cst_90 = arith.constant dense<0.000000e+00> : vector<48xf32>
    %194 = vector.multi_reduction <add>, %193, %cst_90 [1] : vector<48x32xf32> to vector<48xf32>
    %195 = vector.shape_cast %194 : vector<48xf32> to vector<48x1xf32>
    %cst_91 = arith.constant 3.200000e+01 : f32
    %196 = vector.broadcast %cst_91 : f32 to vector<48x1xf32>
    %197 = arith.divf %195, %196 : vector<48x1xf32>
    %198 = vector.broadcast %190 : vector<48x1xf32> to vector<48x32xf32>
    %199 = arith.subf %182, %198 : vector<48x32xf32>
    %cst_92 = arith.constant 9.99999996E-13 : f32
    %200 = vector.broadcast %cst_92 : f32 to vector<48x1xf32>
    %201 = arith.addf %197, %200 : vector<48x1xf32>
    %202 = math.rsqrt %201 : vector<48x1xf32>
    %203 = vector.broadcast %202 : vector<48x1xf32> to vector<48x32xf32>
    %204 = arith.mulf %199, %203 : vector<48x32xf32>
    %205 = vector.broadcast %184 : vector<1x32xf32> to vector<48x32xf32>
    %206 = arith.mulf %204, %205 : vector<48x32xf32>
    %207 = vector.broadcast %186 : vector<1x32xf32> to vector<48x32xf32>
    %208 = arith.addf %206, %207 : vector<48x32xf32>
    %c1_93 = arith.constant 1 : index
    %c0_94 = arith.constant 0 : index
    %c0_95 = arith.constant 0 : index
    %209 = vector.load %arg7[%c1_93, %c0_94, %c0_95] : memref<2x32x96xf32, #tpu.memory_space<vmem>>, vector<1x32x96xf32>
    %210 = vector.shape_cast %209 : vector<1x32x96xf32> to vector<32x96xf32>
    %cst_96 = arith.constant dense<0.000000e+00> : vector<48x96xf32>
    %211 = tpu.matmul %208, %210, %cst_96 {dimension_numbers = #tpu.dot_dimension_numbers<[1], [0], [0], [1], [0, 0, 1, 1], [], []>} : vector<48x32xf32>, vector<32x96xf32>, vector<48x96xf32> -> vector<48x96xf32>
    %c1_97 = arith.constant 1 : index
    %c0_98 = arith.constant 0 : index
    %c0_99 = arith.constant 0 : index
    %212 = vector.load %arg8[%c1_97, %c0_98, %c0_99] : memref<2x1x96xf32, #tpu.memory_space<vmem>>, vector<1x1x96xf32>
    %213 = vector.shape_cast %212 : vector<1x1x96xf32> to vector<1x96xf32>
    %214 = vector.broadcast %213 : vector<1x96xf32> to vector<48x96xf32>
    %215 = arith.addf %211, %214 : vector<48x96xf32>
    %216 = vector.extract_strided_slice %215 {offsets = [0, 0], sizes = [48, 32], strides = [1, 1]} : vector<48x96xf32> to vector<48x32xf32>
    %217 = vector.shape_cast %216 : vector<48x32xf32> to vector<2x24x32xf32>
    %218 = vector.extract_strided_slice %215 {offsets = [0, 32], sizes = [48, 32], strides = [1, 1]} : vector<48x96xf32> to vector<48x32xf32>
    %219 = vector.shape_cast %218 : vector<48x32xf32> to vector<2x24x32xf32>
    %220 = vector.extract_strided_slice %215 {offsets = [0, 64], sizes = [48, 32], strides = [1, 1]} : vector<48x96xf32> to vector<48x32xf32>
    %221 = vector.shape_cast %220 : vector<48x32xf32> to vector<2x24x32xf32>
    %222 = vector.extract_strided_slice %217 {offsets = [0, 0, 0], sizes = [2, 24, 8], strides = [1, 1, 1]} : vector<2x24x32xf32> to vector<2x24x8xf32>
    %223 = vector.extract_strided_slice %219 {offsets = [0, 0, 0], sizes = [2, 24, 8], strides = [1, 1, 1]} : vector<2x24x32xf32> to vector<2x24x8xf32>
    %224 = vector.extract_strided_slice %221 {offsets = [0, 0, 0], sizes = [2, 24, 8], strides = [1, 1, 1]} : vector<2x24x32xf32> to vector<2x24x8xf32>
    "tpu.trace_start"() <{level = 10 : i32, message = "bqd,bkd->bqk"}> : () -> ()
    %cst_100 = arith.constant dense<0.000000e+00> : vector<2x24x24xf32>
    %225 = tpu.matmul %222, %223, %cst_100 {dimension_numbers = #tpu.dot_dimension_numbers<[2], [2], [1], [1], [0, 0, 0, 1, 1, 1], [0], [0]>} : vector<2x24x8xf32>, vector<2x24x8xf32>, vector<2x24x24xf32> -> vector<2x24x24xf32>
    %cst_101 = arith.constant -1.000000e+30 : f32
    "tpu.trace_stop"() : () -> ()
    %226 = vector.broadcast %cst_101 : f32 to vector<2x24x24xf32>
    %227 = arith.select %20, %225, %226 : vector<2x24x24xi1>, vector<2x24x24xf32>
    %cst_102 = arith.constant dense<0xFF800000> : vector<2x24xf32>
    %228 = vector.multi_reduction <maximumf>, %227, %cst_102 [2] : vector<2x24x24xf32> to vector<2x24xf32>
    %229 = vector.shape_cast %228 : vector<2x24xf32> to vector<2x24x1xf32>
    %230 = vector.broadcast %229 : vector<2x24x1xf32> to vector<2x24x24xf32>
    %231 = arith.subf %227, %230 : vector<2x24x24xf32>
    %232 = math.exp %231 : vector<2x24x24xf32>
    %cst_103 = arith.constant dense<0.000000e+00> : vector<2x24xf32>
    %233 = vector.multi_reduction <add>, %232, %cst_103 [2] : vector<2x24x24xf32> to vector<2x24xf32>
    %234 = vector.shape_cast %233 : vector<2x24xf32> to vector<2x24x1xf32>
    %235 = vector.broadcast %234 : vector<2x24x1xf32> to vector<2x24x24xf32>
    %236 = arith.divf %232, %235 : vector<2x24x24xf32>
    "tpu.trace_start"() <{level = 10 : i32, message = "bqk,bkd->bqd"}> : () -> ()
    %cst_104 = arith.constant dense<0.000000e+00> : vector<2x24x8xf32>
    %237 = tpu.matmul %236, %224, %cst_104 {dimension_numbers = #tpu.dot_dimension_numbers<[2], [1], [1], [2], [0, 0, 0, 1, 1, 2], [0], [0]>} : vector<2x24x24xf32>, vector<2x24x8xf32>, vector<2x24x8xf32> -> vector<2x24x8xf32>
    "tpu.trace_stop"() : () -> ()
    %238 = vector.extract_strided_slice %217 {offsets = [0, 0, 8], sizes = [2, 24, 8], strides = [1, 1, 1]} : vector<2x24x32xf32> to vector<2x24x8xf32>
    %239 = vector.extract_strided_slice %219 {offsets = [0, 0, 8], sizes = [2, 24, 8], strides = [1, 1, 1]} : vector<2x24x32xf32> to vector<2x24x8xf32>
    %240 = vector.extract_strided_slice %221 {offsets = [0, 0, 8], sizes = [2, 24, 8], strides = [1, 1, 1]} : vector<2x24x32xf32> to vector<2x24x8xf32>
    "tpu.trace_start"() <{level = 10 : i32, message = "bqd,bkd->bqk"}> : () -> ()
    %cst_105 = arith.constant dense<0.000000e+00> : vector<2x24x24xf32>
    %241 = tpu.matmul %238, %239, %cst_105 {dimension_numbers = #tpu.dot_dimension_numbers<[2], [2], [1], [1], [0, 0, 0, 1, 1, 1], [0], [0]>} : vector<2x24x8xf32>, vector<2x24x8xf32>, vector<2x24x24xf32> -> vector<2x24x24xf32>
    %cst_106 = arith.constant -1.000000e+30 : f32
    "tpu.trace_stop"() : () -> ()
    %242 = vector.broadcast %cst_106 : f32 to vector<2x24x24xf32>
    %243 = arith.select %20, %241, %242 : vector<2x24x24xi1>, vector<2x24x24xf32>
    %cst_107 = arith.constant dense<0xFF800000> : vector<2x24xf32>
    %244 = vector.multi_reduction <maximumf>, %243, %cst_107 [2] : vector<2x24x24xf32> to vector<2x24xf32>
    %245 = vector.shape_cast %244 : vector<2x24xf32> to vector<2x24x1xf32>
    %246 = vector.broadcast %245 : vector<2x24x1xf32> to vector<2x24x24xf32>
    %247 = arith.subf %243, %246 : vector<2x24x24xf32>
    %248 = math.exp %247 : vector<2x24x24xf32>
    %cst_108 = arith.constant dense<0.000000e+00> : vector<2x24xf32>
    %249 = vector.multi_reduction <add>, %248, %cst_108 [2] : vector<2x24x24xf32> to vector<2x24xf32>
    %250 = vector.shape_cast %249 : vector<2x24xf32> to vector<2x24x1xf32>
    %251 = vector.broadcast %250 : vector<2x24x1xf32> to vector<2x24x24xf32>
    %252 = arith.divf %248, %251 : vector<2x24x24xf32>
    "tpu.trace_start"() <{level = 10 : i32, message = "bqk,bkd->bqd"}> : () -> ()
    %cst_109 = arith.constant dense<0.000000e+00> : vector<2x24x8xf32>
    %253 = tpu.matmul %252, %240, %cst_109 {dimension_numbers = #tpu.dot_dimension_numbers<[2], [1], [1], [2], [0, 0, 0, 1, 1, 2], [0], [0]>} : vector<2x24x24xf32>, vector<2x24x8xf32>, vector<2x24x8xf32> -> vector<2x24x8xf32>
    "tpu.trace_stop"() : () -> ()
    %254 = vector.extract_strided_slice %217 {offsets = [0, 0, 16], sizes = [2, 24, 8], strides = [1, 1, 1]} : vector<2x24x32xf32> to vector<2x24x8xf32>
    %255 = vector.extract_strided_slice %219 {offsets = [0, 0, 16], sizes = [2, 24, 8], strides = [1, 1, 1]} : vector<2x24x32xf32> to vector<2x24x8xf32>
    %256 = vector.extract_strided_slice %221 {offsets = [0, 0, 16], sizes = [2, 24, 8], strides = [1, 1, 1]} : vector<2x24x32xf32> to vector<2x24x8xf32>
    "tpu.trace_start"() <{level = 10 : i32, message = "bqd,bkd->bqk"}> : () -> ()
    %cst_110 = arith.constant dense<0.000000e+00> : vector<2x24x24xf32>
    %257 = tpu.matmul %254, %255, %cst_110 {dimension_numbers = #tpu.dot_dimension_numbers<[2], [2], [1], [1], [0, 0, 0, 1, 1, 1], [0], [0]>} : vector<2x24x8xf32>, vector<2x24x8xf32>, vector<2x24x24xf32> -> vector<2x24x24xf32>
    %cst_111 = arith.constant -1.000000e+30 : f32
    "tpu.trace_stop"() : () -> ()
    %258 = vector.broadcast %cst_111 : f32 to vector<2x24x24xf32>
    %259 = arith.select %20, %257, %258 : vector<2x24x24xi1>, vector<2x24x24xf32>
    %cst_112 = arith.constant dense<0xFF800000> : vector<2x24xf32>
    %260 = vector.multi_reduction <maximumf>, %259, %cst_112 [2] : vector<2x24x24xf32> to vector<2x24xf32>
    %261 = vector.shape_cast %260 : vector<2x24xf32> to vector<2x24x1xf32>
    %262 = vector.broadcast %261 : vector<2x24x1xf32> to vector<2x24x24xf32>
    %263 = arith.subf %259, %262 : vector<2x24x24xf32>
    %264 = math.exp %263 : vector<2x24x24xf32>
    %cst_113 = arith.constant dense<0.000000e+00> : vector<2x24xf32>
    %265 = vector.multi_reduction <add>, %264, %cst_113 [2] : vector<2x24x24xf32> to vector<2x24xf32>
    %266 = vector.shape_cast %265 : vector<2x24xf32> to vector<2x24x1xf32>
    %267 = vector.broadcast %266 : vector<2x24x1xf32> to vector<2x24x24xf32>
    %268 = arith.divf %264, %267 : vector<2x24x24xf32>
    "tpu.trace_start"() <{level = 10 : i32, message = "bqk,bkd->bqd"}> : () -> ()
    %cst_114 = arith.constant dense<0.000000e+00> : vector<2x24x8xf32>
    %269 = tpu.matmul %268, %256, %cst_114 {dimension_numbers = #tpu.dot_dimension_numbers<[2], [1], [1], [2], [0, 0, 0, 1, 1, 2], [0], [0]>} : vector<2x24x24xf32>, vector<2x24x8xf32>, vector<2x24x8xf32> -> vector<2x24x8xf32>
    "tpu.trace_stop"() : () -> ()
    %270 = vector.extract_strided_slice %217 {offsets = [0, 0, 24], sizes = [2, 24, 8], strides = [1, 1, 1]} : vector<2x24x32xf32> to vector<2x24x8xf32>
    %271 = vector.extract_strided_slice %219 {offsets = [0, 0, 24], sizes = [2, 24, 8], strides = [1, 1, 1]} : vector<2x24x32xf32> to vector<2x24x8xf32>
    %272 = vector.extract_strided_slice %221 {offsets = [0, 0, 24], sizes = [2, 24, 8], strides = [1, 1, 1]} : vector<2x24x32xf32> to vector<2x24x8xf32>
    "tpu.trace_start"() <{level = 10 : i32, message = "bqd,bkd->bqk"}> : () -> ()
    %cst_115 = arith.constant dense<0.000000e+00> : vector<2x24x24xf32>
    %273 = tpu.matmul %270, %271, %cst_115 {dimension_numbers = #tpu.dot_dimension_numbers<[2], [2], [1], [1], [0, 0, 0, 1, 1, 1], [0], [0]>} : vector<2x24x8xf32>, vector<2x24x8xf32>, vector<2x24x24xf32> -> vector<2x24x24xf32>
    %cst_116 = arith.constant -1.000000e+30 : f32
    "tpu.trace_stop"() : () -> ()
    %274 = vector.broadcast %cst_116 : f32 to vector<2x24x24xf32>
    %275 = arith.select %20, %273, %274 : vector<2x24x24xi1>, vector<2x24x24xf32>
    %cst_117 = arith.constant dense<0xFF800000> : vector<2x24xf32>
    %276 = vector.multi_reduction <maximumf>, %275, %cst_117 [2] : vector<2x24x24xf32> to vector<2x24xf32>
    %277 = vector.shape_cast %276 : vector<2x24xf32> to vector<2x24x1xf32>
    %278 = vector.broadcast %277 : vector<2x24x1xf32> to vector<2x24x24xf32>
    %279 = arith.subf %275, %278 : vector<2x24x24xf32>
    %280 = math.exp %279 : vector<2x24x24xf32>
    %cst_118 = arith.constant dense<0.000000e+00> : vector<2x24xf32>
    %281 = vector.multi_reduction <add>, %280, %cst_118 [2] : vector<2x24x24xf32> to vector<2x24xf32>
    %282 = vector.shape_cast %281 : vector<2x24xf32> to vector<2x24x1xf32>
    %283 = vector.broadcast %282 : vector<2x24x1xf32> to vector<2x24x24xf32>
    %284 = arith.divf %280, %283 : vector<2x24x24xf32>
    "tpu.trace_start"() <{level = 10 : i32, message = "bqk,bkd->bqd"}> : () -> ()
    %cst_119 = arith.constant dense<0.000000e+00> : vector<2x24x8xf32>
    %285 = tpu.matmul %284, %272, %cst_119 {dimension_numbers = #tpu.dot_dimension_numbers<[2], [1], [1], [2], [0, 0, 0, 1, 1, 2], [0], [0]>} : vector<2x24x24xf32>, vector<2x24x8xf32>, vector<2x24x8xf32> -> vector<2x24x8xf32>
    "tpu.trace_stop"() : () -> ()
    %286 = tpu.concatenate %237, %253, %269, %285 in 2 : vector<2x24x8xf32>, vector<2x24x8xf32>, vector<2x24x8xf32>, vector<2x24x8xf32> -> vector<2x24x32xf32>
    %287 = vector.shape_cast %286 : vector<2x24x32xf32> to vector<48x32xf32>
    %c1_120 = arith.constant 1 : index
    %c0_121 = arith.constant 0 : index
    %c0_122 = arith.constant 0 : index
    %288 = vector.load %arg9[%c1_120, %c0_121, %c0_122] : memref<2x32x32xf32, #tpu.memory_space<vmem>>, vector<1x32x32xf32>
    %289 = vector.shape_cast %288 : vector<1x32x32xf32> to vector<32x32xf32>
    %cst_123 = arith.constant dense<0.000000e+00> : vector<48x32xf32>
    %290 = tpu.matmul %287, %289, %cst_123 {dimension_numbers = #tpu.dot_dimension_numbers<[1], [0], [0], [1], [0, 0, 1, 1], [], []>} : vector<48x32xf32>, vector<32x32xf32>, vector<48x32xf32> -> vector<48x32xf32>
    %291 = arith.addf %182, %290 : vector<48x32xf32>
    %c1_124 = arith.constant 1 : index
    %c0_125 = arith.constant 0 : index
    %c0_126 = arith.constant 0 : index
    %292 = vector.load %arg10[%c1_124, %c0_125, %c0_126] : memref<2x1x32xf32, #tpu.memory_space<vmem>>, vector<1x1x32xf32>
    %293 = vector.shape_cast %292 : vector<1x1x32xf32> to vector<1x32xf32>
    %294 = vector.broadcast %293 : vector<1x32xf32> to vector<48x32xf32>
    %295 = arith.addf %291, %294 : vector<48x32xf32>
    %c1_127 = arith.constant 1 : index
    %c0_128 = arith.constant 0 : index
    %c0_129 = arith.constant 0 : index
    %296 = vector.load %arg11[%c1_127, %c0_128, %c0_129] : memref<2x1x32xf32, #tpu.memory_space<vmem>>, vector<1x1x32xf32>
    %297 = vector.shape_cast %296 : vector<1x1x32xf32> to vector<1x32xf32>
    %c1_130 = arith.constant 1 : index
    %c0_131 = arith.constant 0 : index
    %c0_132 = arith.constant 0 : index
    %298 = vector.load %arg12[%c1_130, %c0_131, %c0_132] : memref<2x1x32xf32, #tpu.memory_space<vmem>>, vector<1x1x32xf32>
    %299 = vector.shape_cast %298 : vector<1x1x32xf32> to vector<1x32xf32>
    %cst_133 = arith.constant dense<0.000000e+00> : vector<48xf32>
    %300 = vector.multi_reduction <add>, %295, %cst_133 [1] : vector<48x32xf32> to vector<48xf32>
    %301 = vector.shape_cast %300 : vector<48xf32> to vector<48x1xf32>
    %cst_134 = arith.constant 3.200000e+01 : f32
    %302 = vector.broadcast %cst_134 : f32 to vector<48x1xf32>
    %303 = arith.divf %301, %302 : vector<48x1xf32>
    %304 = vector.broadcast %303 : vector<48x1xf32> to vector<48x32xf32>
    %305 = arith.subf %295, %304 : vector<48x32xf32>
    %306 = arith.mulf %305, %305 : vector<48x32xf32>
    %cst_135 = arith.constant dense<0.000000e+00> : vector<48xf32>
    %307 = vector.multi_reduction <add>, %306, %cst_135 [1] : vector<48x32xf32> to vector<48xf32>
    %308 = vector.shape_cast %307 : vector<48xf32> to vector<48x1xf32>
    %cst_136 = arith.constant 3.200000e+01 : f32
    %309 = vector.broadcast %cst_136 : f32 to vector<48x1xf32>
    %310 = arith.divf %308, %309 : vector<48x1xf32>
    %311 = vector.broadcast %303 : vector<48x1xf32> to vector<48x32xf32>
    %312 = arith.subf %295, %311 : vector<48x32xf32>
    %cst_137 = arith.constant 9.99999996E-13 : f32
    %313 = vector.broadcast %cst_137 : f32 to vector<48x1xf32>
    %314 = arith.addf %310, %313 : vector<48x1xf32>
    %315 = math.rsqrt %314 : vector<48x1xf32>
    %316 = vector.broadcast %315 : vector<48x1xf32> to vector<48x32xf32>
    %317 = arith.mulf %312, %316 : vector<48x32xf32>
    %318 = vector.broadcast %297 : vector<1x32xf32> to vector<48x32xf32>
    %319 = arith.mulf %317, %318 : vector<48x32xf32>
    %320 = vector.broadcast %299 : vector<1x32xf32> to vector<48x32xf32>
    %321 = arith.addf %319, %320 : vector<48x32xf32>
    %c1_138 = arith.constant 1 : index
    %c0_139 = arith.constant 0 : index
    %c0_140 = arith.constant 0 : index
    %322 = vector.load %arg13[%c1_138, %c0_139, %c0_140] : memref<2x32x64xf32, #tpu.memory_space<vmem>>, vector<1x32x64xf32>
    %323 = vector.shape_cast %322 : vector<1x32x64xf32> to vector<32x64xf32>
    %cst_141 = arith.constant dense<0.000000e+00> : vector<48x64xf32>
    %324 = tpu.matmul %321, %323, %cst_141 {dimension_numbers = #tpu.dot_dimension_numbers<[1], [0], [0], [1], [0, 0, 1, 1], [], []>} : vector<48x32xf32>, vector<32x64xf32>, vector<48x64xf32> -> vector<48x64xf32>
    %c1_142 = arith.constant 1 : index
    %c0_143 = arith.constant 0 : index
    %c0_144 = arith.constant 0 : index
    %325 = vector.load %arg14[%c1_142, %c0_143, %c0_144] : memref<2x1x64xf32, #tpu.memory_space<vmem>>, vector<1x1x64xf32>
    %326 = vector.shape_cast %325 : vector<1x1x64xf32> to vector<1x64xf32>
    %327 = vector.broadcast %326 : vector<1x64xf32> to vector<48x64xf32>
    %328 = arith.addf %324, %327 : vector<48x64xf32>
    %cst_145 = arith.constant 5.000000e-01 : f32
    %329 = vector.broadcast %cst_145 : f32 to vector<48x64xf32>
    %330 = arith.mulf %329, %328 : vector<48x64xf32>
    %cst_146 = arith.constant 0.707106769 : f32
    %331 = vector.broadcast %cst_146 : f32 to vector<48x64xf32>
    %332 = arith.mulf %328, %331 : vector<48x64xf32>
    %333 = math.erf %332 : vector<48x64xf32>
    %cst_147 = arith.constant 1.000000e+00 : f32
    %334 = vector.broadcast %cst_147 : f32 to vector<48x64xf32>
    %335 = arith.addf %334, %333 : vector<48x64xf32>
    %336 = arith.mulf %330, %335 : vector<48x64xf32>
    %c1_148 = arith.constant 1 : index
    %c0_149 = arith.constant 0 : index
    %c0_150 = arith.constant 0 : index
    %337 = vector.load %arg15[%c1_148, %c0_149, %c0_150] : memref<2x64x32xf32, #tpu.memory_space<vmem>>, vector<1x64x32xf32>
    %338 = vector.shape_cast %337 : vector<1x64x32xf32> to vector<64x32xf32>
    %cst_151 = arith.constant dense<0.000000e+00> : vector<48x32xf32>
    %339 = tpu.matmul %336, %338, %cst_151 {dimension_numbers = #tpu.dot_dimension_numbers<[1], [0], [0], [1], [0, 0, 1, 1], [], []>} : vector<48x64xf32>, vector<64x32xf32>, vector<48x32xf32> -> vector<48x32xf32>
    %340 = arith.addf %295, %339 : vector<48x32xf32>
    %c1_152 = arith.constant 1 : index
    %c0_153 = arith.constant 0 : index
    %c0_154 = arith.constant 0 : index
    %341 = vector.load %arg16[%c1_152, %c0_153, %c0_154] : memref<2x1x32xf32, #tpu.memory_space<vmem>>, vector<1x1x32xf32>
    %342 = vector.shape_cast %341 : vector<1x1x32xf32> to vector<1x32xf32>
    %343 = vector.broadcast %342 : vector<1x32xf32> to vector<48x32xf32>
    %344 = arith.addf %340, %343 : vector<48x32xf32>
    %c0_155 = arith.constant 0 : index
    %c0_156 = arith.constant 0 : index
    %345 = vector.load %arg17[%c0_155, %c0_156] : memref<1x32xf32, #tpu.memory_space<vmem>>, vector<1x32xf32>
    %c0_157 = arith.constant 0 : index
    %c0_158 = arith.constant 0 : index
    %346 = vector.load %arg18[%c0_157, %c0_158] : memref<1x32xf32, #tpu.memory_space<vmem>>, vector<1x32xf32>
    %cst_159 = arith.constant dense<0.000000e+00> : vector<48xf32>
    %347 = vector.multi_reduction <add>, %344, %cst_159 [1] : vector<48x32xf32> to vector<48xf32>
    %348 = vector.shape_cast %347 : vector<48xf32> to vector<48x1xf32>
    %cst_160 = arith.constant 3.200000e+01 : f32
    %349 = vector.broadcast %cst_160 : f32 to vector<48x1xf32>
    %350 = arith.divf %348, %349 : vector<48x1xf32>
    %351 = vector.broadcast %350 : vector<48x1xf32> to vector<48x32xf32>
    %352 = arith.subf %344, %351 : vector<48x32xf32>
    %353 = arith.mulf %352, %352 : vector<48x32xf32>
    %cst_161 = arith.constant dense<0.000000e+00> : vector<48xf32>
    %354 = vector.multi_reduction <add>, %353, %cst_161 [1] : vector<48x32xf32> to vector<48xf32>
    %355 = vector.shape_cast %354 : vector<48xf32> to vector<48x1xf32>
    %cst_162 = arith.constant 3.200000e+01 : f32
    %356 = vector.broadcast %cst_162 : f32 to vector<48x1xf32>
    %357 = arith.divf %355, %356 : vector<48x1xf32>
    %358 = vector.broadcast %350 : vector<48x1xf32> to vector<48x32xf32>
    %359 = arith.subf %344, %358 : vector<48x32xf32>
    %cst_163 = arith.constant 9.99999996E-13 : f32
    %360 = vector.broadcast %cst_163 : f32 to vector<48x1xf32>
    %361 = arith.addf %357, %360 : vector<48x1xf32>
    %362 = math.rsqrt %361 : vector<48x1xf32>
    %363 = vector.broadcast %362 : vector<48x1xf32> to vector<48x32xf32>
    %364 = arith.mulf %359, %363 : vector<48x32xf32>
    %365 = vector.broadcast %345 : vector<1x32xf32> to vector<48x32xf32>
    %366 = arith.mulf %364, %365 : vector<48x32xf32>
    %367 = vector.broadcast %346 : vector<1x32xf32> to vector<48x32xf32>
    %368 = arith.addf %366, %367 : vector<48x32xf32>
    %369 = vector.shape_cast %368 : vector<48x32xf32> to vector<2x24x32xf32>
    %c0_164 = arith.constant 0 : index
    %c0_165 = arith.constant 0 : index
    %c0_166 = arith.constant 0 : index
    %370 = vector.load %arg19[%c0_164, %c0_165, %c0_166] : memref<2x24x32xf32, #tpu.memory_space<vmem>>, vector<2x24x32xf32>
    tpu.vector_store %arg19[%c0_164, %c0_165, %c0_166], %369 {strides = array<i32>} : memref<2x24x32xf32, #tpu.memory_space<vmem>>, vector<2x24x32xf32>,
    return
  }
}

</mosaic_0001>

<llo_original>
// kernel: vit_adapter_forward.1
$region0: #{vit_adapter_forward.1}
  #allocation0 [shape = 'u32[]', space=smem, size = 0x4, offset = 0x4, fixed_abs, tag = 'smem constant byte address 0x4 - core index']
  #allocation1 [shape = 'u32[72,128]{1,0:T(1,128)}', space=vmem, size = 0x9000, scoped, tag = 'internal scratch']
  %s0 = inlined_call_operand.vmem [shape: f32[32,48], index: 0, kind: input, shape index: {}]
  %s1 = inlined_call_operand.vmem [shape: f32[48,32], index: 1, kind: input, shape index: {}]
  %s2 = inlined_call_operand.vmem [shape: f32[1,32], index: 2, kind: input, shape index: {}]
  %s3 = inlined_call_operand.vmem [shape: f32[1,32], index: 3, kind: input, shape index: {}]
  %s4 = inlined_call_operand.vmem [shape: f32[24,32], index: 4, kind: input, shape index: {}]
  %s5 = inlined_call_operand.vmem [shape: f32[2,1,32], index: 5, kind: input, shape index: {}]
  %s6 = inlined_call_operand.vmem [shape: f32[2,1,32], index: 6, kind: input, shape index: {}]
  %s7 = inlined_call_operand.vmem [shape: f32[2,32,96], index: 7, kind: input, shape index: {}]
  %s8 = inlined_call_operand.vmem [shape: f32[2,1,96], index: 8, kind: input, shape index: {}]
  %s9 = inlined_call_operand.vmem [shape: f32[2,32,32], index: 9, kind: input, shape index: {}]
  %s10 = inlined_call_operand.vmem [shape: f32[2,1,32], index: 10, kind: input, shape index: {}]
  %s11 = inlined_call_operand.vmem [shape: f32[2,1,32], index: 11, kind: input, shape index: {}]
  %s12 = inlined_call_operand.vmem [shape: f32[2,1,32], index: 12, kind: input, shape index: {}]
  %s13 = inlined_call_operand.vmem [shape: f32[2,32,64], index: 13, kind: input, shape index: {}]
  %s14 = inlined_call_operand.vmem [shape: f32[2,1,64], index: 14, kind: input, shape index: {}]
  %s15 = inlined_call_operand.vmem [shape: f32[2,64,32], index: 15, kind: input, shape index: {}]
  %s16 = inlined_call_operand.vmem [shape: f32[2,1,32], index: 16, kind: input, shape index: {}]
  %s17 = inlined_call_operand.vmem [shape: f32[1,32], index: 17, kind: input, shape index: {}]
  %s18 = inlined_call_operand.vmem [shape: f32[1,32], index: 18, kind: input, shape index: {}]
  %s19 = inlined_call_operand.vmem [shape: f32[2,24,32], index: 19, kind: output, shape index: {}]
  %s20 = sld [smem:[#allocation0]]
  $region86: #{vit_adapter_forward.1} parent=0
    _
  %s22 = ssub.s32 1, %s20
  %s23 = scalar_select 0, %s22, %s20
  // Predicated region
  $region2: #{vit_adapter_forward.1} parent=0 // pred_check
    _
  $region3: #{vit_adapter_forward.1} parent=0 // pred_check_branch
    %25 = sbr.rel (0) target = $region5
  $region4: #{vit_adapter_forward.1} parent=0 // pred_region
    _
  $region5: #{vit_adapter_forward.1} parent=0 // pred_fallthru
    _
  // Predicated region
  $region6: #{vit_adapter_forward.1} parent=0 // pred_check
    _
  $region7: #{vit_adapter_forward.1} parent=0 // pred_check_branch
    %27 = sbr.rel (0) target = $region9
  $region8: #{vit_adapter_forward.1} parent=0 // pred_region
    _
  $region9: #{vit_adapter_forward.1} parent=0 // pred_fallthru
    _
  // Predicated region
  $region10: #{vit_adapter_forward.1} parent=0 // pred_check
    _
  $region11: #{vit_adapter_forward.1} parent=0 // pred_check_branch
    %29 = sbr.rel (0) target = $region13
  $region12: #{vit_adapter_forward.1} parent=0 // pred_region
    _
  $region13: #{vit_adapter_forward.1} parent=0 // pred_fallthru
    _
  // Predicated region
  $region14: #{vit_adapter_forward.1} parent=0 // pred_check
    _
  $region15: #{vit_adapter_forward.1} parent=0 // pred_check_branch
    %31 = sbr.rel (0) target = $region17
  $region16: #{vit_adapter_forward.1} parent=0 // pred_region
    _
  $region17: #{vit_adapter_forward.1} parent=0 // pred_fallthru
    _
  // Predicated region
  $region18: #{vit_adapter_forward.1} parent=0 // pred_check
    _
  $region19: #{vit_adapter_forward.1} parent=0 // pred_check_branch
    %33 = sbr.rel (0) target = $region21
  $region20: #{vit_adapter_forward.1} parent=0 // pred_region
    _
  $region21: #{vit_adapter_forward.1} parent=0 // pred_fallthru
    _
  // Predicated region
  $region22: #{vit_adapter_forward.1} parent=0 // pred_check
    _
  $region23: #{vit_adapter_forward.1} parent=0 // pred_check_branch
    %35 = sbr.rel (0) target = $region25
  $region24: #{vit_adapter_forward.1} parent=0 // pred_region
    _
  $region25: #{vit_adapter_forward.1} parent=0 // pred_fallthru
    _
  // Predicated region
  $region26: #{vit_adapter_forward.1} parent=0 // pred_check
    _
  $region27: #{vit_adapter_forward.1} parent=0 // pred_check_branch
    %37 = sbr.rel (0) target = $region29
  $region28: #{vit_adapter_forward.1} parent=0 // pred_region
    _
  $region29: #{vit_adapter_forward.1} parent=0 // pred_fallthru
    _
  // Predicated region
  $region30: #{vit_adapter_forward.1} parent=0 // pred_check
    _
  $region31: #{vit_adapter_forward.1} parent=0 // pred_check_branch
    %39 = sbr.rel (0) target = $region33
  $region32: #{vit_adapter_forward.1} parent=0 // pred_region
    _
  $region33: #{vit_adapter_forward.1} parent=0 // pred_fallthru
    _
  // Predicated region
  $region34: #{vit_adapter_forward.1} parent=0 // pred_check
    _
  $region35: #{vit_adapter_forward.1} parent=0 // pred_check_branch
    %41 = sbr.rel (0) target = $region37
  $region36: #{vit_adapter_forward.1} parent=0 // pred_region
    _
  $region37: #{vit_adapter_forward.1} parent=0 // pred_fallthru
    _
  // Predicated region
  $region38: #{vit_adapter_forward.1} parent=0 // pred_check
    _
  $region39: #{vit_adapter_forward.1} parent=0 // pred_check_branch
    %43 = sbr.rel (0) target = $region41
  $region40: #{vit_adapter_forward.1} parent=0 // pred_region
    _
  $region41: #{vit_adapter_forward.1} parent=0 // pred_fallthru
    _
  // Predicated region
  $region42: #{vit_adapter_forward.1} parent=0 // pred_check
    _
  $region43: #{vit_adapter_forward.1} parent=0 // pred_check_branch
    %45 = sbr.rel (0) target = $region45
  $region44: #{vit_adapter_forward.1} parent=0 // pred_region
    _
  $region45: #{vit_adapter_forward.1} parent=0 // pred_fallthru
    _
  // Predicated region
  $region46: #{vit_adapter_forward.1} parent=0 // pred_check
    _
  $region47: #{vit_adapter_forward.1} parent=0 // pred_check_branch
    %47 = sbr.rel (0) target = $region49
  $region48: #{vit_adapter_forward.1} parent=0 // pred_region
    _
  $region49: #{vit_adapter_forward.1} parent=0 // pred_fallthru
    _
  // Predicated region
  $region50: #{vit_adapter_forward.1} parent=0 // pred_check
    _
  $region51: #{vit_adapter_forward.1} parent=0 // pred_check_branch
    %49 = sbr.rel (0) target = $region53
  $region52: #{vit_adapter_forward.1} parent=0 // pred_region
    _
  $region53: #{vit_adapter_forward.1} parent=0 // pred_fallthru
    _
  // Predicated region
  $region54: #{vit_adapter_forward.1} parent=0 // pred_check
    _
  $region55: #{vit_adapter_forward.1} parent=0 // pred_check_branch
    %51 = sbr.rel (0) target = $region57
  $region56: #{vit_adapter_forward.1} parent=0 // pred_region
    _
  $region57: #{vit_adapter_forward.1} parent=0 // pred_fallthru
    _
  // Predicated region
  $region58: #{vit_adapter_forward.1} parent=0 // pred_check
    _
  $region59: #{vit_adapter_forward.1} parent=0 // pred_check_branch
    %53 = sbr.rel (0) target = $region61
  $region60: #{vit_adapter_forward.1} parent=0 // pred_region
    _
  $region61: #{vit_adapter_forward.1} parent=0 // pred_fallthru
    _
  // Predicated region
  $region62: #{vit_adapter_forward.1} parent=0 // pred_check
    _
  $region63: #{vit_adapter_forward.1} parent=0 // pred_check_branch
    %55 = sbr.rel (0) target = $region65
  $region64: #{vit_adapter_forward.1} parent=0 // pred_region
    _
  $region65: #{vit_adapter_forward.1} parent=0 // pred_fallthru
    _
  // Predicated region
  $region66: #{vit_adapter_forward.1} parent=0 // pred_check
    _
  $region67: #{vit_adapter_forward.1} parent=0 // pred_check_branch
    %57 = sbr.rel (0) target = $region69
  $region68: #{vit_adapter_forward.1} parent=0 // pred_region
    _
  $region69: #{vit_adapter_forward.1} parent=0 // pred_fallthru
    _
  // Predicated region
  $region70: #{vit_adapter_forward.1} parent=0 // pred_check
    _
  $region71: #{vit_adapter_forward.1} parent=0 // pred_check_branch
    %59 = sbr.rel (0) target = $region73
  $region72: #{vit_adapter_forward.1} parent=0 // pred_region
    _
  $region73: #{vit_adapter_forward.1} parent=0 // pred_fallthru
    _
  // Predicated region
  $region74: #{vit_adapter_forward.1} parent=0 // pred_check
    _
  $region75: #{vit_adapter_forward.1} parent=0 // pred_check_branch
    %61 = sbr.rel (0) target = $region77
  $region76: #{vit_adapter_forward.1} parent=0 // pred_region
    _
  $region77: #{vit_adapter_forward.1} parent=0 // pred_fallthru
    _
  %v62 = vld [vmem:[%s0] sm:$0xff]
  %v63 = vld [vmem:[%s0 + $0x8] sm:$0xff]
  %v64 = vld [vmem:[%s0 + $0x10] sm:$0xff]
  %v65 = vld [vmem:[%s0 + $0x18] sm:$0xff]
  %v66 = vld [vmem:[%s1] sm:$0xff]
  %v67 = vld [vmem:[%s1 + $0x8] sm:$0xff]
  %v68 = vld [vmem:[%s1 + $0x10] sm:$0xff]
  %v69 = vld [vmem:[%s1 + $0x18] sm:$0xff]
  %v70 = vld [vmem:[%s1 + $0x20] sm:$0xff]
  %v71 = vld [vmem:[%s1 + $0x28] sm:$0xff]
  %v72 = vld [vmem:[%s2] sm:$0x1]
  %v74 = vperm.slane %v72, 0
  %vm76 = vcmask 392192
  %v78 = vsel %vm76, %v62, 0
  %v81 = vsel %vm76, %v63, 0
  %v84 = vsel %vm76, %v64, 0
  %v87 = vsel %vm76, %v65, 0
  %89 = vmatpush.msra.mxu0 0.0
  %90 = vmatpush.msra.mxu0 0.0
  %91 = vmatpush.msra.mxu0 0.0
  %92 = vmatpush.msra.mxu0 0.0
  %93 = vmatpush.msra.mxu0 0.0
  %94 = vmatpush.msra.mxu0 0.0
  %95 = vmatpush.msra.mxu0 0.0
  %96 = vmatpush.msra.mxu0 0.0
  %97 = vmatpush.msra.mxu0 0.0
  %98 = vmatpush.msra.mxu0 0.0
  %99 = vmatpush.msra.mxu0 %v71
  %100 = vmatpush.msra.mxu0 %v70
  %101 = vmatpush.msra.mxu0 %v69
  %102 = vmatpush.msra.mxu0 %v68
  %103 = vmatpush.msra.mxu0 %v67
  %104 = vmatpush.msra.mxu0 %v66
  %105 = vmatmul.f32.gmra.mxu0 %v78
  %v106 = vpop.f32.mrf.mxu0
  %v107 = vadd.f32 %v74, %v106
  %108 = vmatmul.f32.gmra.mxu0 %v81
  %v109 = vpop.f32.mrf.mxu0
  %v110 = vadd.f32 %v74, %v109
  %111 = vmatmul.f32.gmra.mxu0 %v84
  %v112 = vpop.f32.mrf.mxu0
  %v113 = vadd.f32 %v74, %v112
  %114 = vmatmul.f32.gmra.mxu0 %v87
  %v115 = vpop.f32.mrf.mxu0
  %v116 = vadd.f32 %v74, %v115
  %117 = vdwg.mxu0
  %v118 = vld [vmem:[%s3] sm:$0x1]
  %vm123 = vcmask 1040384
  %v124 = vrot.slane %v107, 7
  %v125 = vrot.slane %v110, 7
  %v126 = vsel %vm123, %v124, %v125
  %v127 = vrot.slane %v113, 7
  %v128 = vrot.slane %v116, 7
  %v129 = vsel %vm123, %v127, %v128
  %v136 = vsel %vm123, %v118, %v124
  %v137 = vsel %vm123, %v118, %v127
  %v138 = vsel %vm123, %v125, 0.0
  %v139 = vsel %vm123, %v128, 0.0
  %v140 = vld [vmem:[%s4] sm:$0xff]
  %v141 = vld [vmem:[%s4 + $0x8] sm:$0xff]
  %v142 = vld [vmem:[%s4 + $0x10] sm:$0xff]
  %v143 = vadd.f32 %v136, %v140
  %v144 = vadd.f32 %v126, %v141
  %v145 = vadd.f32 %v138, %v142
  %v146 = vadd.f32 %v137, %v140
  %v147 = vadd.f32 %v129, %v141
  %v148 = vadd.f32 %v139, %v142
  %v149 = vlaneseq
  %v150 = vand.u32 %v149, 127
  %vm151 = vcmp.lt.s32.totalorder %v150, 17
  %v152 = vld [vmem:[%s5] sm:$0x1]
  %v153 = vld [vmem:[%s6] sm:$0x1]
  %vm154 = vcmask 261120
  %v155 = vsel %vm154, %v143, 0.0
  %156 = vadd.xlane.f32.xlu0 %v155
  %v157 = vpop.xlane.xlu0 %156
  %v158 = vsel %vm154, %v144, 0.0
  %159 = vadd.xlane.f32.xlu0 %v158
  %v160 = vpop.xlane.xlu0 %159
  %v161 = vsel %vm154, %v145, 0.0
  %162 = vadd.xlane.f32.xlu0 %v161
  %v163 = vpop.xlane.xlu0 %162
  %v164 = vsel %vm154, %v146, 0.0
  %165 = vadd.xlane.f32.xlu0 %v164
  %v166 = vpop.xlane.xlu0 %165
  %v167 = vsel %vm154, %v147, 0.0
  %168 = vadd.xlane.f32.xlu0 %v167
  %v169 = vpop.xlane.xlu0 %168
  %v170 = vsel %vm154, %v148, 0.0
  %171 = vadd.xlane.f32.xlu0 %v170
  %v172 = vpop.xlane.xlu0 %171
  %v173 = vrcp.pop 32.0
  %v174 = vmul.f32 32.0, %v173
  %v175 = vsub.f32 1.0, %v174
  %v176 = vmul.f32 %v173, %v175
  %v177 = vadd.f32 %v173, %v176
  %vm178 = vweird.f32 %v173
  %v179 = vsel %vm178, %v173, %v177
  %v180 = vmul.f32 %v157, %v179
  %v181 = vmul.f32 %v160, %v179
  %v182 = vmul.f32 %v163, %v179
  %v183 = vmul.f32 %v166, %v179
  %v184 = vmul.f32 %v169, %v179
  %v185 = vmul.f32 %v172, %v179
  %v186 = vsub.f32 %v143, %v180
  %v187 = vsub.f32 %v144, %v181
  %v188 = vsub.f32 %v145, %v182
  %v189 = vsub.f32 %v146, %v183
  %v190 = vsub.f32 %v147, %v184
  %v191 = vsub.f32 %v148, %v185
  %v192 = vmul.f32 %v186, %v186
  %v193 = vmul.f32 %v187, %v187
  %v194 = vmul.f32 %v188, %v188
  %v195 = vmul.f32 %v189, %v189
  %v196 = vmul.f32 %v190, %v190
  %v197 = vmul.f32 %v191, %v191
  %v198 = vsel %vm154, %v192, 0.0
  %199 = vadd.xlane.f32.xlu0 %v198
  %v200 = vpop.xlane.xlu0 %199
  %v201 = vsel %vm154, %v193, 0.0
  %202 = vadd.xlane.f32.xlu0 %v201
  %v203 = vpop.xlane.xlu0 %202
  %v204 = vsel %vm154, %v194, 0.0
  %205 = vadd.xlane.f32.xlu0 %v204
  %v206 = vpop.xlane.xlu0 %205
  %v207 = vsel %vm154, %v195, 0.0
  %208 = vadd.xlane.f32.xlu0 %v207
  %v209 = vpop.xlane.xlu0 %208
  %v210 = vsel %vm154, %v196, 0.0
  %211 = vadd.xlane.f32.xlu0 %v210
  %v212 = vpop.xlane.xlu0 %211
  %v213 = vsel %vm154, %v197, 0.0
  %214 = vadd.xlane.f32.xlu0 %v213
  %v215 = vpop.xlane.xlu0 %214
  %v216 = vmul.f32 %v200, %v179
  %v217 = vmul.f32 %v203, %v179
  %v218 = vmul.f32 %v206, %v179
  %v219 = vmul.f32 %v209, %v179
  %v220 = vmul.f32 %v212, %v179
  %v221 = vmul.f32 %v215, %v179
  %v222 = vadd.f32 %v216, 1e-12
  %v223 = vadd.f32 %v217, 1e-12
  %v224 = vadd.f32 %v218, 1e-12
  %v225 = vadd.f32 %v219, 1e-12
  %v226 = vadd.f32 %v220, 1e-12
  %v227 = vadd.f32 %v221, 1e-12
  %v228 = vrsqrt.pop %v222
  %v229 = vmul.f32 %v228, %v222
  %v230 = vmul.f32 %v229, %v228
  %v231 = vmul.f32 0.5, %v230
  %v232 = vsub.f32 1.5, %v231
  %v233 = vmul.f32 %v228, %v232
  %vm234 = vweird.f32 %v222
  %vm235 = vweird.f32 %v228
  %vm236 = vmor %vm234, %vm235
  %v237 = vsel %vm236, %v228, %v233
  %v238 = vrsqrt.pop %v223
  %v239 = vmul.f32 %v238, %v223
  %v240 = vmul.f32 %v239, %v238
  %v241 = vmul.f32 0.5, %v240
  %v242 = vsub.f32 1.5, %v241
  %v243 = vmul.f32 %v238, %v242
  %vm244 = vweird.f32 %v223
  %vm245 = vweird.f32 %v238
  %vm246 = vmor %vm244, %vm245
  %v247 = vsel %vm246, %v238, %v243
  %v248 = vrsqrt.pop %v224
  %v249 = vmul.f32 %v248, %v224
  %v250 = vmul.f32 %v249, %v248
  %v251 = vmul.f32 0.5, %v250
  %v252 = vsub.f32 1.5, %v251
  %v253 = vmul.f32 %v248, %v252
  %vm254 = vweird.f32 %v224
  %vm255 = vweird.f32 %v248
  %vm256 = vmor %vm254, %vm255
  %v257 = vsel %vm256, %v248, %v253
  %v258 = vrsqrt.pop %v225
  %v259 = vmul.f32 %v258, %v225
  %v260 = vmul.f32 %v259, %v258
  %v261 = vmul.f32 0.5, %v260
  %v262 = vsub.f32 1.5, %v261
  %v263 = vmul.f32 %v258, %v262
  %vm264 = vweird.f32 %v225
  %vm265 = vweird.f32 %v258
  %vm266 = vmor %vm264, %vm265
  %v267 = vsel %vm266, %v258, %v263
  %v268 = vrsqrt.pop %v226
  %v269 = vmul.f32 %v268, %v226
  %v270 = vmul.f32 %v269, %v268
  %v271 = vmul.f32 0.5, %v270
  %v272 = vsub.f32 1.5, %v271
  %v273 = vmul.f32 %v268, %v272
  %vm274 = vweird.f32 %v226
  %vm275 = vweird.f32 %v268
  %vm276 = vmor %vm274, %vm275
  %v277 = vsel %vm276, %v268, %v273
  %v278 = vrsqrt.pop %v227
  %v279 = vmul.f32 %v278, %v227
  %v280 = vmul.f32 %v279, %v278
  %v281 = vmul.f32 0.5, %v280
  %v282 = vsub.f32 1.5, %v281
  %v283 = vmul.f32 %v278, %v282
  %vm284 = vweird.f32 %v227
  %vm285 = vweird.f32 %v278
  %vm286 = vmor %vm284, %vm285
  %v287 = vsel %vm286, %v278, %v283
  %v288 = vmul.f32 %v186, %v237
  %v289 = vmul.f32 %v187, %v247
  %v290 = vmul.f32 %v188, %v257
  %v291 = vmul.f32 %v189, %v267
  %v292 = vmul.f32 %v190, %v277
  %v293 = vmul.f32 %v191, %v287
  %v295 = vperm.slane %v152, 0
  %v297 = vmul.f32 %v288, %v295
  %v298 = vmul.f32 %v289, %v295
  %v299 = vmul.f32 %v290, %v295
  %v300 = vmul.f32 %v291, %v295
  %v301 = vmul.f32 %v292, %v295
  %v302 = vmul.f32 %v293, %v295
  %v304 = vperm.slane %v153, 0
  %v306 = vadd.f32 %v297, %v304
  %v307 = vadd.f32 %v298, %v304
  %v308 = vadd.f32 %v299, %v304
  %v309 = vadd.f32 %v300, %v304
  %v310 = vadd.f32 %v301, %v304
  %v311 = vadd.f32 %v302, %v304
  %v312 = vld [vmem:[%s7] sm:$0xff]
  %v313 = vld [vmem:[%s7 + $0x8] sm:$0xff]
  %v314 = vld [vmem:[%s7 + $0x10] sm:$0xff]
  %v315 = vld [vmem:[%s7 + $0x18] sm:$0xff]
  %v316 = vld [vmem:[%s8] sm:$0x1]
  %v318 = vperm.slane %v316, 0
  %v321 = vsel %vm154, %v306, 0
  %v324 = vsel %vm154, %v307, 0
  %v327 = vsel %vm154, %v308, 0
  %v330 = vsel %vm154, %v309, 0
  %v333 = vsel %vm154, %v310, 0
  %v336 = vsel %vm154, %v311, 0
  %338 = vmatpush.msra.mxu0 0.0
  %339 = vmatpush.msra.mxu0 0.0
  %340 = vmatpush.msra.mxu0 0.0
  %341 = vmatpush.msra.mxu0 0.0
  %342 = vmatpush.msra.mxu0 0.0
  %343 = vmatpush.msra.mxu0 0.0
  %344 = vmatpush.msra.mxu0 0.0
  %345 = vmatpush.msra.mxu0 0.0
  %346 = vmatpush.msra.mxu0 0.0
  %347 = vmatpush.msra.mxu0 0.0
  %348 = vmatpush.msra.mxu0 0.0
  %349 = vmatpush.msra.mxu0 0.0
  %350 = vmatpush.msra.mxu0 %v315
  %351 = vmatpush.msra.mxu0 %v314
  %352 = vmatpush.msra.mxu0 %v313
  %353 = vmatpush.msra.mxu0 %v312
  %354 = vmatmul.f32.gmra.mxu0 %v321
  %v355 = vpop.f32.mrf.mxu0
  %v356 = vadd.f32 %v318, %v355
  %357 = vmatmul.f32.gmra.mxu0 %v324
  %v358 = vpop.f32.mrf.mxu0
  %v359 = vadd.f32 %v318, %v358
  %360 = vmatmul.f32.gmra.mxu0 %v327
  %v361 = vpop.f32.mrf.mxu0
  %v362 = vadd.f32 %v318, %v361
  %363 = vmatmul.f32.gmra.mxu0 %v330
  %v364 = vpop.f32.mrf.mxu0
  %v365 = vadd.f32 %v318, %v364
  %366 = vmatmul.f32.gmra.mxu0 %v333
  %v367 = vpop.f32.mrf.mxu0
  %v368 = vadd.f32 %v318, %v367
  %369 = vmatmul.f32.gmra.mxu0 %v336
  %v370 = vpop.f32.mrf.mxu0
  %v371 = vadd.f32 %v318, %v370
  %372 = vdwg.mxu0
  %376 = vrot.lane.b32.xlu0 %v356, 96
  %v377 = vpop.permute.xlu0 %376
  %378 = vrot.lane.b32.xlu0 %v359, 96
  %v379 = vpop.permute.xlu0 %378
  %380 = vrot.lane.b32.xlu0 %v362, 96
  %v381 = vpop.permute.xlu0 %380
  %vm382 = vcmask 64512
  %v383 = vsel %vm382, %v356, 0
  %v385 = vsel %vm382, %v359, 0
  %v387 = vsel %vm382, %v362, 0
  %v389 = vsel %vm382, %v377, 0
  %v391 = vsel %vm382, %v379, 0
  %v393 = vsel %vm382, %v381, 0
  %395 = vmatpush.xpose.msra.mxu0 0.0
  %396 = vmatpush.xpose.msra.mxu0 0.0
  %397 = vmatpush.xpose.msra.mxu0 0.0
  %398 = vmatpush.xpose.msra.mxu0 0.0
  %399 = vmatpush.xpose.msra.mxu0 0.0
  %400 = vmatpush.xpose.msra.mxu0 0.0
  %401 = vmatpush.xpose.msra.mxu0 0.0
  %402 = vmatpush.xpose.msra.mxu0 0.0
  %403 = vmatpush.xpose.msra.mxu0 0.0
  %404 = vmatpush.xpose.msra.mxu0 0.0
  %405 = vmatpush.xpose.msra.mxu0 0.0
  %406 = vmatpush.xpose.msra.mxu0 0.0
  %407 = vmatpush.xpose.msra.mxu0 0.0
  %408 = vmatpush.xpose.msra.mxu0 %v393
  %409 = vmatpush.xpose.msra.mxu0 %v391
  %410 = vmatpush.xpose.msra.mxu0 %v389
  %411 = vmatmul.f32.gmra.mxu0 %v383
  %v412 = vpop.f32.mrf.mxu0
  %v413 = vadd.f32 0.0, %v412
  %414 = vmatmul.f32.gmra.mxu0 %v385
  %v415 = vpop.f32.mrf.mxu0
  %v416 = vadd.f32 0.0, %v415
  %417 = vmatmul.f32.gmra.mxu0 %v387
  %v418 = vpop.f32.mrf.mxu0
  %v419 = vadd.f32 0.0, %v418
  %420 = vdwg.mxu0
  %424 = vrot.lane.b32.xlu0 %v365, 96
  %v425 = vpop.permute.xlu0 %424
  %426 = vrot.lane.b32.xlu0 %v368, 96
  %v427 = vpop.permute.xlu0 %426
  %428 = vrot.lane.b32.xlu0 %v371, 96
  %v429 = vpop.permute.xlu0 %428
  %v430 = vsel %vm382, %v365, 0
  %v432 = vsel %vm382, %v368, 0
  %v434 = vsel %vm382, %v371, 0
  %v436 = vsel %vm382, %v425, 0
  %v438 = vsel %vm382, %v427, 0
  %v440 = vsel %vm382, %v429, 0
  %442 = vmatpush.xpose.msra.mxu0 0.0
  %443 = vmatpush.xpose.msra.mxu0 0.0
  %444 = vmatpush.xpose.msra.mxu0 0.0
  %445 = vmatpush.xpose.msra.mxu0 0.0
  %446 = vmatpush.xpose.msra.mxu0 0.0
  %447 = vmatpush.xpose.msra.mxu0 0.0
  %448 = vmatpush.xpose.msra.mxu0 0.0
  %449 = vmatpush.xpose.msra.mxu0 0.0
  %450 = vmatpush.xpose.msra.mxu0 0.0
  %451 = vmatpush.xpose.msra.mxu0 0.0
  %452 = vmatpush.xpose.msra.mxu0 0.0
  %453 = vmatpush.xpose.msra.mxu0 0.0
  %454 = vmatpush.xpose.msra.mxu0 0.0
  %455 = vmatpush.xpose.msra.mxu0 %v440
  %456 = vmatpush.xpose.msra.mxu0 %v438
  %457 = vmatpush.xpose.msra.mxu0 %v436
  %458 = vmatmul.f32.gmra.mxu0 %v430
  %v459 = vpop.f32.mrf.mxu0
  %v460 = vadd.f32 0.0, %v459
  %461 = vmatmul.f32.gmra.mxu0 %v432
  %v462 = vpop.f32.mrf.mxu0
  %v463 = vadd.f32 0.0, %v462
  %464 = vmatmul.f32.gmra.mxu0 %v434
  %v465 = vpop.f32.mrf.mxu0
  %v466 = vadd.f32 0.0, %v465
  %467 = vdwg.mxu0
  %v468 = vsel %vm151, %v413, -1e+30
  %v469 = vsel %vm151, %v416, -1e+30
  %v470 = vsel %vm151, %v419, -1e+30
  %v471 = vsel %vm151, %v460, -1e+30
  %v472 = vsel %vm151, %v463, -1e+30
  %v473 = vsel %vm151, %v466, -1e+30
  %vm474 = vcmask 195584
  %v475 = vsel %vm474, %v468, -inf
  %476 = vmax.xlane.f32.xlu0 %v475
  %v477 = vpop.xlane.xlu0 %476
  %v478 = vsel %vm474, %v469, -inf
  %479 = vmax.xlane.f32.xlu0 %v478
  %v480 = vpop.xlane.xlu0 %479
  %v481 = vsel %vm474, %v470, -inf
  %482 = vmax.xlane.f32.xlu0 %v481
  %v483 = vpop.xlane.xlu0 %482
  %v484 = vsel %vm474, %v471, -inf
  %485 = vmax.xlane.f32.xlu0 %v484
  %v486 = vpop.xlane.xlu0 %485
  %v487 = vsel %vm474, %v472, -inf
  %488 = vmax.xlane.f32.xlu0 %v487
  %v489 = vpop.xlane.xlu0 %488
  %v490 = vsel %vm474, %v473, -inf
  %491 = vmax.xlane.f32.xlu0 %v490
  %v492 = vpop.xlane.xlu0 %491
  %v493 = vsub.f32 %v468, %v477
  %v494 = vsub.f32 %v469, %v480
  %v495 = vsub.f32 %v470, %v483
  %v496 = vsub.f32 %v471, %v486
  %v497 = vsub.f32 %v472, %v489
  %v498 = vsub.f32 %v473, %v492
  %v499 = vmul.f32 %v493, 1.442695
  %v500 = vpow.pop %v499
  %v501 = vmul.f32 %v494, 1.442695
  %v502 = vpow.pop %v501
  %v503 = vmul.f32 %v495, 1.442695
  %v504 = vpow.pop %v503
  %v505 = vmul.f32 %v496, 1.442695
  %v506 = vpow.pop %v505
  %v507 = vmul.f32 %v497, 1.442695
  %v508 = vpow.pop %v507
  %v509 = vmul.f32 %v498, 1.442695
  %v510 = vpow.pop %v509
  %v511 = vsel %vm474, %v500, 0.0
  %512 = vadd.xlane.f32.xlu0 %v511
  %v513 = vpop.xlane.xlu0 %512
  %v514 = vsel %vm474, %v502, 0.0
  %515 = vadd.xlane.f32.xlu0 %v514
  %v516 = vpop.xlane.xlu0 %515
  %v517 = vsel %vm474, %v504, 0.0
  %518 = vadd.xlane.f32.xlu0 %v517
  %v519 = vpop.xlane.xlu0 %518
  %v520 = vsel %vm474, %v506, 0.0
  %521 = vadd.xlane.f32.xlu0 %v520
  %v522 = vpop.xlane.xlu0 %521
  %v523 = vsel %vm474, %v508, 0.0
  %524 = vadd.xlane.f32.xlu0 %v523
  %v525 = vpop.xlane.xlu0 %524
  %v526 = vsel %vm474, %v510, 0.0
  %527 = vadd.xlane.f32.xlu0 %v526
  %v528 = vpop.xlane.xlu0 %527
  %v529 = vrcp.pop %v513
  %v530 = vmul.f32 %v513, %v529
  %v531 = vsub.f32 1.0, %v530
  %v532 = vmul.f32 %v529, %v531
  %v533 = vadd.f32 %v529, %v532
  %vm534 = vweird.f32 %v513
  %vm535 = vweird.f32 %v529
  %vm536 = vmor %vm534, %vm535
  %v537 = vsel %vm536, %v529, %v533
  %v538 = vand.u32 2147483647, %v513
  %vm539 = vcmp.eq.f32.partialorder %v538, 8.507059e+37
  %v540 = vand.u32 %v513, 2147483648
  %v541 = vor.u32 1.1754944e-38, %v540
  %v542 = vsel %vm539, %v541, %v537
  %v543 = vmul.f32 %v500, %v542
  %v544 = vrcp.pop %v516
  %v545 = vmul.f32 %v516, %v544
  %v546 = vsub.f32 1.0, %v545
  %v547 = vmul.f32 %v544, %v546
  %v548 = vadd.f32 %v544, %v547
  %vm549 = vweird.f32 %v516
  %vm550 = vweird.f32 %v544
  %vm551 = vmor %vm549, %vm550
  %v552 = vsel %vm551, %v544, %v548
  %v553 = vand.u32 2147483647, %v516
  %vm554 = vcmp.eq.f32.partialorder %v553, 8.507059e+37
  %v555 = vand.u32 %v516, 2147483648
  %v556 = vor.u32 1.1754944e-38, %v555
  %v557 = vsel %vm554, %v556, %v552
  %v558 = vmul.f32 %v502, %v557
  %v559 = vrcp.pop %v519
  %v560 = vmul.f32 %v519, %v559
  %v561 = vsub.f32 1.0, %v560
  %v562 = vmul.f32 %v559, %v561
  %v563 = vadd.f32 %v559, %v562
  %vm564 = vweird.f32 %v519
  %vm565 = vweird.f32 %v559
  %vm566 = vmor %vm564, %vm565
  %v567 = vsel %vm566, %v559, %v563
  %v568 = vand.u32 2147483647, %v519
  %vm569 = vcmp.eq.f32.partialorder %v568, 8.507059e+37
  %v570 = vand.u32 %v519, 2147483648
  %v571 = vor.u32 1.1754944e-38, %v570
  %v572 = vsel %vm569, %v571, %v567
  %v573 = vmul.f32 %v504, %v572
  %v574 = vrcp.pop %v522
  %v575 = vmul.f32 %v522, %v574
  %v576 = vsub.f32 1.0, %v575
  %v577 = vmul.f32 %v574, %v576
  %v578 = vadd.f32 %v574, %v577
  %vm579 = vweird.f32 %v522
  %vm580 = vweird.f32 %v574
  %vm581 = vmor %vm579, %vm580
  %v582 = vsel %vm581, %v574, %v578
  %v583 = vand.u32 2147483647, %v522
  %vm584 = vcmp.eq.f32.partialorder %v583, 8.507059e+37
  %v585 = vand.u32 %v522, 2147483648
  %v586 = vor.u32 1.1754944e-38, %v585
  %v587 = vsel %vm584, %v586, %v582
  %v588 = vmul.f32 %v506, %v587
  %v589 = vrcp.pop %v525
  %v590 = vmul.f32 %v525, %v589
  %v591 = vsub.f32 1.0, %v590
  %v592 = vmul.f32 %v589, %v591
  %v593 = vadd.f32 %v589, %v592
  %vm594 = vweird.f32 %v525
  %vm595 = vweird.f32 %v589
  %vm596 = vmor %vm594, %vm595
  %v597 = vsel %vm596, %v589, %v593
  %v598 = vand.u32 2147483647, %v525
  %vm599 = vcmp.eq.f32.partialorder %v598, 8.507059e+37
  %v600 = vand.u32 %v525, 2147483648
  %v601 = vor.u32 1.1754944e-38, %v600
  %v602 = vsel %vm599, %v601, %v597
  %v603 = vmul.f32 %v508, %v602
  %v604 = vrcp.pop %v528
  %v605 = vmul.f32 %v528, %v604
  %v606 = vsub.f32 1.0, %v605
  %v607 = vmul.f32 %v604, %v606
  %v608 = vadd.f32 %v604, %v607
  %vm609 = vweird.f32 %v528
  %vm610 = vweird.f32 %v604
  %vm611 = vmor %vm609, %vm610
  %v612 = vsel %vm611, %v604, %v608
  %v613 = vand.u32 2147483647, %v528
  %vm614 = vcmp.eq.f32.partialorder %v613, 8.507059e+37
  %v615 = vand.u32 %v528, 2147483648
  %v616 = vor.u32 1.1754944e-38, %v615
  %v617 = vsel %vm614, %v616, %v612
  %v618 = vmul.f32 %v510, %v617
  %619 = vrot.lane.b32.xlu0 %v356, 64
  %v620 = vpop.permute.xlu0 %619
  %621 = vrot.lane.b32.xlu0 %v359, 64
  %v622 = vpop.permute.xlu0 %621
  %623 = vrot.lane.b32.xlu0 %v362, 64
  %v624 = vpop.permute.xlu0 %623
  %v629 = vsel %vm474, %v543, 0
  %v632 = vsel %vm474, %v558, 0
  %v635 = vsel %vm474, %v573, 0
  %637 = vmatpush.msra.mxu0 0.0
  %638 = vmatpush.msra.mxu0 0.0
  %639 = vmatpush.msra.mxu0 0.0
  %640 = vmatpush.msra.mxu0 0.0
  %641 = vmatpush.msra.mxu0 0.0
  %642 = vmatpush.msra.mxu0 0.0
  %643 = vmatpush.msra.mxu0 0.0
  %644 = vmatpush.msra.mxu0 0.0
  %645 = vmatpush.msra.mxu0 0.0
  %646 = vmatpush.msra.mxu0 0.0
  %647 = vmatpush.msra.mxu0 0.0
  %648 = vmatpush.msra.mxu0 0.0
  %649 = vmatpush.msra.mxu0 0.0
  %650 = vmatpush.msra.mxu0 %v624
  %651 = vmatpush.msra.mxu0 %v622
  %652 = vmatpush.msra.mxu0 %v620
  %653 = vmatmul.f32.gmra.mxu0 %v629
  %v654 = vpop.f32.mrf.mxu0
  %v655 = vadd.f32 0.0, %v654
  %656 = vmatmul.f32.gmra.mxu0 %v632
  %v657 = vpop.f32.mrf.mxu0
  %v658 = vadd.f32 0.0, %v657
  %659 = vmatmul.f32.gmra.mxu0 %v635
  %v660 = vpop.f32.mrf.mxu0
  %v661 = vadd.f32 0.0, %v660
  %662 = vdwg.mxu0
  %663 = vrot.lane.b32.xlu0 %v365, 64
  %v664 = vpop.permute.xlu0 %663
  %665 = vrot.lane.b32.xlu0 %v368, 64
  %v666 = vpop.permute.xlu0 %665
  %667 = vrot.lane.b32.xlu0 %v371, 64
  %v668 = vpop.permute.xlu0 %667
  %v673 = vsel %vm474, %v588, 0
  %v676 = vsel %vm474, %v603, 0
  %v679 = vsel %vm474, %v618, 0
  %681 = vmatpush.msra.mxu0 0.0
  %682 = vmatpush.msra.mxu0 0.0
  %683 = vmatpush.msra.mxu0 0.0
  %684 = vmatpush.msra.mxu0 0.0
  %685 = vmatpush.msra.mxu0 0.0
  %686 = vmatpush.msra.mxu0 0.0
  %687 = vmatpush.msra.mxu0 0.0
  %688 = vmatpush.msra.mxu0 0.0
  %689 = vmatpush.msra.mxu0 0.0
  %690 = vmatpush.msra.mxu0 0.0
  %691 = vmatpush.msra.mxu0 0.0
  %692 = vmatpush.msra.mxu0 0.0
  %693 = vmatpush.msra.mxu0 0.0
  %694 = vmatpush.msra.mxu0 %v668
  %695 = vmatpush.msra.mxu0 %v666
  %696 = vmatpush.msra.mxu0 %v664
  %697 = vmatmul.f32.gmra.mxu0 %v673
  %v698 = vpop.f32.mrf.mxu0
  %v699 = vadd.f32 0.0, %v698
  %700 = vmatmul.f32.gmra.mxu0 %v676
  %v701 = vpop.f32.mrf.mxu0
  %v702 = vadd.f32 0.0, %v701
  %703 = vmatmul.f32.gmra.mxu0 %v679
  %v704 = vpop.f32.mrf.mxu0
  %v705 = vadd.f32 0.0, %v704
  %706 = vdwg.mxu0
  %707 = vrot.lane.b32.xlu0 %v356, 120
  %v708 = vpop.permute.xlu0 %707
  %709 = vrot.lane.b32.xlu0 %v359, 120
  %v710 = vpop.permute.xlu0 %709
  %711 = vrot.lane.b32.xlu0 %v362, 120
  %v712 = vpop.permute.xlu0 %711
  %713 = vrot.lane.b32.xlu0 %v356, 88
  %v714 = vpop.permute.xlu0 %713
  %715 = vrot.lane.b32.xlu0 %v359, 88
  %v716 = vpop.permute.xlu0 %715
  %717 = vrot.lane.b32.xlu0 %v362, 88
  %v718 = vpop.permute.xlu0 %717
  %v719 = vsel %vm382, %v708, 0
  %v721 = vsel %vm382, %v710, 0
  %v723 = vsel %vm382, %v712, 0
  %v725 = vsel %vm382, %v714, 0
  %v727 = vsel %vm382, %v716, 0
  %v729 = vsel %vm382, %v718, 0
  %731 = vmatpush.xpose.msra.mxu0 0.0
  %732 = vmatpush.xpose.msra.mxu0 0.0
  %733 = vmatpush.xpose.msra.mxu0 0.0
  %734 = vmatpush.xpose.msra.mxu0 0.0
  %735 = vmatpush.xpose.msra.mxu0 0.0
  %736 = vmatpush.xpose.msra.mxu0 0.0
  %737 = vmatpush.xpose.msra.mxu0 0.0
  %738 = vmatpush.xpose.msra.mxu0 0.0
  %739 = vmatpush.xpose.msra.mxu0 0.0
  %740 = vmatpush.xpose.msra.mxu0 0.0
  %741 = vmatpush.xpose.msra.mxu0 0.0
  %742 = vmatpush.xpose.msra.mxu0 0.0
  %743 = vmatpush.xpose.msra.mxu0 0.0
  %744 = vmatpush.xpose.msra.mxu0 %v729
  %745 = vmatpush.xpose.msra.mxu0 %v727
  %746 = vmatpush.xpose.msra.mxu0 %v725
  %747 = vmatmul.f32.gmra.mxu0 %v719
  %v748 = vpop.f32.mrf.mxu0
  %v749 = vadd.f32 0.0, %v748
  %750 = vmatmul.f32.gmra.mxu0 %v721
  %v751 = vpop.f32.mrf.mxu0
  %v752 = vadd.f32 0.0, %v751
  %753 = vmatmul.f32.gmra.mxu0 %v723
  %v754 = vpop.f32.mrf.mxu0
  %v755 = vadd.f32 0.0, %v754
  %756 = vdwg.mxu0
  %757 = vrot.lane.b32.xlu0 %v365, 120
  %v758 = vpop.permute.xlu0 %757
  %759 = vrot.lane.b32.xlu0 %v368, 120
  %v760 = vpop.permute.xlu0 %759
  %761 = vrot.lane.b32.xlu0 %v371, 120
  %v762 = vpop.permute.xlu0 %761
  %763 = vrot.lane.b32.xlu0 %v365, 88
  %v764 = vpop.permute.xlu0 %763
  %765 = vrot.lane.b32.xlu0 %v368, 88
  %v766 = vpop.permute.xlu0 %765
  %767 = vrot.lane.b32.xlu0 %v371, 88
  %v768 = vpop.permute.xlu0 %767
  %v769 = vsel %vm382, %v758, 0
  %v771 = vsel %vm382, %v760, 0
  %v773 = vsel %vm382, %v762, 0
  %v775 = vsel %vm382, %v764, 0
  %v777 = vsel %vm382, %v766, 0
  %v779 = vsel %vm382, %v768, 0
  %781 = vmatpush.xpose.msra.mxu0 0.0
  %782 = vmatpush.xpose.msra.mxu0 0.0
  %783 = vmatpush.xpose.msra.mxu0 0.0
  %784 = vmatpush.xpose.msra.mxu0 0.0
  %785 = vmatpush.xpose.msra.mxu0 0.0
  %786 = vmatpush.xpose.msra.mxu0 0.0
  %787 = vmatpush.xpose.msra.mxu0 0.0
  %788 = vmatpush.xpose.msra.mxu0 0.0
  %789 = vmatpush.xpose.msra.mxu0 0.0
  %790 = vmatpush.xpose.msra.mxu0 0.0
  %791 = vmatpush.xpose.msra.mxu0 0.0
  %792 = vmatpush.xpose.msra.mxu0 0.0
  %793 = vmatpush.xpose.msra.mxu0 0.0
  %794 = vmatpush.xpose.msra.mxu0 %v779
  %795 = vmatpush.xpose.msra.mxu0 %v777
  %796 = vmatpush.xpose.msra.mxu0 %v775
  %797 = vmatmul.f32.gmra.mxu0 %v769
  %v798 = vpop.f32.mrf.mxu0
  %v799 = vadd.f32 0.0, %v798
  %800 = vmatmul.f32.gmra.mxu0 %v771
  %v801 = vpop.f32.mrf.mxu0
  %v802 = vadd.f32 0.0, %v801
  %803 = vmatmul.f32.gmra.mxu0 %v773
  %v804 = vpop.f32.mrf.mxu0
  %v805 = vadd.f32 0.0, %v804
  %806 = vdwg.mxu0
  %v807 = vsel %vm151, %v749, -1e+30
  %v808 = vsel %vm151, %v752, -1e+30
  %v809 = vsel %vm151, %v755, -1e+30
  %v810 = vsel %vm151, %v799, -1e+30
  %v811 = vsel %vm151, %v802, -1e+30
  %v812 = vsel %vm151, %v805, -1e+30
  %v813 = vsel %vm474, %v807, -inf
  %814 = vmax.xlane.f32.xlu0 %v813
  %v815 = vpop.xlane.xlu0 %814
  %v816 = vsel %vm474, %v808, -inf
  %817 = vmax.xlane.f32.xlu0 %v816
  %v818 = vpop.xlane.xlu0 %817
  %v819 = vsel %vm474, %v809, -inf
  %820 = vmax.xlane.f32.xlu0 %v819
  %v821 = vpop.xlane.xlu0 %820
  %v822 = vsel %vm474, %v810, -inf
  %823 = vmax.xlane.f32.xlu0 %v822
  %v824 = vpop.xlane.xlu0 %823
  %v825 = vsel %vm474, %v811, -inf
  %826 = vmax.xlane.f32.xlu0 %v825
  %v827 = vpop.xlane.xlu0 %826
  %v828 = vsel %vm474, %v812, -inf
  %829 = vmax.xlane.f32.xlu0 %v828
  %v830 = vpop.xlane.xlu0 %829
  %v831 = vsub.f32 %v807, %v815
  %v832 = vsub.f32 %v808, %v818
  %v833 = vsub.f32 %v809, %v821
  %v834 = vsub.f32 %v810, %v824
  %v835 = vsub.f32 %v811, %v827
  %v836 = vsub.f32 %v812, %v830
  %v837 = vmul.f32 %v831, 1.442695
  %v838 = vpow.pop %v837
  %v839 = vmul.f32 %v832, 1.442695
  %v840 = vpow.pop %v839
  %v841 = vmul.f32 %v833, 1.442695
  %v842 = vpow.pop %v841
  %v843 = vmul.f32 %v834, 1.442695
  %v844 = vpow.pop %v843
  %v845 = vmul.f32 %v835, 1.442695
  %v846 = vpow.pop %v845
  %v847 = vmul.f32 %v836, 1.442695
  %v848 = vpow.pop %v847
  %v849 = vsel %vm474, %v838, 0.0
  %850 = vadd.xlane.f32.xlu0 %v849
  %v851 = vpop.xlane.xlu0 %850
  %v852 = vsel %vm474, %v840, 0.0
  %853 = vadd.xlane.f32.xlu0 %v852
  %v854 = vpop.xlane.xlu0 %853
  %v855 = vsel %vm474, %v842, 0.0
  %856 = vadd.xlane.f32.xlu0 %v855
  %v857 = vpop.xlane.xlu0 %856
  %v858 = vsel %vm474, %v844, 0.0
  %859 = vadd.xlane.f32.xlu0 %v858
  %v860 = vpop.xlane.xlu0 %859
  %v861 = vsel %vm474, %v846, 0.0
  %862 = vadd.xlane.f32.xlu0 %v861
  %v863 = vpop.xlane.xlu0 %862
  %v864 = vsel %vm474, %v848, 0.0
  %865 = vadd.xlane.f32.xlu0 %v864
  %v866 = vpop.xlane.xlu0 %865
  %v867 = vrcp.pop %v851
  %v868 = vmul.f32 %v851, %v867
  %v869 = vsub.f32 1.0, %v868
  %v870 = vmul.f32 %v867, %v869
  %v871 = vadd.f32 %v867, %v870
  %vm872 = vweird.f32 %v851
  %vm873 = vweird.f32 %v867
  %vm874 = vmor %vm872, %vm873
  %v875 = vsel %vm874, %v867, %v871
  %v876 = vand.u32 2147483647, %v851
  %vm877 = vcmp.eq.f32.partialorder %v876, 8.507059e+37
  %v878 = vand.u32 %v851, 2147483648
  %v879 = vor.u32 1.1754944e-38, %v878
  %v880 = vsel %vm877, %v879, %v875
  %v881 = vmul.f32 %v838, %v880
  %v882 = vrcp.pop %v854
  %v883 = vmul.f32 %v854, %v882
  %v884 = vsub.f32 1.0, %v883
  %v885 = vmul.f32 %v882, %v884
  %v886 = vadd.f32 %v882, %v885
  %vm887 = vweird.f32 %v854
  %vm888 = vweird.f32 %v882
  %vm889 = vmor %vm887, %vm888
  %v890 = vsel %vm889, %v882, %v886
  %v891 = vand.u32 2147483647, %v854
  %vm892 = vcmp.eq.f32.partialorder %v891, 8.507059e+37
  %v893 = vand.u32 %v854, 2147483648
  %v894 = vor.u32 1.1754944e-38, %v893
  %v895 = vsel %vm892, %v894, %v890
  %v896 = vmul.f32 %v840, %v895
  %v897 = vrcp.pop %v857
  %v898 = vmul.f32 %v857, %v897
  %v899 = vsub.f32 1.0, %v898
  %v900 = vmul.f32 %v897, %v899
  %v901 = vadd.f32 %v897, %v900
  %vm902 = vweird.f32 %v857
  %vm903 = vweird.f32 %v897
  %vm904 = vmor %vm902, %vm903
  %v905 = vsel %vm904, %v897, %v901
  %v906 = vand.u32 2147483647, %v857
  %vm907 = vcmp.eq.f32.partialorder %v906, 8.507059e+37
  %v908 = vand.u32 %v857, 2147483648
  %v909 = vor.u32 1.1754944e-38, %v908
  %v910 = vsel %vm907, %v909, %v905
  %v911 = vmul.f32 %v842, %v910
  %v912 = vrcp.pop %v860
  %v913 = vmul.f32 %v860, %v912
  %v914 = vsub.f32 1.0, %v913
  %v915 = vmul.f32 %v912, %v914
  %v916 = vadd.f32 %v912, %v915
  %vm917 = vweird.f32 %v860
  %vm918 = vweird.f32 %v912
  %vm919 = vmor %vm917, %vm918
  %v920 = vsel %vm919, %v912, %v916
  %v921 = vand.u32 2147483647, %v860
  %vm922 = vcmp.eq.f32.partialorder %v921, 8.507059e+37
  %v923 = vand.u32 %v860, 2147483648
  %v924 = vor.u32 1.1754944e-38, %v923
  %v925 = vsel %vm922, %v924, %v920
  %v926 = vmul.f32 %v844, %v925
  %v927 = vrcp.pop %v863
  %v928 = vmul.f32 %v863, %v927
  %v929 = vsub.f32 1.0, %v928
  %v930 = vmul.f32 %v927, %v929
  %v931 = vadd.f32 %v927, %v930
  %vm932 = vweird.f32 %v863
  %vm933 = vweird.f32 %v927
  %vm934 = vmor %vm932, %vm933
  %v935 = vsel %vm934, %v927, %v931
  %v936 = vand.u32 2147483647, %v863
  %vm937 = vcmp.eq.f32.partialorder %v936, 8.507059e+37
  %v938 = vand.u32 %v863, 2147483648
  %v939 = vor.u32 1.1754944e-38, %v938
  %v940 = vsel %vm937, %v939, %v935
  %v941 = vmul.f32 %v846, %v940
  %v942 = vrcp.pop %v866
  %v943 = vmul.f32 %v866, %v942
  %v944 = vsub.f32 1.0, %v943
  %v945 = vmul.f32 %v942, %v944
  %v946 = vadd.f32 %v942, %v945
  %vm947 = vweird.f32 %v866
  %vm948 = vweird.f32 %v942
  %vm949 = vmor %vm947, %vm948
  %v950 = vsel %vm949, %v942, %v946
  %v951 = vand.u32 2147483647, %v866
  %vm952 = vcmp.eq.f32.partialorder %v951, 8.507059e+37
  %v953 = vand.u32 %v866, 2147483648
  %v954 = vor.u32 1.1754944e-38, %v953
  %v955 = vsel %vm952, %v954, %v950
  %v956 = vmul.f32 %v848, %v955
  %957 = vrot.lane.b32.xlu0 %v356, 56
  %v958 = vpop.permute.xlu0 %957
  %959 = vrot.lane.b32.xlu0 %v359, 56
  %v960 = vpop.permute.xlu0 %959
  %961 = vrot.lane.b32.xlu0 %v362, 56
  %v962 = vpop.permute.xlu0 %961
  %v967 = vsel %vm474, %v881, 0
  %v970 = vsel %vm474, %v896, 0
  %v973 = vsel %vm474, %v911, 0
  %975 = vmatpush.msra.mxu0 0.0
  %976 = vmatpush.msra.mxu0 0.0
  %977 = vmatpush.msra.mxu0 0.0
  %978 = vmatpush.msra.mxu0 0.0
  %979 = vmatpush.msra.mxu0 0.0
  %980 = vmatpush.msra.mxu0 0.0
  %981 = vmatpush.msra.mxu0 0.0
  %982 = vmatpush.msra.mxu0 0.0
  %983 = vmatpush.msra.mxu0 0.0
  %984 = vmatpush.msra.mxu0 0.0
  %985 = vmatpush.msra.mxu0 0.0
  %986 = vmatpush.msra.mxu0 0.0
  %987 = vmatpush.msra.mxu0 0.0
  %988 = vmatpush.msra.mxu0 %v962
  %989 = vmatpush.msra.mxu0 %v960
  %990 = vmatpush.msra.mxu0 %v958
  %991 = vmatmul.f32.gmra.mxu0 %v967
  %v992 = vpop.f32.mrf.mxu0
  %v993 = vadd.f32 0.0, %v992
  %994 = vmatmul.f32.gmra.mxu0 %v970
  %v995 = vpop.f32.mrf.mxu0
  %v996 = vadd.f32 0.0, %v995
  %997 = vmatmul.f32.gmra.mxu0 %v973
  %v998 = vpop.f32.mrf.mxu0
  %v999 = vadd.f32 0.0, %v998
  %1000 = vdwg.mxu0
  %1001 = vrot.lane.b32.xlu0 %v365, 56
  %v1002 = vpop.permute.xlu0 %1001
  %1003 = vrot.lane.b32.xlu0 %v368, 56
  %v1004 = vpop.permute.xlu0 %1003
  %1005 = vrot.lane.b32.xlu0 %v371, 56
  %v1006 = vpop.permute.xlu0 %1005
  %v1011 = vsel %vm474, %v926, 0
  %v1014 = vsel %vm474, %v941, 0
  %v1017 = vsel %vm474, %v956, 0
  %1019 = vmatpush.msra.mxu0 0.0
  %1020 = vmatpush.msra.mxu0 0.0
  %1021 = vmatpush.msra.mxu0 0.0
  %1022 = vmatpush.msra.mxu0 0.0
  %1023 = vmatpush.msra.mxu0 0.0
  %1024 = vmatpush.msra.mxu0 0.0
  %1025 = vmatpush.msra.mxu0 0.0
  %1026 = vmatpush.msra.mxu0 0.0
  %1027 = vmatpush.msra.mxu0 0.0
  %1028 = vmatpush.msra.mxu0 0.0
  %1029 = vmatpush.msra.mxu0 0.0
  %1030 = vmatpush.msra.mxu0 0.0
  %1031 = vmatpush.msra.mxu0 0.0
  %1032 = vmatpush.msra.mxu0 %v1006
  %1033 = vmatpush.msra.mxu0 %v1004
  %1034 = vmatpush.msra.mxu0 %v1002
  %1035 = vmatmul.f32.gmra.mxu0 %v1011
  %v1036 = vpop.f32.mrf.mxu0
  %v1037 = vadd.f32 0.0, %v1036
  %1038 = vmatmul.f32.gmra.mxu0 %v1014
  %v1039 = vpop.f32.mrf.mxu0
  %v1040 = vadd.f32 0.0, %v1039
  %1041 = vmatmul.f32.gmra.mxu0 %v1017
  %v1042 = vpop.f32.mrf.mxu0
  %v1043 = vadd.f32 0.0, %v1042
  %1044 = vdwg.mxu0
  %1045 = vrot.lane.b32.xlu0 %v356, 112
  %v1046 = vpop.permute.xlu0 %1045
  %1047 = vrot.lane.b32.xlu0 %v359, 112
  %v1048 = vpop.permute.xlu0 %1047
  %1049 = vrot.lane.b32.xlu0 %v362, 112
  %v1050 = vpop.permute.xlu0 %1049
  %1051 = vrot.lane.b32.xlu0 %v356, 80
  %v1052 = vpop.permute.xlu0 %1051
  %1053 = vrot.lane.b32.xlu0 %v359, 80
  %v1054 = vpop.permute.xlu0 %1053
  %1055 = vrot.lane.b32.xlu0 %v362, 80
  %v1056 = vpop.permute.xlu0 %1055
  %v1057 = vsel %vm382, %v1046, 0
  %v1059 = vsel %vm382, %v1048, 0
  %v1061 = vsel %vm382, %v1050, 0
  %v1063 = vsel %vm382, %v1052, 0
  %v1065 = vsel %vm382, %v1054, 0
  %v1067 = vsel %vm382, %v1056, 0
  %1069 = vmatpush.xpose.msra.mxu0 0.0
  %1070 = vmatpush.xpose.msra.mxu0 0.0
  %1071 = vmatpush.xpose.msra.mxu0 0.0
  %1072 = vmatpush.xpose.msra.mxu0 0.0
  %1073 = vmatpush.xpose.msra.mxu0 0.0
  %1074 = vmatpush.xpose.msra.mxu0 0.0
  %1075 = vmatpush.xpose.msra.mxu0 0.0
  %1076 = vmatpush.xpose.msra.mxu0 0.0
  %1077 = vmatpush.xpose.msra.mxu0 0.0
  %1078 = vmatpush.xpose.msra.mxu0 0.0
  %1079 = vmatpush.xpose.msra.mxu0 0.0
  %1080 = vmatpush.xpose.msra.mxu0 0.0
  %1081 = vmatpush.xpose.msra.mxu0 0.0
  %1082 = vmatpush.xpose.msra.mxu0 %v1067
  %1083 = vmatpush.xpose.msra.mxu0 %v1065
  %1084 = vmatpush.xpose.msra.mxu0 %v1063
  %1085 = vmatmul.f32.gmra.mxu0 %v1057
  %v1086 = vpop.f32.mrf.mxu0
  %v1087 = vadd.f32 0.0, %v1086
  %1088 = vmatmul.f32.gmra.mxu0 %v1059
  %v1089 = vpop.f32.mrf.mxu0
  %v1090 = vadd.f32 0.0, %v1089
  %1091 = vmatmul.f32.gmra.mxu0 %v1061
  %v1092 = vpop.f32.mrf.mxu0
  %v1093 = vadd.f32 0.0, %v1092
  %1094 = vdwg.mxu0
  %1095 = vrot.lane.b32.xlu0 %v365, 112
  %v1096 = vpop.permute.xlu0 %1095
  %1097 = vrot.lane.b32.xlu0 %v368, 112
  %v1098 = vpop.permute.xlu0 %1097
  %1099 = vrot.lane.b32.xlu0 %v371, 112
  %v1100 = vpop.permute.xlu0 %1099
  %1101 = vrot.lane.b32.xlu0 %v365, 80
  %v1102 = vpop.permute.xlu0 %1101
  %1103 = vrot.lane.b32.xlu0 %v368, 80
  %v1104 = vpop.permute.xlu0 %1103
  %1105 = vrot.lane.b32.xlu0 %v371, 80
  %v1106 = vpop.permute.xlu0 %1105
  %v1107 = vsel %vm382, %v1096, 0
  %v1109 = vsel %vm382, %v1098, 0
  %v1111 = vsel %vm382, %v1100, 0
  %v1113 = vsel %vm382, %v1102, 0
  %v1115 = vsel %vm382, %v1104, 0
  %v1117 = vsel %vm382, %v1106, 0
  %1119 = vmatpush.xpose.msra.mxu0 0.0
  %1120 = vmatpush.xpose.msra.mxu0 0.0
  %1121 = vmatpush.xpose.msra.mxu0 0.0
  %1122 = vmatpush.xpose.msra.mxu0 0.0
  %1123 = vmatpush.xpose.msra.mxu0 0.0
  %1124 = vmatpush.xpose.msra.mxu0 0.0
  %1125 = vmatpush.xpose.msra.mxu0 0.0
  %1126 = vmatpush.xpose.msra.mxu0 0.0
  %1127 = vmatpush.xpose.msra.mxu0 0.0
  %1128 = vmatpush.xpose.msra.mxu0 0.0
  %1129 = vmatpush.xpose.msra.mxu0 0.0
  %1130 = vmatpush.xpose.msra.mxu0 0.0
  %1131 = vmatpush.xpose.msra.mxu0 0.0
  %1132 = vmatpush.xpose.msra.mxu0 %v1117
  %1133 = vmatpush.xpose.msra.mxu0 %v1115
  %1134 = vmatpush.xpose.msra.mxu0 %v1113
  %1135 = vmatmul.f32.gmra.mxu0 %v1107
  %v1136 = vpop.f32.mrf.mxu0
  %v1137 = vadd.f32 0.0, %v1136
  %1138 = vmatmul.f32.gmra.mxu0 %v1109
  %v1139 = vpop.f32.mrf.mxu0
  %v1140 = vadd.f32 0.0, %v1139
  %1141 = vmatmul.f32.gmra.mxu0 %v1111
  %v1142 = vpop.f32.mrf.mxu0
  %v1143 = vadd.f32 0.0, %v1142
  %1144 = vdwg.mxu0
  %v1145 = vsel %vm151, %v1087, -1e+30
  %v1146 = vsel %vm151, %v1090, -1e+30
  %v1147 = vsel %vm151, %v1093, -1e+30
  %v1148 = vsel %vm151, %v1137, -1e+30
  %v1149 = vsel %vm151, %v1140, -1e+30
  %v1150 = vsel %vm151, %v1143, -1e+30
  %v1151 = vsel %vm474, %v1145, -inf
  %1152 = vmax.xlane.f32.xlu0 %v1151
  %v1153 = vpop.xlane.xlu0 %1152
  %v1154 = vsel %vm474, %v1146, -inf
  %1155 = vmax.xlane.f32.xlu0 %v1154
  %v1156 = vpop.xlane.xlu0 %1155
  %v1157 = vsel %vm474, %v1147, -inf
  %1158 = vmax.xlane.f32.xlu0 %v1157
  %v1159 = vpop.xlane.xlu0 %1158
  %v1160 = vsel %vm474, %v1148, -inf
  %1161 = vmax.xlane.f32.xlu0 %v1160
  %v1162 = vpop.xlane.xlu0 %1161
  %v1163 = vsel %vm474, %v1149, -inf
  %1164 = vmax.xlane.f32.xlu0 %v1163
  %v1165 = vpop.xlane.xlu0 %1164
  %v1166 = vsel %vm474, %v1150, -inf
  %1167 = vmax.xlane.f32.xlu0 %v1166
  %v1168 = vpop.xlane.xlu0 %1167
  %v1169 = vsub.f32 %v1145, %v1153
  %v1170 = vsub.f32 %v1146, %v1156
  %v1171 = vsub.f32 %v1147, %v1159
  %v1172 = vsub.f32 %v1148, %v1162
  %v1173 = vsub.f32 %v1149, %v1165
  %v1174 = vsub.f32 %v1150, %v1168
  %v1175 = vmul.f32 %v1169, 1.442695
  %v1176 = vpow.pop %v1175
  %v1177 = vmul.f32 %v1170, 1.442695
  %v1178 = vpow.pop %v1177
  %v1179 = vmul.f32 %v1171, 1.442695
  %v1180 = vpow.pop %v1179
  %v1181 = vmul.f32 %v1172, 1.442695
  %v1182 = vpow.pop %v1181
  %v1183 = vmul.f32 %v1173, 1.442695
  %v1184 = vpow.pop %v1183
  %v1185 = vmul.f32 %v1174, 1.442695
  %v1186 = vpow.pop %v1185
  %v1187 = vsel %vm474, %v1176, 0.0
  %1188 = vadd.xlane.f32.xlu0 %v1187
  %v1189 = vpop.xlane.xlu0 %1188
  %v1190 = vsel %vm474, %v1178, 0.0
  %1191 = vadd.xlane.f32.xlu0 %v1190
  %v1192 = vpop.xlane.xlu0 %1191
  %v1193 = vsel %vm474, %v1180, 0.0
  %1194 = vadd.xlane.f32.xlu0 %v1193
  %v1195 = vpop.xlane.xlu0 %1194
  %v1196 = vsel %vm474, %v1182, 0.0
  %1197 = vadd.xlane.f32.xlu0 %v1196
  %v1198 = vpop.xlane.xlu0 %1197
  %v1199 = vsel %vm474, %v1184, 0.0
  %1200 = vadd.xlane.f32.xlu0 %v1199
  %v1201 = vpop.xlane.xlu0 %1200
  %v1202 = vsel %vm474, %v1186, 0.0
  %1203 = vadd.xlane.f32.xlu0 %v1202
  %v1204 = vpop.xlane.xlu0 %1203
  %v1205 = vrcp.pop %v1189
  %v1206 = vmul.f32 %v1189, %v1205
  %v1207 = vsub.f32 1.0, %v1206
  %v1208 = vmul.f32 %v1205, %v1207
  %v1209 = vadd.f32 %v1205, %v1208
  %vm1210 = vweird.f32 %v1189
  %vm1211 = vweird.f32 %v1205
  %vm1212 = vmor %vm1210, %vm1211
  %v1213 = vsel %vm1212, %v1205, %v1209
  %v1214 = vand.u32 2147483647, %v1189
  %vm1215 = vcmp.eq.f32.partialorder %v1214, 8.507059e+37
  %v1216 = vand.u32 %v1189, 2147483648
  %v1217 = vor.u32 1.1754944e-38, %v1216
  %v1218 = vsel %vm1215, %v1217, %v1213
  %v1219 = vmul.f32 %v1176, %v1218
  %v1220 = vrcp.pop %v1192
  %v1221 = vmul.f32 %v1192, %v1220
  %v1222 = vsub.f32 1.0, %v1221
  %v1223 = vmul.f32 %v1220, %v1222
  %v1224 = vadd.f32 %v1220, %v1223
  %vm1225 = vweird.f32 %v1192
  %vm1226 = vweird.f32 %v1220
  %vm1227 = vmor %vm1225, %vm1226
  %v1228 = vsel %vm1227, %v1220, %v1224
  %v1229 = vand.u32 2147483647, %v1192
  %vm1230 = vcmp.eq.f32.partialorder %v1229, 8.507059e+37
  %v1231 = vand.u32 %v1192, 2147483648
  %v1232 = vor.u32 1.1754944e-38, %v1231
  %v1233 = vsel %vm1230, %v1232, %v1228
  %v1234 = vmul.f32 %v1178, %v1233
  %v1235 = vrcp.pop %v1195
  %v1236 = vmul.f32 %v1195, %v1235
  %v1237 = vsub.f32 1.0, %v1236
  %v1238 = vmul.f32 %v1235, %v1237
  %v1239 = vadd.f32 %v1235, %v1238
  %vm1240 = vweird.f32 %v1195
  %vm1241 = vweird.f32 %v1235
  %vm1242 = vmor %vm1240, %vm1241
  %v1243 = vsel %vm1242, %v1235, %v1239
  %v1244 = vand.u32 2147483647, %v1195
  %vm1245 = vcmp.eq.f32.partialorder %v1244, 8.507059e+37
  %v1246 = vand.u32 %v1195, 2147483648
  %v1247 = vor.u32 1.1754944e-38, %v1246
  %v1248 = vsel %vm1245, %v1247, %v1243
  %v1249 = vmul.f32 %v1180, %v1248
  %v1250 = vrcp.pop %v1198
  %v1251 = vmul.f32 %v1198, %v1250
  %v1252 = vsub.f32 1.0, %v1251
  %v1253 = vmul.f32 %v1250, %v1252
  %v1254 = vadd.f32 %v1250, %v1253
  %vm1255 = vweird.f32 %v1198
  %vm1256 = vweird.f32 %v1250
  %vm1257 = vmor %vm1255, %vm1256
  %v1258 = vsel %vm1257, %v1250, %v1254
  %v1259 = vand.u32 2147483647, %v1198
  %vm1260 = vcmp.eq.f32.partialorder %v1259, 8.507059e+37
  %v1261 = vand.u32 %v1198, 2147483648
  %v1262 = vor.u32 1.1754944e-38, %v1261
  %v1263 = vsel %vm1260, %v1262, %v1258
  %v1264 = vmul.f32 %v1182, %v1263
  %v1265 = vrcp.pop %v1201
  %v1266 = vmul.f32 %v1201, %v1265
  %v1267 = vsub.f32 1.0, %v1266
  %v1268 = vmul.f32 %v1265, %v1267
  %v1269 = vadd.f32 %v1265, %v1268
  %vm1270 = vweird.f32 %v1201
  %vm1271 = vweird.f32 %v1265
  %vm1272 = vmor %vm1270, %vm1271
  %v1273 = vsel %vm1272, %v1265, %v1269
  %v1274 = vand.u32 2147483647, %v1201
  %vm1275 = vcmp.eq.f32.partialorder %v1274, 8.507059e+37
  %v1276 = vand.u32 %v1201, 2147483648
  %v1277 = vor.u32 1.1754944e-38, %v1276
  %v1278 = vsel %vm1275, %v1277, %v1273
  %v1279 = vmul.f32 %v1184, %v1278
  %v1280 = vrcp.pop %v1204
  %v1281 = vmul.f32 %v1204, %v1280
  %v1282 = vsub.f32 1.0, %v1281
  %v1283 = vmul.f32 %v1280, %v1282
  %v1284 = vadd.f32 %v1280, %v1283
  %vm1285 = vweird.f32 %v1204
  %vm1286 = vweird.f32 %v1280
  %vm1287 = vmor %vm1285, %vm1286
  %v1288 = vsel %vm1287, %v1280, %v1284
  %v1289 = vand.u32 2147483647, %v1204
  %vm1290 = vcmp.eq.f32.partialorder %v1289, 8.507059e+37
  %v1291 = vand.u32 %v1204, 2147483648
  %v1292 = vor.u32 1.1754944e-38, %v1291
  %v1293 = vsel %vm1290, %v1292, %v1288
  %v1294 = vmul.f32 %v1186, %v1293
  %1295 = vrot.lane.b32.xlu0 %v356, 48
  %v1296 = vpop.permute.xlu0 %1295
  %1297 = vrot.lane.b32.xlu0 %v359, 48
  %v1298 = vpop.permute.xlu0 %1297
  %1299 = vrot.lane.b32.xlu0 %v362, 48
  %v1300 = vpop.permute.xlu0 %1299
  %v1305 = vsel %vm474, %v1219, 0
  %v1308 = vsel %vm474, %v1234, 0
  %v1311 = vsel %vm474, %v1249, 0
  %1313 = vmatpush.msra.mxu0 0.0
  %1314 = vmatpush.msra.mxu0 0.0
  %1315 = vmatpush.msra.mxu0 0.0
  %1316 = vmatpush.msra.mxu0 0.0
  %1317 = vmatpush.msra.mxu0 0.0
  %1318 = vmatpush.msra.mxu0 0.0
  %1319 = vmatpush.msra.mxu0 0.0
  %1320 = vmatpush.msra.mxu0 0.0
  %1321 = vmatpush.msra.mxu0 0.0
  %1322 = vmatpush.msra.mxu0 0.0
  %1323 = vmatpush.msra.mxu0 0.0
  %1324 = vmatpush.msra.mxu0 0.0
  %1325 = vmatpush.msra.mxu0 0.0
  %1326 = vmatpush.msra.mxu0 %v1300
  %1327 = vmatpush.msra.mxu0 %v1298
  %1328 = vmatpush.msra.mxu0 %v1296
  %1329 = vmatmul.f32.gmra.mxu0 %v1305
  %v1330 = vpop.f32.mrf.mxu0
  %v1331 = vadd.f32 0.0, %v1330
  %1332 = vmatmul.f32.gmra.mxu0 %v1308
  %v1333 = vpop.f32.mrf.mxu0
  %v1334 = vadd.f32 0.0, %v1333
  %1335 = vmatmul.f32.gmra.mxu0 %v1311
  %v1336 = vpop.f32.mrf.mxu0
  %v1337 = vadd.f32 0.0, %v1336
  %1338 = vdwg.mxu0
  %1339 = vrot.lane.b32.xlu0 %v365, 48
  %v1340 = vpop.permute.xlu0 %1339
  %1341 = vrot.lane.b32.xlu0 %v368, 48
  %v1342 = vpop.permute.xlu0 %1341
  %1343 = vrot.lane.b32.xlu0 %v371, 48
  %v1344 = vpop.permute.xlu0 %1343
  %v1349 = vsel %vm474, %v1264, 0
  %v1352 = vsel %vm474, %v1279, 0
  %v1355 = vsel %vm474, %v1294, 0
  %1357 = vmatpush.msra.mxu0 0.0
  %1358 = vmatpush.msra.mxu0 0.0
  %1359 = vmatpush.msra.mxu0 0.0
  %1360 = vmatpush.msra.mxu0 0.0
  %1361 = vmatpush.msra.mxu0 0.0
  %1362 = vmatpush.msra.mxu0 0.0
  %1363 = vmatpush.msra.mxu0 0.0
  %1364 = vmatpush.msra.mxu0 0.0
  %1365 = vmatpush.msra.mxu0 0.0
  %1366 = vmatpush.msra.mxu0 0.0
  %1367 = vmatpush.msra.mxu0 0.0
  %1368 = vmatpush.msra.mxu0 0.0
  %1369 = vmatpush.msra.mxu0 0.0
  %1370 = vmatpush.msra.mxu0 %v1344
  %1371 = vmatpush.msra.mxu0 %v1342
  %1372 = vmatpush.msra.mxu0 %v1340
  %1373 = vmatmul.f32.gmra.mxu0 %v1349
  %v1374 = vpop.f32.mrf.mxu0
  %v1375 = vadd.f32 0.0, %v1374
  %1376 = vmatmul.f32.gmra.mxu0 %v1352
  %v1377 = vpop.f32.mrf.mxu0
  %v1378 = vadd.f32 0.0, %v1377
  %1379 = vmatmul.f32.gmra.mxu0 %v1355
  %v1380 = vpop.f32.mrf.mxu0
  %v1381 = vadd.f32 0.0, %v1380
  %1382 = vdwg.mxu0
  %1383 = vrot.lane.b32.xlu0 %v356, 104
  %v1384 = vpop.permute.xlu0 %1383
  %1385 = vrot.lane.b32.xlu0 %v359, 104
  %v1386 = vpop.permute.xlu0 %1385
  %1387 = vrot.lane.b32.xlu0 %v362, 104
  %v1388 = vpop.permute.xlu0 %1387
  %1389 = vrot.lane.b32.xlu0 %v356, 72
  %v1390 = vpop.permute.xlu0 %1389
  %1391 = vrot.lane.b32.xlu0 %v359, 72
  %v1392 = vpop.permute.xlu0 %1391
  %1393 = vrot.lane.b32.xlu0 %v362, 72
  %v1394 = vpop.permute.xlu0 %1393
  %v1395 = vsel %vm382, %v1384, 0
  %v1397 = vsel %vm382, %v1386, 0
  %v1399 = vsel %vm382, %v1388, 0
  %v1401 = vsel %vm382, %v1390, 0
  %v1403 = vsel %vm382, %v1392, 0
  %v1405 = vsel %vm382, %v1394, 0
  %1407 = vmatpush.xpose.msra.mxu0 0.0
  %1408 = vmatpush.xpose.msra.mxu0 0.0
  %1409 = vmatpush.xpose.msra.mxu0 0.0
  %1410 = vmatpush.xpose.msra.mxu0 0.0
  %1411 = vmatpush.xpose.msra.mxu0 0.0
  %1412 = vmatpush.xpose.msra.mxu0 0.0
  %1413 = vmatpush.xpose.msra.mxu0 0.0
  %1414 = vmatpush.xpose.msra.mxu0 0.0
  %1415 = vmatpush.xpose.msra.mxu0 0.0
  %1416 = vmatpush.xpose.msra.mxu0 0.0
  %1417 = vmatpush.xpose.msra.mxu0 0.0
  %1418 = vmatpush.xpose.msra.mxu0 0.0
  %1419 = vmatpush.xpose.msra.mxu0 0.0
  %1420 = vmatpush.xpose.msra.mxu0 %v1405
  %1421 = vmatpush.xpose.msra.mxu0 %v1403
  %1422 = vmatpush.xpose.msra.mxu0 %v1401
  %1423 = vmatmul.f32.gmra.mxu0 %v1395
  %v1424 = vpop.f32.mrf.mxu0
  %v1425 = vadd.f32 0.0, %v1424
  %1426 = vmatmul.f32.gmra.mxu0 %v1397
  %v1427 = vpop.f32.mrf.mxu0
  %v1428 = vadd.f32 0.0, %v1427
  %1429 = vmatmul.f32.gmra.mxu0 %v1399
  %v1430 = vpop.f32.mrf.mxu0
  %v1431 = vadd.f32 0.0, %v1430
  %1432 = vdwg.mxu0
  %1433 = vrot.lane.b32.xlu0 %v365, 104
  %v1434 = vpop.permute.xlu0 %1433
  %1435 = vrot.lane.b32.xlu0 %v368, 104
  %v1436 = vpop.permute.xlu0 %1435
  %1437 = vrot.lane.b32.xlu0 %v371, 104
  %v1438 = vpop.permute.xlu0 %1437
  %1439 = vrot.lane.b32.xlu0 %v365, 72
  %v1440 = vpop.permute.xlu0 %1439
  %1441 = vrot.lane.b32.xlu0 %v368, 72
  %v1442 = vpop.permute.xlu0 %1441
  %1443 = vrot.lane.b32.xlu0 %v371, 72
  %v1444 = vpop.permute.xlu0 %1443
  %v1445 = vsel %vm382, %v1434, 0
  %v1447 = vsel %vm382, %v1436, 0
  %v1449 = vsel %vm382, %v1438, 0
  %v1451 = vsel %vm382, %v1440, 0
  %v1453 = vsel %vm382, %v1442, 0
  %v1455 = vsel %vm382, %v1444, 0
  %1457 = vmatpush.xpose.msra.mxu0 0.0
  %1458 = vmatpush.xpose.msra.mxu0 0.0
  %1459 = vmatpush.xpose.msra.mxu0 0.0
  %1460 = vmatpush.xpose.msra.mxu0 0.0
  %1461 = vmatpush.xpose.msra.mxu0 0.0
  %1462 = vmatpush.xpose.msra.mxu0 0.0
  %1463 = vmatpush.xpose.msra.mxu0 0.0
  %1464 = vmatpush.xpose.msra.mxu0 0.0
  %1465 = vmatpush.xpose.msra.mxu0 0.0
  %1466 = vmatpush.xpose.msra.mxu0 0.0
  %1467 = vmatpush.xpose.msra.mxu0 0.0
  %1468 = vmatpush.xpose.msra.mxu0 0.0
  %1469 = vmatpush.xpose.msra.mxu0 0.0
  %1470 = vmatpush.xpose.msra.mxu0 %v1455
  %1471 = vmatpush.xpose.msra.mxu0 %v1453
  %1472 = vmatpush.xpose.msra.mxu0 %v1451
  %1473 = vmatmul.f32.gmra.mxu0 %v1445
  %v1474 = vpop.f32.mrf.mxu0
  %v1475 = vadd.f32 0.0, %v1474
  %1476 = vmatmul.f32.gmra.mxu0 %v1447
  %v1477 = vpop.f32.mrf.mxu0
  %v1478 = vadd.f32 0.0, %v1477
  %1479 = vmatmul.f32.gmra.mxu0 %v1449
  %v1480 = vpop.f32.mrf.mxu0
  %v1481 = vadd.f32 0.0, %v1480
  %1482 = vdwg.mxu0
  %v1483 = vsel %vm151, %v1425, -1e+30
  %v1484 = vsel %vm151, %v1428, -1e+30
  %v1485 = vsel %vm151, %v1431, -1e+30
  %v1486 = vsel %vm151, %v1475, -1e+30
  %v1487 = vsel %vm151, %v1478, -1e+30
  %v1488 = vsel %vm151, %v1481, -1e+30
  %v1489 = vsel %vm474, %v1483, -inf
  %1490 = vmax.xlane.f32.xlu0 %v1489
  %v1491 = vpop.xlane.xlu0 %1490
  %v1492 = vsel %vm474, %v1484, -inf
  %1493 = vmax.xlane.f32.xlu0 %v1492
  %v1494 = vpop.xlane.xlu0 %1493
  %v1495 = vsel %vm474, %v1485, -inf
  %1496 = vmax.xlane.f32.xlu0 %v1495
  %v1497 = vpop.xlane.xlu0 %1496
  %v1498 = vsel %vm474, %v1486, -inf
  %1499 = vmax.xlane.f32.xlu0 %v1498
  %v1500 = vpop.xlane.xlu0 %1499
  %v1501 = vsel %vm474, %v1487, -inf
  %1502 = vmax.xlane.f32.xlu0 %v1501
  %v1503 = vpop.xlane.xlu0 %1502
  %v1504 = vsel %vm474, %v1488, -inf
  %1505 = vmax.xlane.f32.xlu0 %v1504
  %v1506 = vpop.xlane.xlu0 %1505
  %v1507 = vsub.f32 %v1483, %v1491
  %v1508 = vsub.f32 %v1484, %v1494
  %v1509 = vsub.f32 %v1485, %v1497
  %v1510 = vsub.f32 %v1486, %v1500
  %v1511 = vsub.f32 %v1487, %v1503
  %v1512 = vsub.f32 %v1488, %v1506
  %v1513 = vmul.f32 %v1507, 1.442695
  %v1514 = vpow.pop %v1513
  %v1515 = vmul.f32 %v1508, 1.442695
  %v1516 = vpow.pop %v1515
  %v1517 = vmul.f32 %v1509, 1.442695
  %v1518 = vpow.pop %v1517
  %v1519 = vmul.f32 %v1510, 1.442695
  %v1520 = vpow.pop %v1519
  %v1521 = vmul.f32 %v1511, 1.442695
  %v1522 = vpow.pop %v1521
  %v1523 = vmul.f32 %v1512, 1.442695
  %v1524 = vpow.pop %v1523
  %v1525 = vsel %vm474, %v1514, 0.0
  %1526 = vadd.xlane.f32.xlu0 %v1525
  %v1527 = vpop.xlane.xlu0 %1526
  %v1528 = vsel %vm474, %v1516, 0.0
  %1529 = vadd.xlane.f32.xlu0 %v1528
  %v1530 = vpop.xlane.xlu0 %1529
  %v1531 = vsel %vm474, %v1518, 0.0
  %1532 = vadd.xlane.f32.xlu0 %v1531
  %v1533 = vpop.xlane.xlu0 %1532
  %v1534 = vsel %vm474, %v1520, 0.0
  %1535 = vadd.xlane.f32.xlu0 %v1534
  %v1536 = vpop.xlane.xlu0 %1535
  %v1537 = vsel %vm474, %v1522, 0.0
  %1538 = vadd.xlane.f32.xlu0 %v1537
  %v1539 = vpop.xlane.xlu0 %1538
  %v1540 = vsel %vm474, %v1524, 0.0
  %1541 = vadd.xlane.f32.xlu0 %v1540
  %v1542 = vpop.xlane.xlu0 %1541
  %v1543 = vrcp.pop %v1527
  %v1544 = vmul.f32 %v1527, %v1543
  %v1545 = vsub.f32 1.0, %v1544
  %v1546 = vmul.f32 %v1543, %v1545
  %v1547 = vadd.f32 %v1543, %v1546
  %vm1548 = vweird.f32 %v1527
  %vm1549 = vweird.f32 %v1543
  %vm1550 = vmor %vm1548, %vm1549
  %v1551 = vsel %vm1550, %v1543, %v1547
  %v1552 = vand.u32 2147483647, %v1527
  %vm1553 = vcmp.eq.f32.partialorder %v1552, 8.507059e+37
  %v1554 = vand.u32 %v1527, 2147483648
  %v1555 = vor.u32 1.1754944e-38, %v1554
  %v1556 = vsel %vm1553, %v1555, %v1551
  %v1557 = vmul.f32 %v1514, %v1556
  %v1558 = vrcp.pop %v1530
  %v1559 = vmul.f32 %v1530, %v1558
  %v1560 = vsub.f32 1.0, %v1559
  %v1561 = vmul.f32 %v1558, %v1560
  %v1562 = vadd.f32 %v1558, %v1561
  %vm1563 = vweird.f32 %v1530
  %vm1564 = vweird.f32 %v1558
  %vm1565 = vmor %vm1563, %vm1564
  %v1566 = vsel %vm1565, %v1558, %v1562
  %v1567 = vand.u32 2147483647, %v1530
  %vm1568 = vcmp.eq.f32.partialorder %v1567, 8.507059e+37
  %v1569 = vand.u32 %v1530, 2147483648
  %v1570 = vor.u32 1.1754944e-38, %v1569
  %v1571 = vsel %vm1568, %v1570, %v1566
  %v1572 = vmul.f32 %v1516, %v1571
  %v1573 = vrcp.pop %v1533
  %v1574 = vmul.f32 %v1533, %v1573
  %v1575 = vsub.f32 1.0, %v1574
  %v1576 = vmul.f32 %v1573, %v1575
  %v1577 = vadd.f32 %v1573, %v1576
  %vm1578 = vweird.f32 %v1533
  %vm1579 = vweird.f32 %v1573
  %vm1580 = vmor %vm1578, %vm1579
  %v1581 = vsel %vm1580, %v1573, %v1577
  %v1582 = vand.u32 2147483647, %v1533
  %vm1583 = vcmp.eq.f32.partialorder %v1582, 8.507059e+37
  %v1584 = vand.u32 %v1533, 2147483648
  %v1585 = vor.u32 1.1754944e-38, %v1584
  %v1586 = vsel %vm1583, %v1585, %v1581
  %v1587 = vmul.f32 %v1518, %v1586
  %v1588 = vrcp.pop %v1536
  %v1589 = vmul.f32 %v1536, %v1588
  %v1590 = vsub.f32 1.0, %v1589
  %v1591 = vmul.f32 %v1588, %v1590
  %v1592 = vadd.f32 %v1588, %v1591
  %vm1593 = vweird.f32 %v1536
  %vm1594 = vweird.f32 %v1588
  %vm1595 = vmor %vm1593, %vm1594
  %v1596 = vsel %vm1595, %v1588, %v1592
  %v1597 = vand.u32 2147483647, %v1536
  %vm1598 = vcmp.eq.f32.partialorder %v1597, 8.507059e+37
  %v1599 = vand.u32 %v1536, 2147483648
  %v1600 = vor.u32 1.1754944e-38, %v1599
  %v1601 = vsel %vm1598, %v1600, %v1596
  %v1602 = vmul.f32 %v1520, %v1601
  %v1603 = vrcp.pop %v1539
  %v1604 = vmul.f32 %v1539, %v1603
  %v1605 = vsub.f32 1.0, %v1604
  %v1606 = vmul.f32 %v1603, %v1605
  %v1607 = vadd.f32 %v1603, %v1606
  %vm1608 = vweird.f32 %v1539
  %vm1609 = vweird.f32 %v1603
  %vm1610 = vmor %vm1608, %vm1609
  %v1611 = vsel %vm1610, %v1603, %v1607
  %v1612 = vand.u32 2147483647, %v1539
  %vm1613 = vcmp.eq.f32.partialorder %v1612, 8.507059e+37
  %v1614 = vand.u32 %v1539, 2147483648
  %v1615 = vor.u32 1.1754944e-38, %v1614
  %v1616 = vsel %vm1613, %v1615, %v1611
  %v1617 = vmul.f32 %v1522, %v1616
  %v1618 = vrcp.pop %v1542
  %v1619 = vmul.f32 %v1542, %v1618
  %v1620 = vsub.f32 1.0, %v1619
  %v1621 = vmul.f32 %v1618, %v1620
  %v1622 = vadd.f32 %v1618, %v1621
  %vm1623 = vweird.f32 %v1542
  %vm1624 = vweird.f32 %v1618
  %vm1625 = vmor %vm1623, %vm1624
  %v1626 = vsel %vm1625, %v1618, %v1622
  %v1627 = vand.u32 2147483647, %v1542
  %vm1628 = vcmp.eq.f32.partialorder %v1627, 8.507059e+37
  %v1629 = vand.u32 %v1542, 2147483648
  %v1630 = vor.u32 1.1754944e-38, %v1629
  %v1631 = vsel %vm1628, %v1630, %v1626
  %v1632 = vmul.f32 %v1524, %v1631
  %1633 = vrot.lane.b32.xlu0 %v356, 40
  %v1634 = vpop.permute.xlu0 %1633
  %1635 = vrot.lane.b32.xlu0 %v359, 40
  %v1636 = vpop.permute.xlu0 %1635
  %1637 = vrot.lane.b32.xlu0 %v362, 40
  %v1638 = vpop.permute.xlu0 %1637
  %v1643 = vsel %vm474, %v1557, 0
  %v1646 = vsel %vm474, %v1572, 0
  %v1649 = vsel %vm474, %v1587, 0
  %1651 = vmatpush.msra.mxu0 0.0
  %1652 = vmatpush.msra.mxu0 0.0
  %1653 = vmatpush.msra.mxu0 0.0
  %1654 = vmatpush.msra.mxu0 0.0
  %1655 = vmatpush.msra.mxu0 0.0
  %1656 = vmatpush.msra.mxu0 0.0
  %1657 = vmatpush.msra.mxu0 0.0
  %1658 = vmatpush.msra.mxu0 0.0
  %1659 = vmatpush.msra.mxu0 0.0
  %1660 = vmatpush.msra.mxu0 0.0
  %1661 = vmatpush.msra.mxu0 0.0
  %1662 = vmatpush.msra.mxu0 0.0
  %1663 = vmatpush.msra.mxu0 0.0
  %1664 = vmatpush.msra.mxu0 %v1638
  %1665 = vmatpush.msra.mxu0 %v1636
  %1666 = vmatpush.msra.mxu0 %v1634
  %1667 = vmatmul.f32.gmra.mxu0 %v1643
  %v1668 = vpop.f32.mrf.mxu0
  %v1669 = vadd.f32 0.0, %v1668
  %1670 = vmatmul.f32.gmra.mxu0 %v1646
  %v1671 = vpop.f32.mrf.mxu0
  %v1672 = vadd.f32 0.0, %v1671
  %1673 = vmatmul.f32.gmra.mxu0 %v1649
  %v1674 = vpop.f32.mrf.mxu0
  %v1675 = vadd.f32 0.0, %v1674
  %1676 = vdwg.mxu0
  %1677 = vrot.lane.b32.xlu0 %v365, 40
  %v1678 = vpop.permute.xlu0 %1677
  %1679 = vrot.lane.b32.xlu0 %v368, 40
  %v1680 = vpop.permute.xlu0 %1679
  %1681 = vrot.lane.b32.xlu0 %v371, 40
  %v1682 = vpop.permute.xlu0 %1681
  %v1687 = vsel %vm474, %v1602, 0
  %v1690 = vsel %vm474, %v1617, 0
  %v1693 = vsel %vm474, %v1632, 0
  %1695 = vmatpush.msra.mxu0 0.0
  %1696 = vmatpush.msra.mxu0 0.0
  %1697 = vmatpush.msra.mxu0 0.0
  %1698 = vmatpush.msra.mxu0 0.0
  %1699 = vmatpush.msra.mxu0 0.0
  %1700 = vmatpush.msra.mxu0 0.0
  %1701 = vmatpush.msra.mxu0 0.0
  %1702 = vmatpush.msra.mxu0 0.0
  %1703 = vmatpush.msra.mxu0 0.0
  %1704 = vmatpush.msra.mxu0 0.0
  %1705 = vmatpush.msra.mxu0 0.0
  %1706 = vmatpush.msra.mxu0 0.0
  %1707 = vmatpush.msra.mxu0 0.0
  %1708 = vmatpush.msra.mxu0 %v1682
  %1709 = vmatpush.msra.mxu0 %v1680
  %1710 = vmatpush.msra.mxu0 %v1678
  %1711 = vmatmul.f32.gmra.mxu0 %v1687
  %v1712 = vpop.f32.mrf.mxu0
  %v1713 = vadd.f32 0.0, %v1712
  %1714 = vmatmul.f32.gmra.mxu0 %v1690
  %v1715 = vpop.f32.mrf.mxu0
  %v1716 = vadd.f32 0.0, %v1715
  %1717 = vmatmul.f32.gmra.mxu0 %v1693
  %v1718 = vpop.f32.mrf.mxu0
  %v1719 = vadd.f32 0.0, %v1718
  %1720 = vdwg.mxu0
  %1727 = vrot.lane.b32.xlu0 %v993, 8
  %v1728 = vpop.permute.xlu0 %1727
  %1729 = vrot.lane.b32.xlu0 %v996, 8
  %v1730 = vpop.permute.xlu0 %1729
  %1731 = vrot.lane.b32.xlu0 %v999, 8
  %v1732 = vpop.permute.xlu0 %1731
  %1733 = vrot.lane.b32.xlu0 %v1037, 8
  %v1734 = vpop.permute.xlu0 %1733
  %1735 = vrot.lane.b32.xlu0 %v1040, 8
  %v1736 = vpop.permute.xlu0 %1735
  %1737 = vrot.lane.b32.xlu0 %v1043, 8
  %v1738 = vpop.permute.xlu0 %1737
  %1751 = vrot.lane.b32.xlu0 %v1331, 16
  %v1752 = vpop.permute.xlu0 %1751
  %1753 = vrot.lane.b32.xlu0 %v1334, 16
  %v1754 = vpop.permute.xlu0 %1753
  %1755 = vrot.lane.b32.xlu0 %v1337, 16
  %v1756 = vpop.permute.xlu0 %1755
  %1757 = vrot.lane.b32.xlu0 %v1375, 16
  %v1758 = vpop.permute.xlu0 %1757
  %1759 = vrot.lane.b32.xlu0 %v1378, 16
  %v1760 = vpop.permute.xlu0 %1759
  %1761 = vrot.lane.b32.xlu0 %v1381, 16
  %v1762 = vpop.permute.xlu0 %1761
  %1775 = vrot.lane.b32.xlu0 %v1669, 24
  %v1776 = vpop.permute.xlu0 %1775
  %1777 = vrot.lane.b32.xlu0 %v1672, 24
  %v1778 = vpop.permute.xlu0 %1777
  %1779 = vrot.lane.b32.xlu0 %v1675, 24
  %v1780 = vpop.permute.xlu0 %1779
  %1781 = vrot.lane.b32.xlu0 %v1713, 24
  %v1782 = vpop.permute.xlu0 %1781
  %1783 = vrot.lane.b32.xlu0 %v1716, 24
  %v1784 = vpop.permute.xlu0 %1783
  %1785 = vrot.lane.b32.xlu0 %v1719, 24
  %v1786 = vpop.permute.xlu0 %1785
  %v1793 = vsel %vm382, %v655, %v1728
  %v1794 = vsel %vm382, %v658, %v1730
  %v1795 = vsel %vm382, %v661, %v1732
  %v1796 = vsel %vm382, %v699, %v1734
  %v1797 = vsel %vm382, %v702, %v1736
  %v1798 = vsel %vm382, %v705, %v1738
  %vm1799 = vcmask 130048
  %v1800 = vsel %vm1799, %v1793, %v1752
  %v1801 = vsel %vm1799, %v1794, %v1754
  %v1802 = vsel %vm1799, %v1795, %v1756
  %v1803 = vsel %vm1799, %v1796, %v1758
  %v1804 = vsel %vm1799, %v1797, %v1760
  %v1805 = vsel %vm1799, %v1798, %v1762
  %v1806 = vsel %vm474, %v1800, %v1776
  %v1807 = vsel %vm474, %v1801, %v1778
  %v1808 = vsel %vm474, %v1802, %v1780
  %v1809 = vsel %vm474, %v1803, %v1782
  %v1810 = vsel %vm474, %v1804, %v1784
  %v1811 = vsel %vm474, %v1805, %v1786
  %v1812 = vld [vmem:[%s9] sm:$0xff]
  %v1813 = vld [vmem:[%s9 + $0x8] sm:$0xff]
  %v1814 = vld [vmem:[%s9 + $0x10] sm:$0xff]
  %v1815 = vld [vmem:[%s9 + $0x18] sm:$0xff]
  %v1817 = vsel %vm154, %v1806, 0
  %v1820 = vsel %vm154, %v1807, 0
  %v1823 = vsel %vm154, %v1808, 0
  %v1826 = vsel %vm154, %v1809, 0
  %v1829 = vsel %vm154, %v1810, 0
  %v1832 = vsel %vm154, %v1811, 0
  %1834 = vmatpush.msra.mxu0 0.0
  %1835 = vmatpush.msra.mxu0 0.0
  %1836 = vmatpush.msra.mxu0 0.0
  %1837 = vmatpush.msra.mxu0 0.0
  %1838 = vmatpush.msra.mxu0 0.0
  %1839 = vmatpush.msra.mxu0 0.0
  %1840 = vmatpush.msra.mxu0 0.0
  %1841 = vmatpush.msra.mxu0 0.0
  %1842 = vmatpush.msra.mxu0 0.0
  %1843 = vmatpush.msra.mxu0 0.0
  %1844 = vmatpush.msra.mxu0 0.0
  %1845 = vmatpush.msra.mxu0 0.0
  %1846 = vmatpush.msra.mxu0 %v1815
  %1847 = vmatpush.msra.mxu0 %v1814
  %1848 = vmatpush.msra.mxu0 %v1813
  %1849 = vmatpush.msra.mxu0 %v1812
  %1850 = vmatmul.f32.gmra.mxu0 %v1817
  %v1851 = vpop.f32.mrf.mxu0
  %v1852 = vadd.f32 0.0, %v1851
  %1853 = vmatmul.f32.gmra.mxu0 %v1820
  %v1854 = vpop.f32.mrf.mxu0
  %v1855 = vadd.f32 0.0, %v1854
  %1856 = vmatmul.f32.gmra.mxu0 %v1823
  %v1857 = vpop.f32.mrf.mxu0
  %v1858 = vadd.f32 0.0, %v1857
  %1859 = vmatmul.f32.gmra.mxu0 %v1826
  %v1860 = vpop.f32.mrf.mxu0
  %v1861 = vadd.f32 0.0, %v1860
  %1862 = vmatmul.f32.gmra.mxu0 %v1829
  %v1863 = vpop.f32.mrf.mxu0
  %v1864 = vadd.f32 0.0, %v1863
  %1865 = vmatmul.f32.gmra.mxu0 %v1832
  %v1866 = vpop.f32.mrf.mxu0
  %v1867 = vadd.f32 0.0, %v1866
  %1868 = vdwg.mxu0
  %v1869 = vadd.f32 %v143, %v1852
  %v1870 = vadd.f32 %v144, %v1855
  %v1871 = vadd.f32 %v145, %v1858
  %v1872 = vadd.f32 %v146, %v1861
  %v1873 = vadd.f32 %v147, %v1864
  %v1874 = vadd.f32 %v148, %v1867
  %v1875 = vld [vmem:[%s10] sm:$0x1]
  %v1877 = vperm.slane %v1875, 0
  %v1879 = vadd.f32 %v1869, %v1877
  %v1880 = vadd.f32 %v1870, %v1877
  %v1881 = vadd.f32 %v1871, %v1877
  %v1882 = vadd.f32 %v1872, %v1877
  %v1883 = vadd.f32 %v1873, %v1877
  %v1884 = vadd.f32 %v1874, %v1877
  %v1885 = vld [vmem:[%s11] sm:$0x1]
  %v1886 = vld [vmem:[%s12] sm:$0x1]
  %v1887 = vsel %vm154, %v1879, 0.0
  %1888 = vadd.xlane.f32.xlu0 %v1887
  %v1889 = vpop.xlane.xlu0 %1888
  %v1890 = vsel %vm154, %v1880, 0.0
  %1891 = vadd.xlane.f32.xlu0 %v1890
  %v1892 = vpop.xlane.xlu0 %1891
  %v1893 = vsel %vm154, %v1881, 0.0
  %1894 = vadd.xlane.f32.xlu0 %v1893
  %v1895 = vpop.xlane.xlu0 %1894
  %v1896 = vsel %vm154, %v1882, 0.0
  %1897 = vadd.xlane.f32.xlu0 %v1896
  %v1898 = vpop.xlane.xlu0 %1897
  %v1899 = vsel %vm154, %v1883, 0.0
  %1900 = vadd.xlane.f32.xlu0 %v1899
  %v1901 = vpop.xlane.xlu0 %1900
  %v1902 = vsel %vm154, %v1884, 0.0
  %1903 = vadd.xlane.f32.xlu0 %v1902
  %v1904 = vpop.xlane.xlu0 %1903
  %v1905 = vmul.f32 %v1889, %v179
  %v1906 = vmul.f32 %v1892, %v179
  %v1907 = vmul.f32 %v1895, %v179
  %v1908 = vmul.f32 %v1898, %v179
  %v1909 = vmul.f32 %v1901, %v179
  %v1910 = vmul.f32 %v1904, %v179
  %v1911 = vsub.f32 %v1879, %v1905
  %v1912 = vsub.f32 %v1880, %v1906
  %v1913 = vsub.f32 %v1881, %v1907
  %v1914 = vsub.f32 %v1882, %v1908
  %v1915 = vsub.f32 %v1883, %v1909
  %v1916 = vsub.f32 %v1884, %v1910
  %v1917 = vmul.f32 %v1911, %v1911
  %v1918 = vmul.f32 %v1912, %v1912
  %v1919 = vmul.f32 %v1913, %v1913
  %v1920 = vmul.f32 %v1914, %v1914
  %v1921 = vmul.f32 %v1915, %v1915
  %v1922 = vmul.f32 %v1916, %v1916
  %v1923 = vsel %vm154, %v1917, 0.0
  %1924 = vadd.xlane.f32.xlu0 %v1923
  %v1925 = vpop.xlane.xlu0 %1924
  %v1926 = vsel %vm154, %v1918, 0.0
  %1927 = vadd.xlane.f32.xlu0 %v1926
  %v1928 = vpop.xlane.xlu0 %1927
  %v1929 = vsel %vm154, %v1919, 0.0
  %1930 = vadd.xlane.f32.xlu0 %v1929
  %v1931 = vpop.xlane.xlu0 %1930
  %v1932 = vsel %vm154, %v1920, 0.0
  %1933 = vadd.xlane.f32.xlu0 %v1932
  %v1934 = vpop.xlane.xlu0 %1933
  %v1935 = vsel %vm154, %v1921, 0.0
  %1936 = vadd.xlane.f32.xlu0 %v1935
  %v1937 = vpop.xlane.xlu0 %1936
  %v1938 = vsel %vm154, %v1922, 0.0
  %1939 = vadd.xlane.f32.xlu0 %v1938
  %v1940 = vpop.xlane.xlu0 %1939
  %v1941 = vmul.f32 %v1925, %v179
  %v1942 = vmul.f32 %v1928, %v179
  %v1943 = vmul.f32 %v1931, %v179
  %v1944 = vmul.f32 %v1934, %v179
  %v1945 = vmul.f32 %v1937, %v179
  %v1946 = vmul.f32 %v1940, %v179
  %v1947 = vadd.f32 %v1941, 1e-12
  %v1948 = vadd.f32 %v1942, 1e-12
  %v1949 = vadd.f32 %v1943, 1e-12
  %v1950 = vadd.f32 %v1944, 1e-12
  %v1951 = vadd.f32 %v1945, 1e-12
  %v1952 = vadd.f32 %v1946, 1e-12
  %v1953 = vrsqrt.pop %v1947
  %v1954 = vmul.f32 %v1953, %v1947
  %v1955 = vmul.f32 %v1954, %v1953
  %v1956 = vmul.f32 0.5, %v1955
  %v1957 = vsub.f32 1.5, %v1956
  %v1958 = vmul.f32 %v1953, %v1957
  %vm1959 = vweird.f32 %v1947
  %vm1960 = vweird.f32 %v1953
  %vm1961 = vmor %vm1959, %vm1960
  %v1962 = vsel %vm1961, %v1953, %v1958
  %v1963 = vrsqrt.pop %v1948
  %v1964 = vmul.f32 %v1963, %v1948
  %v1965 = vmul.f32 %v1964, %v1963
  %v1966 = vmul.f32 0.5, %v1965
  %v1967 = vsub.f32 1.5, %v1966
  %v1968 = vmul.f32 %v1963, %v1967
  %vm1969 = vweird.f32 %v1948
  %vm1970 = vweird.f32 %v1963
  %vm1971 = vmor %vm1969, %vm1970
  %v1972 = vsel %vm1971, %v1963, %v1968
  %v1973 = vrsqrt.pop %v1949
  %v1974 = vmul.f32 %v1973, %v1949
  %v1975 = vmul.f32 %v1974, %v1973
  %v1976 = vmul.f32 0.5, %v1975
  %v1977 = vsub.f32 1.5, %v1976
  %v1978 = vmul.f32 %v1973, %v1977
  %vm1979 = vweird.f32 %v1949
  %vm1980 = vweird.f32 %v1973
  %vm1981 = vmor %vm1979, %vm1980
  %v1982 = vsel %vm1981, %v1973, %v1978
  %v1983 = vrsqrt.pop %v1950
  %v1984 = vmul.f32 %v1983, %v1950
  %v1985 = vmul.f32 %v1984, %v1983
  %v1986 = vmul.f32 0.5, %v1985
  %v1987 = vsub.f32 1.5, %v1986
  %v1988 = vmul.f32 %v1983, %v1987
  %vm1989 = vweird.f32 %v1950
  %vm1990 = vweird.f32 %v1983
  %vm1991 = vmor %vm1989, %vm1990
  %v1992 = vsel %vm1991, %v1983, %v1988
  %v1993 = vrsqrt.pop %v1951
  %v1994 = vmul.f32 %v1993, %v1951
  %v1995 = vmul.f32 %v1994, %v1993
  %v1996 = vmul.f32 0.5, %v1995
  %v1997 = vsub.f32 1.5, %v1996
  %v1998 = vmul.f32 %v1993, %v1997
  %vm1999 = vweird.f32 %v1951
  %vm2000 = vweird.f32 %v1993
  %vm2001 = vmor %vm1999, %vm2000
  %v2002 = vsel %vm2001, %v1993, %v1998
  %v2003 = vrsqrt.pop %v1952
  %v2004 = vmul.f32 %v2003, %v1952
  %v2005 = vmul.f32 %v2004, %v2003
  %v2006 = vmul.f32 0.5, %v2005
  %v2007 = vsub.f32 1.5, %v2006
  %v2008 = vmul.f32 %v2003, %v2007
  %vm2009 = vweird.f32 %v1952
  %vm2010 = vweird.f32 %v2003
  %vm2011 = vmor %vm2009, %vm2010
  %v2012 = vsel %vm2011, %v2003, %v2008
  %v2013 = vmul.f32 %v1911, %v1962
  %v2014 = vmul.f32 %v1912, %v1972
  %v2015 = vmul.f32 %v1913, %v1982
  %v2016 = vmul.f32 %v1914, %v1992
  %v2017 = vmul.f32 %v1915, %v2002
  %v2018 = vmul.f32 %v1916, %v2012
  %v2020 = vperm.slane %v1885, 0
  %v2022 = vmul.f32 %v2013, %v2020
  %v2023 = vmul.f32 %v2014, %v2020
  %v2024 = vmul.f32 %v2015, %v2020
  %v2025 = vmul.f32 %v2016, %v2020
  %v2026 = vmul.f32 %v2017, %v2020
  %v2027 = vmul.f32 %v2018, %v2020
  %v2029 = vperm.slane %v1886, 0
  %v2031 = vadd.f32 %v2022, %v2029
  %v2032 = vadd.f32 %v2023, %v2029
  %v2033 = vadd.f32 %v2024, %v2029
  %v2034 = vadd.f32 %v2025, %v2029
  %v2035 = vadd.f32 %v2026, %v2029
  %v2036 = vadd.f32 %v2027, %v2029
  %v2037 = vld [vmem:[%s13] sm:$0xff]
  %v2038 = vld [vmem:[%s13 + $0x8] sm:$0xff]
  %v2039 = vld [vmem:[%s13 + $0x10] sm:$0xff]
  %v2040 = vld [vmem:[%s13 + $0x18] sm:$0xff]
  %v2041 = vld [vmem:[%s14] sm:$0x1]
  %v2043 = vperm.slane %v2041, 0
  %v2046 = vsel %vm154, %v2031, 0
  %v2049 = vsel %vm154, %v2032, 0
  %v2052 = vsel %vm154, %v2033, 0
  %v2055 = vsel %vm154, %v2034, 0
  %v2058 = vsel %vm154, %v2035, 0
  %v2061 = vsel %vm154, %v2036, 0
  %2063 = vmatpush.msra.mxu0 0.0
  %2064 = vmatpush.msra.mxu0 0.0
  %2065 = vmatpush.msra.mxu0 0.0
  %2066 = vmatpush.msra.mxu0 0.0
  %2067 = vmatpush.msra.mxu0 0.0
  %2068 = vmatpush.msra.mxu0 0.0
  %2069 = vmatpush.msra.mxu0 0.0
  %2070 = vmatpush.msra.mxu0 0.0
  %2071 = vmatpush.msra.mxu0 0.0
  %2072 = vmatpush.msra.mxu0 0.0
  %2073 = vmatpush.msra.mxu0 0.0
  %2074 = vmatpush.msra.mxu0 0.0
  %2075 = vmatpush.msra.mxu0 %v2040
  %2076 = vmatpush.msra.mxu0 %v2039
  %2077 = vmatpush.msra.mxu0 %v2038
  %2078 = vmatpush.msra.mxu0 %v2037
  %2079 = vmatmul.f32.gmra.mxu0 %v2046
  %v2080 = vpop.f32.mrf.mxu0
  %v2081 = vadd.f32 %v2043, %v2080
  %2082 = vmatmul.f32.gmra.mxu0 %v2049
  %v2083 = vpop.f32.mrf.mxu0
  %v2084 = vadd.f32 %v2043, %v2083
  %2085 = vmatmul.f32.gmra.mxu0 %v2052
  %v2086 = vpop.f32.mrf.mxu0
  %v2087 = vadd.f32 %v2043, %v2086
  %2088 = vmatmul.f32.gmra.mxu0 %v2055
  %v2089 = vpop.f32.mrf.mxu0
  %v2090 = vadd.f32 %v2043, %v2089
  %2091 = vmatmul.f32.gmra.mxu0 %v2058
  %v2092 = vpop.f32.mrf.mxu0
  %v2093 = vadd.f32 %v2043, %v2092
  %2094 = vmatmul.f32.gmra.mxu0 %v2061
  %v2095 = vpop.f32.mrf.mxu0
  %v2096 = vadd.f32 %v2043, %v2095
  %2097 = vdwg.mxu0
  %v2098 = vmul.f32 %v2081, 0.5
  %v2099 = vmul.f32 %v2084, 0.5
  %v2100 = vmul.f32 %v2087, 0.5
  %v2101 = vmul.f32 %v2090, 0.5
  %v2102 = vmul.f32 %v2093, 0.5
  %v2103 = vmul.f32 %v2096, 0.5
  %v2104 = vmul.f32 %v2081, 0.70710677
  %v2105 = vmul.f32 %v2084, 0.70710677
  %v2106 = vmul.f32 %v2087, 0.70710677
  %v2107 = vmul.f32 %v2090, 0.70710677
  %v2108 = vmul.f32 %v2093, 0.70710677
  %v2109 = vmul.f32 %v2096, 0.70710677
  %v2110 = vmul.f32 %v2104, %v2104
  %v2111 = vmin.f32 16.0, %v2110
  %v2112 = vmul.f32 %v2111, 2.1237322e-06
  %v2113 = vadd.f32 %v2112, 0.00028619796
  %v2114 = vmul.f32 %v2111, %v2113
  %v2115 = vadd.f32 %v2114, 0.0036580483
  %v2116 = vmul.f32 %v2111, %v2115
  %v2117 = vadd.f32 %v2116, 0.05243302
  %v2118 = vmul.f32 %v2111, %v2117
  %v2119 = vadd.f32 %v2118, 0.18741608
  %v2120 = vmul.f32 %v2111, %v2119
  %v2121 = vadd.f32 %v2120, 1.1283791
  %v2122 = vmul.f32 %v2104, %v2121
  %v2123 = vmul.f32 %v2111, 3.8918573e-05
  %v2124 = vadd.f32 %v2123, 0.001143296
  %v2125 = vmul.f32 %v2111, %v2124
  %v2126 = vadd.f32 %v2125, 0.014752088
  %v2127 = vmul.f32 %v2111, %v2126
  %v2128 = vadd.f32 %v2127, 0.112945676
  %v2129 = vmul.f32 %v2111, %v2128
  %v2130 = vadd.f32 %v2129, 0.4994258
  %v2131 = vmul.f32 %v2111, %v2130
  %v2132 = vadd.f32 %v2131, 1.0
  %v2133 = vrcp.pop %v2132
  %v2134 = vmul.f32 %v2132, %v2133
  %v2135 = vsub.f32 1.0, %v2134
  %v2136 = vmul.f32 %v2133, %v2135
  %v2137 = vadd.f32 %v2133, %v2136
  %vm2138 = vweird.f32 %v2132
  %vm2139 = vweird.f32 %v2133
  %vm2140 = vmor %vm2138, %vm2139
  %v2141 = vsel %vm2140, %v2133, %v2137
  %v2142 = vand.u32 2147483647, %v2132
  %vm2143 = vcmp.eq.f32.partialorder %v2142, 8.507059e+37
  %v2144 = vand.u32 %v2132, 2147483648
  %v2145 = vor.u32 1.1754944e-38, %v2144
  %v2146 = vsel %vm2143, %v2145, %v2141
  %v2147 = vmul.f32 %v2122, %v2146
  %v2148 = vmin.f32 %v2147, 1.0
  %v2149 = vmax.f32 %v2148, -1.0
  %v2150 = vmul.f32 %v2105, %v2105
  %v2151 = vmin.f32 16.0, %v2150
  %v2152 = vmul.f32 %v2151, 2.1237322e-06
  %v2153 = vadd.f32 %v2152, 0.00028619796
  %v2154 = vmul.f32 %v2151, %v2153
  %v2155 = vadd.f32 %v2154, 0.0036580483
  %v2156 = vmul.f32 %v2151, %v2155
  %v2157 = vadd.f32 %v2156, 0.05243302
  %v2158 = vmul.f32 %v2151, %v2157
  %v2159 = vadd.f32 %v2158, 0.18741608
  %v2160 = vmul.f32 %v2151, %v2159
  %v2161 = vadd.f32 %v2160, 1.1283791
  %v2162 = vmul.f32 %v2105, %v2161
  %v2163 = vmul.f32 %v2151, 3.8918573e-05
  %v2164 = vadd.f32 %v2163, 0.001143296
  %v2165 = vmul.f32 %v2151, %v2164
  %v2166 = vadd.f32 %v2165, 0.014752088
  %v2167 = vmul.f32 %v2151, %v2166
  %v2168 = vadd.f32 %v2167, 0.112945676
  %v2169 = vmul.f32 %v2151, %v2168
  %v2170 = vadd.f32 %v2169, 0.4994258
  %v2171 = vmul.f32 %v2151, %v2170
  %v2172 = vadd.f32 %v2171, 1.0
  %v2173 = vrcp.pop %v2172
  %v2174 = vmul.f32 %v2172, %v2173
  %v2175 = vsub.f32 1.0, %v2174
  %v2176 = vmul.f32 %v2173, %v2175
  %v2177 = vadd.f32 %v2173, %v2176
  %vm2178 = vweird.f32 %v2172
  %vm2179 = vweird.f32 %v2173
  %vm2180 = vmor %vm2178, %vm2179
  %v2181 = vsel %vm2180, %v2173, %v2177
  %v2182 = vand.u32 2147483647, %v2172
  %vm2183 = vcmp.eq.f32.partialorder %v2182, 8.507059e+37
  %v2184 = vand.u32 %v2172, 2147483648
  %v2185 = vor.u32 1.1754944e-38, %v2184
  %v2186 = vsel %vm2183, %v2185, %v2181
  %v2187 = vmul.f32 %v2162, %v2186
  %v2188 = vmin.f32 %v2187, 1.0
  %v2189 = vmax.f32 %v2188, -1.0
  %v2190 = vmul.f32 %v2106, %v2106
  %v2191 = vmin.f32 16.0, %v2190
  %v2192 = vmul.f32 %v2191, 2.1237322e-06
  %v2193 = vadd.f32 %v2192, 0.00028619796
  %v2194 = vmul.f32 %v2191, %v2193
  %v2195 = vadd.f32 %v2194, 0.0036580483
  %v2196 = vmul.f32 %v2191, %v2195
  %v2197 = vadd.f32 %v2196, 0.05243302
  %v2198 = vmul.f32 %v2191, %v2197
  %v2199 = vadd.f32 %v2198, 0.18741608
  %v2200 = vmul.f32 %v2191, %v2199
  %v2201 = vadd.f32 %v2200, 1.1283791
  %v2202 = vmul.f32 %v2106, %v2201
  %v2203 = vmul.f32 %v2191, 3.8918573e-05
  %v2204 = vadd.f32 %v2203, 0.001143296
  %v2205 = vmul.f32 %v2191, %v2204
  %v2206 = vadd.f32 %v2205, 0.014752088
  %v2207 = vmul.f32 %v2191, %v2206
  %v2208 = vadd.f32 %v2207, 0.112945676
  %v2209 = vmul.f32 %v2191, %v2208
  %v2210 = vadd.f32 %v2209, 0.4994258
  %v2211 = vmul.f32 %v2191, %v2210
  %v2212 = vadd.f32 %v2211, 1.0
  %v2213 = vrcp.pop %v2212
  %v2214 = vmul.f32 %v2212, %v2213
  %v2215 = vsub.f32 1.0, %v2214
  %v2216 = vmul.f32 %v2213, %v2215
  %v2217 = vadd.f32 %v2213, %v2216
  %vm2218 = vweird.f32 %v2212
  %vm2219 = vweird.f32 %v2213
  %vm2220 = vmor %vm2218, %vm2219
  %v2221 = vsel %vm2220, %v2213, %v2217
  %v2222 = vand.u32 2147483647, %v2212
  %vm2223 = vcmp.eq.f32.partialorder %v2222, 8.507059e+37
  %v2224 = vand.u32 %v2212, 2147483648
  %v2225 = vor.u32 1.1754944e-38, %v2224
  %v2226 = vsel %vm2223, %v2225, %v2221
  %v2227 = vmul.f32 %v2202, %v2226
  %v2228 = vmin.f32 %v2227, 1.0
  %v2229 = vmax.f32 %v2228, -1.0
  %v2230 = vmul.f32 %v2107, %v2107
  %v2231 = vmin.f32 16.0, %v2230
  %v2232 = vmul.f32 %v2231, 2.1237322e-06
  %v2233 = vadd.f32 %v2232, 0.00028619796
  %v2234 = vmul.f32 %v2231, %v2233
  %v2235 = vadd.f32 %v2234, 0.0036580483
  %v2236 = vmul.f32 %v2231, %v2235
  %v2237 = vadd.f32 %v2236, 0.05243302
  %v2238 = vmul.f32 %v2231, %v2237
  %v2239 = vadd.f32 %v2238, 0.18741608
  %v2240 = vmul.f32 %v2231, %v2239
  %v2241 = vadd.f32 %v2240, 1.1283791
  %v2242 = vmul.f32 %v2107, %v2241
  %v2243 = vmul.f32 %v2231, 3.8918573e-05
  %v2244 = vadd.f32 %v2243, 0.001143296
  %v2245 = vmul.f32 %v2231, %v2244
  %v2246 = vadd.f32 %v2245, 0.014752088
  %v2247 = vmul.f32 %v2231, %v2246
  %v2248 = vadd.f32 %v2247, 0.112945676
  %v2249 = vmul.f32 %v2231, %v2248
  %v2250 = vadd.f32 %v2249, 0.4994258
  %v2251 = vmul.f32 %v2231, %v2250
  %v2252 = vadd.f32 %v2251, 1.0
  %v2253 = vrcp.pop %v2252
  %v2254 = vmul.f32 %v2252, %v2253
  %v2255 = vsub.f32 1.0, %v2254
  %v2256 = vmul.f32 %v2253, %v2255
  %v2257 = vadd.f32 %v2253, %v2256
  %vm2258 = vweird.f32 %v2252
  %vm2259 = vweird.f32 %v2253
  %vm2260 = vmor %vm2258, %vm2259
  %v2261 = vsel %vm2260, %v2253, %v2257
  %v2262 = vand.u32 2147483647, %v2252
  %vm2263 = vcmp.eq.f32.partialorder %v2262, 8.507059e+37
  %v2264 = vand.u32 %v2252, 2147483648
  %v2265 = vor.u32 1.1754944e-38, %v2264
  %v2266 = vsel %vm2263, %v2265, %v2261
  %v2267 = vmul.f32 %v2242, %v2266
  %v2268 = vmin.f32 %v2267, 1.0
  %v2269 = vmax.f32 %v2268, -1.0
  %v2270 = vmul.f32 %v2108, %v2108
  %v2271 = vmin.f32 16.0, %v2270
  %v2272 = vmul.f32 %v2271, 2.1237322e-06
  %v2273 = vadd.f32 %v2272, 0.00028619796
  %v2274 = vmul.f32 %v2271, %v2273
  %v2275 = vadd.f32 %v2274, 0.0036580483
  %v2276 = vmul.f32 %v2271, %v2275
  %v2277 = vadd.f32 %v2276, 0.05243302
  %v2278 = vmul.f32 %v2271, %v2277
  %v2279 = vadd.f32 %v2278, 0.18741608
  %v2280 = vmul.f32 %v2271, %v2279
  %v2281 = vadd.f32 %v2280, 1.1283791
  %v2282 = vmul.f32 %v2108, %v2281
  %v2283 = vmul.f32 %v2271, 3.8918573e-05
  %v2284 = vadd.f32 %v2283, 0.001143296
  %v2285 = vmul.f32 %v2271, %v2284
  %v2286 = vadd.f32 %v2285, 0.014752088
  %v2287 = vmul.f32 %v2271, %v2286
  %v2288 = vadd.f32 %v2287, 0.112945676
  %v2289 = vmul.f32 %v2271, %v2288
  %v2290 = vadd.f32 %v2289, 0.4994258
  %v2291 = vmul.f32 %v2271, %v2290
  %v2292 = vadd.f32 %v2291, 1.0
  %v2293 = vrcp.pop %v2292
  %v2294 = vmul.f32 %v2292, %v2293
  %v2295 = vsub.f32 1.0, %v2294
  %v2296 = vmul.f32 %v2293, %v2295
  %v2297 = vadd.f32 %v2293, %v2296
  %vm2298 = vweird.f32 %v2292
  %vm2299 = vweird.f32 %v2293
  %vm2300 = vmor %vm2298, %vm2299
  %v2301 = vsel %vm2300, %v2293, %v2297
  %v2302 = vand.u32 2147483647, %v2292
  %vm2303 = vcmp.eq.f32.partialorder %v2302, 8.507059e+37
  %v2304 = vand.u32 %v2292, 2147483648
  %v2305 = vor.u32 1.1754944e-38, %v2304
  %v2306 = vsel %vm2303, %v2305, %v2301
  %v2307 = vmul.f32 %v2282, %v2306
  %v2308 = vmin.f32 %v2307, 1.0
  %v2309 = vmax.f32 %v2308, -1.0
  %v2310 = vmul.f32 %v2109, %v2109
  %v2311 = vmin.f32 16.0, %v2310
  %v2312 = vmul.f32 %v2311, 2.1237322e-06
  %v2313 = vadd.f32 %v2312, 0.00028619796
  %v2314 = vmul.f32 %v2311, %v2313
  %v2315 = vadd.f32 %v2314, 0.0036580483
  %v2316 = vmul.f32 %v2311, %v2315
  %v2317 = vadd.f32 %v2316, 0.05243302
  %v2318 = vmul.f32 %v2311, %v2317
  %v2319 = vadd.f32 %v2318, 0.18741608
  %v2320 = vmul.f32 %v2311, %v2319
  %v2321 = vadd.f32 %v2320, 1.1283791
  %v2322 = vmul.f32 %v2109, %v2321
  %v2323 = vmul.f32 %v2311, 3.8918573e-05
  %v2324 = vadd.f32 %v2323, 0.001143296
  %v2325 = vmul.f32 %v2311, %v2324
  %v2326 = vadd.f32 %v2325, 0.014752088
  %v2327 = vmul.f32 %v2311, %v2326
  %v2328 = vadd.f32 %v2327, 0.112945676
  %v2329 = vmul.f32 %v2311, %v2328
  %v2330 = vadd.f32 %v2329, 0.4994258
  %v2331 = vmul.f32 %v2311, %v2330
  %v2332 = vadd.f32 %v2331, 1.0
  %v2333 = vrcp.pop %v2332
  %v2334 = vmul.f32 %v2332, %v2333
  %v2335 = vsub.f32 1.0, %v2334
  %v2336 = vmul.f32 %v2333, %v2335
  %v2337 = vadd.f32 %v2333, %v2336
  %vm2338 = vweird.f32 %v2332
  %vm2339 = vweird.f32 %v2333
  %vm2340 = vmor %vm2338, %vm2339
  %v2341 = vsel %vm2340, %v2333, %v2337
  %v2342 = vand.u32 2147483647, %v2332
  %vm2343 = vcmp.eq.f32.partialorder %v2342, 8.507059e+37
  %v2344 = vand.u32 %v2332, 2147483648
  %v2345 = vor.u32 1.1754944e-38, %v2344
  %v2346 = vsel %vm2343, %v2345, %v2341
  %v2347 = vmul.f32 %v2322, %v2346
  %v2348 = vmin.f32 %v2347, 1.0
  %v2349 = vmax.f32 %v2348, -1.0
  %v2350 = vadd.f32 %v2149, 1.0
  %v2351 = vadd.f32 %v2189, 1.0
  %v2352 = vadd.f32 %v2229, 1.0
  %v2353 = vadd.f32 %v2269, 1.0
  %v2354 = vadd.f32 %v2309, 1.0
  %v2355 = vadd.f32 %v2349, 1.0
  %v2356 = vmul.f32 %v2098, %v2350
  %v2357 = vmul.f32 %v2099, %v2351
  %v2358 = vmul.f32 %v2100, %v2352
  %v2359 = vmul.f32 %v2101, %v2353
  %v2360 = vmul.f32 %v2102, %v2354
  %v2361 = vmul.f32 %v2103, %v2355
  %v2362 = vld [vmem:[%s15] sm:$0xff]
  %v2363 = vld [vmem:[%s15 + $0x8] sm:$0xff]
  %v2364 = vld [vmem:[%s15 + $0x10] sm:$0xff]
  %v2365 = vld [vmem:[%s15 + $0x18] sm:$0xff]
  %v2366 = vld [vmem:[%s15 + $0x20] sm:$0xff]
  %v2367 = vld [vmem:[%s15 + $0x28] sm:$0xff]
  %v2368 = vld [vmem:[%s15 + $0x30] sm:$0xff]
  %v2369 = vld [vmem:[%s15 + $0x38] sm:$0xff]
  %vm2370 = vcmask 523264
  %v2372 = vsel %vm2370, %v2356, 0
  %v2375 = vsel %vm2370, %v2357, 0
  %v2378 = vsel %vm2370, %v2358, 0
  %v2381 = vsel %vm2370, %v2359, 0
  %v2384 = vsel %vm2370, %v2360, 0
  %v2387 = vsel %vm2370, %v2361, 0
  %2389 = vmatpush.msra.mxu0 0.0
  %2390 = vmatpush.msra.mxu0 0.0
  %2391 = vmatpush.msra.mxu0 0.0
  %2392 = vmatpush.msra.mxu0 0.0
  %2393 = vmatpush.msra.mxu0 0.0
  %2394 = vmatpush.msra.mxu0 0.0
  %2395 = vmatpush.msra.mxu0 0.0
  %2396 = vmatpush.msra.mxu0 0.0
  %2397 = vmatpush.msra.mxu0 %v2369
  %2398 = vmatpush.msra.mxu0 %v2368
  %2399 = vmatpush.msra.mxu0 %v2367
  %2400 = vmatpush.msra.mxu0 %v2366
  %2401 = vmatpush.msra.mxu0 %v2365
  %2402 = vmatpush.msra.mxu0 %v2364
  %2403 = vmatpush.msra.mxu0 %v2363
  %2404 = vmatpush.msra.mxu0 %v2362
  %2405 = vmatmul.f32.gmra.mxu0 %v2372
  %v2406 = vpop.f32.mrf.mxu0
  %v2407 = vadd.f32 0.0, %v2406
  %2408 = vmatmul.f32.gmra.mxu0 %v2375
  %v2409 = vpop.f32.mrf.mxu0
  %v2410 = vadd.f32 0.0, %v2409
  %2411 = vmatmul.f32.gmra.mxu0 %v2378
  %v2412 = vpop.f32.mrf.mxu0
  %v2413 = vadd.f32 0.0, %v2412
  %2414 = vmatmul.f32.gmra.mxu0 %v2381
  %v2415 = vpop.f32.mrf.mxu0
  %v2416 = vadd.f32 0.0, %v2415
  %2417 = vmatmul.f32.gmra.mxu0 %v2384
  %v2418 = vpop.f32.mrf.mxu0
  %v2419 = vadd.f32 0.0, %v2418
  %2420 = vmatmul.f32.gmra.mxu0 %v2387
  %v2421 = vpop.f32.mrf.mxu0
  %v2422 = vadd.f32 0.0, %v2421
  %2423 = vdwg.mxu0
  %v2424 = vadd.f32 %v1879, %v2407
  %v2425 = vadd.f32 %v1880, %v2410
  %v2426 = vadd.f32 %v1881, %v2413
  %v2427 = vadd.f32 %v1882, %v2416
  %v2428 = vadd.f32 %v1883, %v2419
  %v2429 = vadd.f32 %v1884, %v2422
  %v2430 = vld [vmem:[%s16] sm:$0x1]
  %v2432 = vperm.slane %v2430, 0
  %v2434 = vadd.f32 %v2424, %v2432
  %v2435 = vadd.f32 %v2425, %v2432
  %v2436 = vadd.f32 %v2426, %v2432
  %v2437 = vadd.f32 %v2427, %v2432
  %v2438 = vadd.f32 %v2428, %v2432
  %v2439 = vadd.f32 %v2429, %v2432
  %s2440 = scalar_lea.vmem %s5, 1
  %v2441 = vld [vmem:[%s2440] sm:$0x1]
  %s2442 = scalar_lea.vmem %s6, 1
  %v2443 = vld [vmem:[%s2442] sm:$0x1]
  %v2444 = vsel %vm154, %v2434, 0.0
  %2445 = vadd.xlane.f32.xlu0 %v2444
  %v2446 = vpop.xlane.xlu0 %2445
  %v2447 = vsel %vm154, %v2435, 0.0
  %2448 = vadd.xlane.f32.xlu0 %v2447
  %v2449 = vpop.xlane.xlu0 %2448
  %v2450 = vsel %vm154, %v2436, 0.0
  %2451 = vadd.xlane.f32.xlu0 %v2450
  %v2452 = vpop.xlane.xlu0 %2451
  %v2453 = vsel %vm154, %v2437, 0.0
  %2454 = vadd.xlane.f32.xlu0 %v2453
  %v2455 = vpop.xlane.xlu0 %2454
  %v2456 = vsel %vm154, %v2438, 0.0
  %2457 = vadd.xlane.f32.xlu0 %v2456
  %v2458 = vpop.xlane.xlu0 %2457
  %v2459 = vsel %vm154, %v2439, 0.0
  %2460 = vadd.xlane.f32.xlu0 %v2459
  %v2461 = vpop.xlane.xlu0 %2460
  %v2462 = vmul.f32 %v2446, %v179
  %v2463 = vmul.f32 %v2449, %v179
  %v2464 = vmul.f32 %v2452, %v179
  %v2465 = vmul.f32 %v2455, %v179
  %v2466 = vmul.f32 %v2458, %v179
  %v2467 = vmul.f32 %v2461, %v179
  %v2468 = vsub.f32 %v2434, %v2462
  %v2469 = vsub.f32 %v2435, %v2463
  %v2470 = vsub.f32 %v2436, %v2464
  %v2471 = vsub.f32 %v2437, %v2465
  %v2472 = vsub.f32 %v2438, %v2466
  %v2473 = vsub.f32 %v2439, %v2467
  %v2474 = vmul.f32 %v2468, %v2468
  %v2475 = vmul.f32 %v2469, %v2469
  %v2476 = vmul.f32 %v2470, %v2470
  %v2477 = vmul.f32 %v2471, %v2471
  %v2478 = vmul.f32 %v2472, %v2472
  %v2479 = vmul.f32 %v2473, %v2473
  %v2480 = vsel %vm154, %v2474, 0.0
  %2481 = vadd.xlane.f32.xlu0 %v2480
  %v2482 = vpop.xlane.xlu0 %2481
  %v2483 = vsel %vm154, %v2475, 0.0
  %2484 = vadd.xlane.f32.xlu0 %v2483
  %v2485 = vpop.xlane.xlu0 %2484
  %v2486 = vsel %vm154, %v2476, 0.0
  %2487 = vadd.xlane.f32.xlu0 %v2486
  %v2488 = vpop.xlane.xlu0 %2487
  %v2489 = vsel %vm154, %v2477, 0.0
  %2490 = vadd.xlane.f32.xlu0 %v2489
  %v2491 = vpop.xlane.xlu0 %2490
  %v2492 = vsel %vm154, %v2478, 0.0
  %2493 = vadd.xlane.f32.xlu0 %v2492
  %v2494 = vpop.xlane.xlu0 %2493
  %v2495 = vsel %vm154, %v2479, 0.0
  %2496 = vadd.xlane.f32.xlu0 %v2495
  %v2497 = vpop.xlane.xlu0 %2496
  %v2498 = vmul.f32 %v2482, %v179
  %v2499 = vmul.f32 %v2485, %v179
  %v2500 = vmul.f32 %v2488, %v179
  %v2501 = vmul.f32 %v2491, %v179
  %v2502 = vmul.f32 %v2494, %v179
  %v2503 = vmul.f32 %v2497, %v179
  %v2504 = vadd.f32 %v2498, 1e-12
  %v2505 = vadd.f32 %v2499, 1e-12
  %v2506 = vadd.f32 %v2500, 1e-12
  %v2507 = vadd.f32 %v2501, 1e-12
  %v2508 = vadd.f32 %v2502, 1e-12
  %v2509 = vadd.f32 %v2503, 1e-12
  %v2510 = vrsqrt.pop %v2504
  %v2511 = vmul.f32 %v2510, %v2504
  %v2512 = vmul.f32 %v2511, %v2510
  %v2513 = vmul.f32 0.5, %v2512
  %v2514 = vsub.f32 1.5, %v2513
  %v2515 = vmul.f32 %v2510, %v2514
  %vm2516 = vweird.f32 %v2504
  %vm2517 = vweird.f32 %v2510
  %vm2518 = vmor %vm2516, %vm2517
  %v2519 = vsel %vm2518, %v2510, %v2515
  %v2520 = vrsqrt.pop %v2505
  %v2521 = vmul.f32 %v2520, %v2505
  %v2522 = vmul.f32 %v2521, %v2520
  %v2523 = vmul.f32 0.5, %v2522
  %v2524 = vsub.f32 1.5, %v2523
  %v2525 = vmul.f32 %v2520, %v2524
  %vm2526 = vweird.f32 %v2505
  %vm2527 = vweird.f32 %v2520
  %vm2528 = vmor %vm2526, %vm2527
  %v2529 = vsel %vm2528, %v2520, %v2525
  %v2530 = vrsqrt.pop %v2506
  %v2531 = vmul.f32 %v2530, %v2506
  %v2532 = vmul.f32 %v2531, %v2530
  %v2533 = vmul.f32 0.5, %v2532
  %v2534 = vsub.f32 1.5, %v2533
  %v2535 = vmul.f32 %v2530, %v2534
  %vm2536 = vweird.f32 %v2506
  %vm2537 = vweird.f32 %v2530
  %vm2538 = vmor %vm2536, %vm2537
  %v2539 = vsel %vm2538, %v2530, %v2535
  %v2540 = vrsqrt.pop %v2507
  %v2541 = vmul.f32 %v2540, %v2507
  %v2542 = vmul.f32 %v2541, %v2540
  %v2543 = vmul.f32 0.5, %v2542
  %v2544 = vsub.f32 1.5, %v2543
  %v2545 = vmul.f32 %v2540, %v2544
  %vm2546 = vweird.f32 %v2507
  %vm2547 = vweird.f32 %v2540
  %vm2548 = vmor %vm2546, %vm2547
  %v2549 = vsel %vm2548, %v2540, %v2545
  %v2550 = vrsqrt.pop %v2508
  %v2551 = vmul.f32 %v2550, %v2508
  %v2552 = vmul.f32 %v2551, %v2550
  %v2553 = vmul.f32 0.5, %v2552
  %v2554 = vsub.f32 1.5, %v2553
  %v2555 = vmul.f32 %v2550, %v2554
  %vm2556 = vweird.f32 %v2508
  %vm2557 = vweird.f32 %v2550
  %vm2558 = vmor %vm2556, %vm2557
  %v2559 = vsel %vm2558, %v2550, %v2555
  %v2560 = vrsqrt.pop %v2509
  %v2561 = vmul.f32 %v2560, %v2509
  %v2562 = vmul.f32 %v2561, %v2560
  %v2563 = vmul.f32 0.5, %v2562
  %v2564 = vsub.f32 1.5, %v2563
  %v2565 = vmul.f32 %v2560, %v2564
  %vm2566 = vweird.f32 %v2509
  %vm2567 = vweird.f32 %v2560
  %vm2568 = vmor %vm2566, %vm2567
  %v2569 = vsel %vm2568, %v2560, %v2565
  %v2570 = vmul.f32 %v2468, %v2519
  %v2571 = vmul.f32 %v2469, %v2529
  %v2572 = vmul.f32 %v2470, %v2539
  %v2573 = vmul.f32 %v2471, %v2549
  %v2574 = vmul.f32 %v2472, %v2559
  %v2575 = vmul.f32 %v2473, %v2569
  %v2577 = vperm.slane %v2441, 0
  %v2579 = vmul.f32 %v2570, %v2577
  %v2580 = vmul.f32 %v2571, %v2577
  %v2581 = vmul.f32 %v2572, %v2577
  %v2582 = vmul.f32 %v2573, %v2577
  %v2583 = vmul.f32 %v2574, %v2577
  %v2584 = vmul.f32 %v2575, %v2577
  %v2586 = vperm.slane %v2443, 0
  %v2588 = vadd.f32 %v2579, %v2586
  %v2589 = vadd.f32 %v2580, %v2586
  %v2590 = vadd.f32 %v2581, %v2586
  %v2591 = vadd.f32 %v2582, %v2586
  %v2592 = vadd.f32 %v2583, %v2586
  %v2593 = vadd.f32 %v2584, %v2586
  %s2594 = scalar_lea.vmem %s7, 32
  %v2595 = vld [vmem:[%s2594] sm:$0xff]
  %v2596 = vld [vmem:[%s2594 + $0x8] sm:$0xff]
  %v2597 = vld [vmem:[%s2594 + $0x10] sm:$0xff]
  %v2598 = vld [vmem:[%s2594 + $0x18] sm:$0xff]
  %s2599 = scalar_lea.vmem %s8, 1
  %v2600 = vld [vmem:[%s2599] sm:$0x1]
  %v2602 = vperm.slane %v2600, 0
  %v2605 = vsel %vm154, %v2588, 0
  %v2608 = vsel %vm154, %v2589, 0
  %v2611 = vsel %vm154, %v2590, 0
  %v2614 = vsel %vm154, %v2591, 0
  %v2617 = vsel %vm154, %v2592, 0
  %v2620 = vsel %vm154, %v2593, 0
  %2622 = vmatpush.msra.mxu0 0.0
  %2623 = vmatpush.msra.mxu0 0.0
  %2624 = vmatpush.msra.mxu0 0.0
  %2625 = vmatpush.msra.mxu0 0.0
  %2626 = vmatpush.msra.mxu0 0.0
  %2627 = vmatpush.msra.mxu0 0.0
  %2628 = vmatpush.msra.mxu0 0.0
  %2629 = vmatpush.msra.mxu0 0.0
  %2630 = vmatpush.msra.mxu0 0.0
  %2631 = vmatpush.msra.mxu0 0.0
  %2632 = vmatpush.msra.mxu0 0.0
  %2633 = vmatpush.msra.mxu0 0.0
  %2634 = vmatpush.msra.mxu0 %v2598
  %2635 = vmatpush.msra.mxu0 %v2597
  %2636 = vmatpush.msra.mxu0 %v2596
  %2637 = vmatpush.msra.mxu0 %v2595
  %2638 = vmatmul.f32.gmra.mxu0 %v2605
  %v2639 = vpop.f32.mrf.mxu0
  %v2640 = vadd.f32 %v2602, %v2639
  %2641 = vmatmul.f32.gmra.mxu0 %v2608
  %v2642 = vpop.f32.mrf.mxu0
  %v2643 = vadd.f32 %v2602, %v2642
  %2644 = vmatmul.f32.gmra.mxu0 %v2611
  %v2645 = vpop.f32.mrf.mxu0
  %v2646 = vadd.f32 %v2602, %v2645
  %2647 = vmatmul.f32.gmra.mxu0 %v2614
  %v2648 = vpop.f32.mrf.mxu0
  %v2649 = vadd.f32 %v2602, %v2648
  %2650 = vmatmul.f32.gmra.mxu0 %v2617
  %v2651 = vpop.f32.mrf.mxu0
  %v2652 = vadd.f32 %v2602, %v2651
  %2653 = vmatmul.f32.gmra.mxu0 %v2620
  %v2654 = vpop.f32.mrf.mxu0
  %v2655 = vadd.f32 %v2602, %v2654
  %2656 = vdwg.mxu0
  %2660 = vrot.lane.b32.xlu0 %v2640, 96
  %v2661 = vpop.permute.xlu0 %2660
  %2662 = vrot.lane.b32.xlu0 %v2643, 96
  %v2663 = vpop.permute.xlu0 %2662
  %2664 = vrot.lane.b32.xlu0 %v2646, 96
  %v2665 = vpop.permute.xlu0 %2664
  %v2666 = vsel %vm382, %v2640, 0
  %v2668 = vsel %vm382, %v2643, 0
  %v2670 = vsel %vm382, %v2646, 0
  %v2672 = vsel %vm382, %v2661, 0
  %v2674 = vsel %vm382, %v2663, 0
  %v2676 = vsel %vm382, %v2665, 0
  %2678 = vmatpush.xpose.msra.mxu0 0.0
  %2679 = vmatpush.xpose.msra.mxu0 0.0
  %2680 = vmatpush.xpose.msra.mxu0 0.0
  %2681 = vmatpush.xpose.msra.mxu0 0.0
  %2682 = vmatpush.xpose.msra.mxu0 0.0
  %2683 = vmatpush.xpose.msra.mxu0 0.0
  %2684 = vmatpush.xpose.msra.mxu0 0.0
  %2685 = vmatpush.xpose.msra.mxu0 0.0
  %2686 = vmatpush.xpose.msra.mxu0 0.0
  %2687 = vmatpush.xpose.msra.mxu0 0.0
  %2688 = vmatpush.xpose.msra.mxu0 0.0
  %2689 = vmatpush.xpose.msra.mxu0 0.0
  %2690 = vmatpush.xpose.msra.mxu0 0.0
  %2691 = vmatpush.xpose.msra.mxu0 %v2676
  %2692 = vmatpush.xpose.msra.mxu0 %v2674
  %2693 = vmatpush.xpose.msra.mxu0 %v2672
  %2694 = vmatmul.f32.gmra.mxu0 %v2666
  %v2695 = vpop.f32.mrf.mxu0
  %v2696 = vadd.f32 0.0, %v2695
  %2697 = vmatmul.f32.gmra.mxu0 %v2668
  %v2698 = vpop.f32.mrf.mxu0
  %v2699 = vadd.f32 0.0, %v2698
  %2700 = vmatmul.f32.gmra.mxu0 %v2670
  %v2701 = vpop.f32.mrf.mxu0
  %v2702 = vadd.f32 0.0, %v2701
  %2703 = vdwg.mxu0
  %2707 = vrot.lane.b32.xlu0 %v2649, 96
  %v2708 = vpop.permute.xlu0 %2707
  %2709 = vrot.lane.b32.xlu0 %v2652, 96
  %v2710 = vpop.permute.xlu0 %2709
  %2711 = vrot.lane.b32.xlu0 %v2655, 96
  %v2712 = vpop.permute.xlu0 %2711
  %v2713 = vsel %vm382, %v2649, 0
  %v2715 = vsel %vm382, %v2652, 0
  %v2717 = vsel %vm382, %v2655, 0
  %v2719 = vsel %vm382, %v2708, 0
  %v2721 = vsel %vm382, %v2710, 0
  %v2723 = vsel %vm382, %v2712, 0
  %2725 = vmatpush.xpose.msra.mxu0 0.0
  %2726 = vmatpush.xpose.msra.mxu0 0.0
  %2727 = vmatpush.xpose.msra.mxu0 0.0
  %2728 = vmatpush.xpose.msra.mxu0 0.0
  %2729 = vmatpush.xpose.msra.mxu0 0.0
  %2730 = vmatpush.xpose.msra.mxu0 0.0
  %2731 = vmatpush.xpose.msra.mxu0 0.0
  %2732 = vmatpush.xpose.msra.mxu0 0.0
  %2733 = vmatpush.xpose.msra.mxu0 0.0
  %2734 = vmatpush.xpose.msra.mxu0 0.0
  %2735 = vmatpush.xpose.msra.mxu0 0.0
  %2736 = vmatpush.xpose.msra.mxu0 0.0
  %2737 = vmatpush.xpose.msra.mxu0 0.0
  %2738 = vmatpush.xpose.msra.mxu0 %v2723
  %2739 = vmatpush.xpose.msra.mxu0 %v2721
  %2740 = vmatpush.xpose.msra.mxu0 %v2719
  %2741 = vmatmul.f32.gmra.mxu0 %v2713
  %v2742 = vpop.f32.mrf.mxu0
  %v2743 = vadd.f32 0.0, %v2742
  %2744 = vmatmul.f32.gmra.mxu0 %v2715
  %v2745 = vpop.f32.mrf.mxu0
  %v2746 = vadd.f32 0.0, %v2745
  %2747 = vmatmul.f32.gmra.mxu0 %v2717
  %v2748 = vpop.f32.mrf.mxu0
  %v2749 = vadd.f32 0.0, %v2748
  %2750 = vdwg.mxu0
  %v2751 = vsel %vm151, %v2696, -1e+30
  %v2752 = vsel %vm151, %v2699, -1e+30
  %v2753 = vsel %vm151, %v2702, -1e+30
  %v2754 = vsel %vm151, %v2743, -1e+30
  %v2755 = vsel %vm151, %v2746, -1e+30
  %v2756 = vsel %vm151, %v2749, -1e+30
  %v2757 = vsel %vm474, %v2751, -inf
  %2758 = vmax.xlane.f32.xlu0 %v2757
  %v2759 = vpop.xlane.xlu0 %2758
  %v2760 = vsel %vm474, %v2752, -inf
  %2761 = vmax.xlane.f32.xlu0 %v2760
  %v2762 = vpop.xlane.xlu0 %2761
  %v2763 = vsel %vm474, %v2753, -inf
  %2764 = vmax.xlane.f32.xlu0 %v2763
  %v2765 = vpop.xlane.xlu0 %2764
  %v2766 = vsel %vm474, %v2754, -inf
  %2767 = vmax.xlane.f32.xlu0 %v2766
  %v2768 = vpop.xlane.xlu0 %2767
  %v2769 = vsel %vm474, %v2755, -inf
  %2770 = vmax.xlane.f32.xlu0 %v2769
  %v2771 = vpop.xlane.xlu0 %2770
  %v2772 = vsel %vm474, %v2756, -inf
  %2773 = vmax.xlane.f32.xlu0 %v2772
  %v2774 = vpop.xlane.xlu0 %2773
  %v2775 = vsub.f32 %v2751, %v2759
  %v2776 = vsub.f32 %v2752, %v2762
  %v2777 = vsub.f32 %v2753, %v2765
  %v2778 = vsub.f32 %v2754, %v2768
  %v2779 = vsub.f32 %v2755, %v2771
  %v2780 = vsub.f32 %v2756, %v2774
  %v2781 = vmul.f32 %v2775, 1.442695
  %v2782 = vpow.pop %v2781
  %v2783 = vmul.f32 %v2776, 1.442695
  %v2784 = vpow.pop %v2783
  %v2785 = vmul.f32 %v2777, 1.442695
  %v2786 = vpow.pop %v2785
  %v2787 = vmul.f32 %v2778, 1.442695
  %v2788 = vpow.pop %v2787
  %v2789 = vmul.f32 %v2779, 1.442695
  %v2790 = vpow.pop %v2789
  %v2791 = vmul.f32 %v2780, 1.442695
  %v2792 = vpow.pop %v2791
  %v2793 = vsel %vm474, %v2782, 0.0
  %2794 = vadd.xlane.f32.xlu0 %v2793
  %v2795 = vpop.xlane.xlu0 %2794
  %v2796 = vsel %vm474, %v2784, 0.0
  %2797 = vadd.xlane.f32.xlu0 %v2796
  %v2798 = vpop.xlane.xlu0 %2797
  %v2799 = vsel %vm474, %v2786, 0.0
  %2800 = vadd.xlane.f32.xlu0 %v2799
  %v2801 = vpop.xlane.xlu0 %2800
  %v2802 = vsel %vm474, %v2788, 0.0
  %2803 = vadd.xlane.f32.xlu0 %v2802
  %v2804 = vpop.xlane.xlu0 %2803
  %v2805 = vsel %vm474, %v2790, 0.0
  %2806 = vadd.xlane.f32.xlu0 %v2805
  %v2807 = vpop.xlane.xlu0 %2806
  %v2808 = vsel %vm474, %v2792, 0.0
  %2809 = vadd.xlane.f32.xlu0 %v2808
  %v2810 = vpop.xlane.xlu0 %2809
  %v2811 = vrcp.pop %v2795
  %v2812 = vmul.f32 %v2795, %v2811
  %v2813 = vsub.f32 1.0, %v2812
  %v2814 = vmul.f32 %v2811, %v2813
  %v2815 = vadd.f32 %v2811, %v2814
  %vm2816 = vweird.f32 %v2795
  %vm2817 = vweird.f32 %v2811
  %vm2818 = vmor %vm2816, %vm2817
  %v2819 = vsel %vm2818, %v2811, %v2815
  %v2820 = vand.u32 2147483647, %v2795
  %vm2821 = vcmp.eq.f32.partialorder %v2820, 8.507059e+37
  %v2822 = vand.u32 %v2795, 2147483648
  %v2823 = vor.u32 1.1754944e-38, %v2822
  %v2824 = vsel %vm2821, %v2823, %v2819
  %v2825 = vmul.f32 %v2782, %v2824
  %v2826 = vrcp.pop %v2798
  %v2827 = vmul.f32 %v2798, %v2826
  %v2828 = vsub.f32 1.0, %v2827
  %v2829 = vmul.f32 %v2826, %v2828
  %v2830 = vadd.f32 %v2826, %v2829
  %vm2831 = vweird.f32 %v2798
  %vm2832 = vweird.f32 %v2826
  %vm2833 = vmor %vm2831, %vm2832
  %v2834 = vsel %vm2833, %v2826, %v2830
  %v2835 = vand.u32 2147483647, %v2798
  %vm2836 = vcmp.eq.f32.partialorder %v2835, 8.507059e+37
  %v2837 = vand.u32 %v2798, 2147483648
  %v2838 = vor.u32 1.1754944e-38, %v2837
  %v2839 = vsel %vm2836, %v2838, %v2834
  %v2840 = vmul.f32 %v2784, %v2839
  %v2841 = vrcp.pop %v2801
  %v2842 = vmul.f32 %v2801, %v2841
  %v2843 = vsub.f32 1.0, %v2842
  %v2844 = vmul.f32 %v2841, %v2843
  %v2845 = vadd.f32 %v2841, %v2844
  %vm2846 = vweird.f32 %v2801
  %vm2847 = vweird.f32 %v2841
  %vm2848 = vmor %vm2846, %vm2847
  %v2849 = vsel %vm2848, %v2841, %v2845
  %v2850 = vand.u32 2147483647, %v2801
  %vm2851 = vcmp.eq.f32.partialorder %v2850, 8.507059e+37
  %v2852 = vand.u32 %v2801, 2147483648
  %v2853 = vor.u32 1.1754944e-38, %v2852
  %v2854 = vsel %vm2851, %v2853, %v2849
  %v2855 = vmul.f32 %v2786, %v2854
  %v2856 = vrcp.pop %v2804
  %v2857 = vmul.f32 %v2804, %v2856
  %v2858 = vsub.f32 1.0, %v2857
  %v2859 = vmul.f32 %v2856, %v2858
  %v2860 = vadd.f32 %v2856, %v2859
  %vm2861 = vweird.f32 %v2804
  %vm2862 = vweird.f32 %v2856
  %vm2863 = vmor %vm2861, %vm2862
  %v2864 = vsel %vm2863, %v2856, %v2860
  %v2865 = vand.u32 2147483647, %v2804
  %vm2866 = vcmp.eq.f32.partialorder %v2865, 8.507059e+37
  %v2867 = vand.u32 %v2804, 2147483648
  %v2868 = vor.u32 1.1754944e-38, %v2867
  %v2869 = vsel %vm2866, %v2868, %v2864
  %v2870 = vmul.f32 %v2788, %v2869
  %v2871 = vrcp.pop %v2807
  %v2872 = vmul.f32 %v2807, %v2871
  %v2873 = vsub.f32 1.0, %v2872
  %v2874 = vmul.f32 %v2871, %v2873
  %v2875 = vadd.f32 %v2871, %v2874
  %vm2876 = vweird.f32 %v2807
  %vm2877 = vweird.f32 %v2871
  %vm2878 = vmor %vm2876, %vm2877
  %v2879 = vsel %vm2878, %v2871, %v2875
  %v2880 = vand.u32 2147483647, %v2807
  %vm2881 = vcmp.eq.f32.partialorder %v2880, 8.507059e+37
  %v2882 = vand.u32 %v2807, 2147483648
  %v2883 = vor.u32 1.1754944e-38, %v2882
  %v2884 = vsel %vm2881, %v2883, %v2879
  %v2885 = vmul.f32 %v2790, %v2884
  %v2886 = vrcp.pop %v2810
  %v2887 = vmul.f32 %v2810, %v2886
  %v2888 = vsub.f32 1.0, %v2887
  %v2889 = vmul.f32 %v2886, %v2888
  %v2890 = vadd.f32 %v2886, %v2889
  %vm2891 = vweird.f32 %v2810
  %vm2892 = vweird.f32 %v2886
  %vm2893 = vmor %vm2891, %vm2892
  %v2894 = vsel %vm2893, %v2886, %v2890
  %v2895 = vand.u32 2147483647, %v2810
  %vm2896 = vcmp.eq.f32.partialorder %v2895, 8.507059e+37
  %v2897 = vand.u32 %v2810, 2147483648
  %v2898 = vor.u32 1.1754944e-38, %v2897
  %v2899 = vsel %vm2896, %v2898, %v2894
  %v2900 = vmul.f32 %v2792, %v2899
  %2901 = vrot.lane.b32.xlu0 %v2640, 64
  %v2902 = vpop.permute.xlu0 %2901
  %2903 = vrot.lane.b32.xlu0 %v2643, 64
  %v2904 = vpop.permute.xlu0 %2903
  %2905 = vrot.lane.b32.xlu0 %v2646, 64
  %v2906 = vpop.permute.xlu0 %2905
  %v2911 = vsel %vm474, %v2825, 0
  %v2914 = vsel %vm474, %v2840, 0
  %v2917 = vsel %vm474, %v2855, 0
  %2919 = vmatpush.msra.mxu0 0.0
  %2920 = vmatpush.msra.mxu0 0.0
  %2921 = vmatpush.msra.mxu0 0.0
  %2922 = vmatpush.msra.mxu0 0.0
  %2923 = vmatpush.msra.mxu0 0.0
  %2924 = vmatpush.msra.mxu0 0.0
  %2925 = vmatpush.msra.mxu0 0.0
  %2926 = vmatpush.msra.mxu0 0.0
  %2927 = vmatpush.msra.mxu0 0.0
  %2928 = vmatpush.msra.mxu0 0.0
  %2929 = vmatpush.msra.mxu0 0.0
  %2930 = vmatpush.msra.mxu0 0.0
  %2931 = vmatpush.msra.mxu0 0.0
  %2932 = vmatpush.msra.mxu0 %v2906
  %2933 = vmatpush.msra.mxu0 %v2904
  %2934 = vmatpush.msra.mxu0 %v2902
  %2935 = vmatmul.f32.gmra.mxu0 %v2911
  %v2936 = vpop.f32.mrf.mxu0
  %v2937 = vadd.f32 0.0, %v2936
  %2938 = vmatmul.f32.gmra.mxu0 %v2914
  %v2939 = vpop.f32.mrf.mxu0
  %v2940 = vadd.f32 0.0, %v2939
  %2941 = vmatmul.f32.gmra.mxu0 %v2917
  %v2942 = vpop.f32.mrf.mxu0
  %v2943 = vadd.f32 0.0, %v2942
  %2944 = vdwg.mxu0
  %2945 = vrot.lane.b32.xlu0 %v2649, 64
  %v2946 = vpop.permute.xlu0 %2945
  %2947 = vrot.lane.b32.xlu0 %v2652, 64
  %v2948 = vpop.permute.xlu0 %2947
  %2949 = vrot.lane.b32.xlu0 %v2655, 64
  %v2950 = vpop.permute.xlu0 %2949
  %v2955 = vsel %vm474, %v2870, 0
  %v2958 = vsel %vm474, %v2885, 0
  %v2961 = vsel %vm474, %v2900, 0
  %2963 = vmatpush.msra.mxu0 0.0
  %2964 = vmatpush.msra.mxu0 0.0
  %2965 = vmatpush.msra.mxu0 0.0
  %2966 = vmatpush.msra.mxu0 0.0
  %2967 = vmatpush.msra.mxu0 0.0
  %2968 = vmatpush.msra.mxu0 0.0
  %2969 = vmatpush.msra.mxu0 0.0
  %2970 = vmatpush.msra.mxu0 0.0
  %2971 = vmatpush.msra.mxu0 0.0
  %2972 = vmatpush.msra.mxu0 0.0
  %2973 = vmatpush.msra.mxu0 0.0
  %2974 = vmatpush.msra.mxu0 0.0
  %2975 = vmatpush.msra.mxu0 0.0
  %2976 = vmatpush.msra.mxu0 %v2950
  %2977 = vmatpush.msra.mxu0 %v2948
  %2978 = vmatpush.msra.mxu0 %v2946
  %2979 = vmatmul.f32.gmra.mxu0 %v2955
  %v2980 = vpop.f32.mrf.mxu0
  %v2981 = vadd.f32 0.0, %v2980
  %2982 = vmatmul.f32.gmra.mxu0 %v2958
  %v2983 = vpop.f32.mrf.mxu0
  %v2984 = vadd.f32 0.0, %v2983
  %2985 = vmatmul.f32.gmra.mxu0 %v2961
  %v2986 = vpop.f32.mrf.mxu0
  %v2987 = vadd.f32 0.0, %v2986
  %2988 = vdwg.mxu0
  %2989 = vrot.lane.b32.xlu0 %v2640, 120
  %v2990 = vpop.permute.xlu0 %2989
  %2991 = vrot.lane.b32.xlu0 %v2643, 120
  %v2992 = vpop.permute.xlu0 %2991
  %2993 = vrot.lane.b32.xlu0 %v2646, 120
  %v2994 = vpop.permute.xlu0 %2993
  %2995 = vrot.lane.b32.xlu0 %v2640, 88
  %v2996 = vpop.permute.xlu0 %2995
  %2997 = vrot.lane.b32.xlu0 %v2643, 88
  %v2998 = vpop.permute.xlu0 %2997
  %2999 = vrot.lane.b32.xlu0 %v2646, 88
  %v3000 = vpop.permute.xlu0 %2999
  %v3001 = vsel %vm382, %v2990, 0
  %v3003 = vsel %vm382, %v2992, 0
  %v3005 = vsel %vm382, %v2994, 0
  %v3007 = vsel %vm382, %v2996, 0
  %v3009 = vsel %vm382, %v2998, 0
  %v3011 = vsel %vm382, %v3000, 0
  %3013 = vmatpush.xpose.msra.mxu0 0.0
  %3014 = vmatpush.xpose.msra.mxu0 0.0
  %3015 = vmatpush.xpose.msra.mxu0 0.0
  %3016 = vmatpush.xpose.msra.mxu0 0.0
  %3017 = vmatpush.xpose.msra.mxu0 0.0
  %3018 = vmatpush.xpose.msra.mxu0 0.0
  %3019 = vmatpush.xpose.msra.mxu0 0.0
  %3020 = vmatpush.xpose.msra.mxu0 0.0
  %3021 = vmatpush.xpose.msra.mxu0 0.0
  %3022 = vmatpush.xpose.msra.mxu0 0.0
  %3023 = vmatpush.xpose.msra.mxu0 0.0
  %3024 = vmatpush.xpose.msra.mxu0 0.0
  %3025 = vmatpush.xpose.msra.mxu0 0.0
  %3026 = vmatpush.xpose.msra.mxu0 %v3011
  %3027 = vmatpush.xpose.msra.mxu0 %v3009
  %3028 = vmatpush.xpose.msra.mxu0 %v3007
  %3029 = vmatmul.f32.gmra.mxu0 %v3001
  %v3030 = vpop.f32.mrf.mxu0
  %v3031 = vadd.f32 0.0, %v3030
  %3032 = vmatmul.f32.gmra.mxu0 %v3003
  %v3033 = vpop.f32.mrf.mxu0
  %v3034 = vadd.f32 0.0, %v3033
  %3035 = vmatmul.f32.gmra.mxu0 %v3005
  %v3036 = vpop.f32.mrf.mxu0
  %v3037 = vadd.f32 0.0, %v3036
  %3038 = vdwg.mxu0
  %3039 = vrot.lane.b32.xlu0 %v2649, 120
  %v3040 = vpop.permute.xlu0 %3039
  %3041 = vrot.lane.b32.xlu0 %v2652, 120
  %v3042 = vpop.permute.xlu0 %3041
  %3043 = vrot.lane.b32.xlu0 %v2655, 120
  %v3044 = vpop.permute.xlu0 %3043
  %3045 = vrot.lane.b32.xlu0 %v2649, 88
  %v3046 = vpop.permute.xlu0 %3045
  %3047 = vrot.lane.b32.xlu0 %v2652, 88
  %v3048 = vpop.permute.xlu0 %3047
  %3049 = vrot.lane.b32.xlu0 %v2655, 88
  %v3050 = vpop.permute.xlu0 %3049
  %v3051 = vsel %vm382, %v3040, 0
  %v3053 = vsel %vm382, %v3042, 0
  %v3055 = vsel %vm382, %v3044, 0
  %v3057 = vsel %vm382, %v3046, 0
  %v3059 = vsel %vm382, %v3048, 0
  %v3061 = vsel %vm382, %v3050, 0
  %3063 = vmatpush.xpose.msra.mxu0 0.0
  %3064 = vmatpush.xpose.msra.mxu0 0.0
  %3065 = vmatpush.xpose.msra.mxu0 0.0
  %3066 = vmatpush.xpose.msra.mxu0 0.0
  %3067 = vmatpush.xpose.msra.mxu0 0.0
  %3068 = vmatpush.xpose.msra.mxu0 0.0
  %3069 = vmatpush.xpose.msra.mxu0 0.0
  %3070 = vmatpush.xpose.msra.mxu0 0.0
  %3071 = vmatpush.xpose.msra.mxu0 0.0
  %3072 = vmatpush.xpose.msra.mxu0 0.0
  %3073 = vmatpush.xpose.msra.mxu0 0.0
  %3074 = vmatpush.xpose.msra.mxu0 0.0
  %3075 = vmatpush.xpose.msra.mxu0 0.0
  %3076 = vmatpush.xpose.msra.mxu0 %v3061
  %3077 = vmatpush.xpose.msra.mxu0 %v3059
  %3078 = vmatpush.xpose.msra.mxu0 %v3057
  %3079 = vmatmul.f32.gmra.mxu0 %v3051
  %v3080 = vpop.f32.mrf.mxu0
  %v3081 = vadd.f32 0.0, %v3080
  %3082 = vmatmul.f32.gmra.mxu0 %v3053
  %v3083 = vpop.f32.mrf.mxu0
  %v3084 = vadd.f32 0.0, %v3083
  %3085 = vmatmul.f32.gmra.mxu0 %v3055
  %v3086 = vpop.f32.mrf.mxu0
  %v3087 = vadd.f32 0.0, %v3086
  %3088 = vdwg.mxu0
  %v3089 = vsel %vm151, %v3031, -1e+30
  %v3090 = vsel %vm151, %v3034, -1e+30
  %v3091 = vsel %vm151, %v3037, -1e+30
  %v3092 = vsel %vm151, %v3081, -1e+30
  %v3093 = vsel %vm151, %v3084, -1e+30
  %v3094 = vsel %vm151, %v3087, -1e+30
  %v3095 = vsel %vm474, %v3089, -inf
  %3096 = vmax.xlane.f32.xlu0 %v3095
  %v3097 = vpop.xlane.xlu0 %3096
  %v3098 = vsel %vm474, %v3090, -inf
  %3099 = vmax.xlane.f32.xlu0 %v3098
  %v3100 = vpop.xlane.xlu0 %3099
  %v3101 = vsel %vm474, %v3091, -inf
  %3102 = vmax.xlane.f32.xlu0 %v3101
  %v3103 = vpop.xlane.xlu0 %3102
  %v3104 = vsel %vm474, %v3092, -inf
  %3105 = vmax.xlane.f32.xlu0 %v3104
  %v3106 = vpop.xlane.xlu0 %3105
  %v3107 = vsel %vm474, %v3093, -inf
  %3108 = vmax.xlane.f32.xlu0 %v3107
  %v3109 = vpop.xlane.xlu0 %3108
  %v3110 = vsel %vm474, %v3094, -inf
  %3111 = vmax.xlane.f32.xlu0 %v3110
  %v3112 = vpop.xlane.xlu0 %3111
  %v3113 = vsub.f32 %v3089, %v3097
  %v3114 = vsub.f32 %v3090, %v3100
  %v3115 = vsub.f32 %v3091, %v3103
  %v3116 = vsub.f32 %v3092, %v3106
  %v3117 = vsub.f32 %v3093, %v3109
  %v3118 = vsub.f32 %v3094, %v3112
  %v3119 = vmul.f32 %v3113, 1.442695
  %v3120 = vpow.pop %v3119
  %v3121 = vmul.f32 %v3114, 1.442695
  %v3122 = vpow.pop %v3121
  %v3123 = vmul.f32 %v3115, 1.442695
  %v3124 = vpow.pop %v3123
  %v3125 = vmul.f32 %v3116, 1.442695
  %v3126 = vpow.pop %v3125
  %v3127 = vmul.f32 %v3117, 1.442695
  %v3128 = vpow.pop %v3127
  %v3129 = vmul.f32 %v3118, 1.442695
  %v3130 = vpow.pop %v3129
  %v3131 = vsel %vm474, %v3120, 0.0
  %3132 = vadd.xlane.f32.xlu0 %v3131
  %v3133 = vpop.xlane.xlu0 %3132
  %v3134 = vsel %vm474, %v3122, 0.0
  %3135 = vadd.xlane.f32.xlu0 %v3134
  %v3136 = vpop.xlane.xlu0 %3135
  %v3137 = vsel %vm474, %v3124, 0.0
  %3138 = vadd.xlane.f32.xlu0 %v3137
  %v3139 = vpop.xlane.xlu0 %3138
  %v3140 = vsel %vm474, %v3126, 0.0
  %3141 = vadd.xlane.f32.xlu0 %v3140
  %v3142 = vpop.xlane.xlu0 %3141
  %v3143 = vsel %vm474, %v3128, 0.0
  %3144 = vadd.xlane.f32.xlu0 %v3143
  %v3145 = vpop.xlane.xlu0 %3144
  %v3146 = vsel %vm474, %v3130, 0.0
  %3147 = vadd.xlane.f32.xlu0 %v3146
  %v3148 = vpop.xlane.xlu0 %3147
  %v3149 = vrcp.pop %v3133
  %v3150 = vmul.f32 %v3133, %v3149
  %v3151 = vsub.f32 1.0, %v3150
  %v3152 = vmul.f32 %v3149, %v3151
  %v3153 = vadd.f32 %v3149, %v3152
  %vm3154 = vweird.f32 %v3133
  %vm3155 = vweird.f32 %v3149
  %vm3156 = vmor %vm3154, %vm3155
  %v3157 = vsel %vm3156, %v3149, %v3153
  %v3158 = vand.u32 2147483647, %v3133
  %vm3159 = vcmp.eq.f32.partialorder %v3158, 8.507059e+37
  %v3160 = vand.u32 %v3133, 2147483648
  %v3161 = vor.u32 1.1754944e-38, %v3160
  %v3162 = vsel %vm3159, %v3161, %v3157
  %v3163 = vmul.f32 %v3120, %v3162
  %v3164 = vrcp.pop %v3136
  %v3165 = vmul.f32 %v3136, %v3164
  %v3166 = vsub.f32 1.0, %v3165
  %v3167 = vmul.f32 %v3164, %v3166
  %v3168 = vadd.f32 %v3164, %v3167
  %vm3169 = vweird.f32 %v3136
  %vm3170 = vweird.f32 %v3164
  %vm3171 = vmor %vm3169, %vm3170
  %v3172 = vsel %vm3171, %v3164, %v3168
  %v3173 = vand.u32 2147483647, %v3136
  %vm3174 = vcmp.eq.f32.partialorder %v3173, 8.507059e+37
  %v3175 = vand.u32 %v3136, 2147483648
  %v3176 = vor.u32 1.1754944e-38, %v3175
  %v3177 = vsel %vm3174, %v3176, %v3172
  %v3178 = vmul.f32 %v3122, %v3177
  %v3179 = vrcp.pop %v3139
  %v3180 = vmul.f32 %v3139, %v3179
  %v3181 = vsub.f32 1.0, %v3180
  %v3182 = vmul.f32 %v3179, %v3181
  %v3183 = vadd.f32 %v3179, %v3182
  %vm3184 = vweird.f32 %v3139
  %vm3185 = vweird.f32 %v3179
  %vm3186 = vmor %vm3184, %vm3185
  %v3187 = vsel %vm3186, %v3179, %v3183
  %v3188 = vand.u32 2147483647, %v3139
  %vm3189 = vcmp.eq.f32.partialorder %v3188, 8.507059e+37
  %v3190 = vand.u32 %v3139, 2147483648
  %v3191 = vor.u32 1.1754944e-38, %v3190
  %v3192 = vsel %vm3189, %v3191, %v3187
  %v3193 = vmul.f32 %v3124, %v3192
  %v3194 = vrcp.pop %v3142
  %v3195 = vmul.f32 %v3142, %v3194
  %v3196 = vsub.f32 1.0, %v3195
  %v3197 = vmul.f32 %v3194, %v3196
  %v3198 = vadd.f32 %v3194, %v3197
  %vm3199 = vweird.f32 %v3142
  %vm3200 = vweird.f32 %v3194
  %vm3201 = vmor %vm3199, %vm3200
  %v3202 = vsel %vm3201, %v3194, %v3198
  %v3203 = vand.u32 2147483647, %v3142
  %vm3204 = vcmp.eq.f32.partialorder %v3203, 8.507059e+37
  %v3205 = vand.u32 %v3142, 2147483648
  %v3206 = vor.u32 1.1754944e-38, %v3205
  %v3207 = vsel %vm3204, %v3206, %v3202
  %v3208 = vmul.f32 %v3126, %v3207
  %v3209 = vrcp.pop %v3145
  %v3210 = vmul.f32 %v3145, %v3209
  %v3211 = vsub.f32 1.0, %v3210
  %v3212 = vmul.f32 %v3209, %v3211
  %v3213 = vadd.f32 %v3209, %v3212
  %vm3214 = vweird.f32 %v3145
  %vm3215 = vweird.f32 %v3209
  %vm3216 = vmor %vm3214, %vm3215
  %v3217 = vsel %vm3216, %v3209, %v3213
  %v3218 = vand.u32 2147483647, %v3145
  %vm3219 = vcmp.eq.f32.partialorder %v3218, 8.507059e+37
  %v3220 = vand.u32 %v3145, 2147483648
  %v3221 = vor.u32 1.1754944e-38, %v3220
  %v3222 = vsel %vm3219, %v3221, %v3217
  %v3223 = vmul.f32 %v3128, %v3222
  %v3224 = vrcp.pop %v3148
  %v3225 = vmul.f32 %v3148, %v3224
  %v3226 = vsub.f32 1.0, %v3225
  %v3227 = vmul.f32 %v3224, %v3226
  %v3228 = vadd.f32 %v3224, %v3227
  %vm3229 = vweird.f32 %v3148
  %vm3230 = vweird.f32 %v3224
  %vm3231 = vmor %vm3229, %vm3230
  %v3232 = vsel %vm3231, %v3224, %v3228
  %v3233 = vand.u32 2147483647, %v3148
  %vm3234 = vcmp.eq.f32.partialorder %v3233, 8.507059e+37
  %v3235 = vand.u32 %v3148, 2147483648
  %v3236 = vor.u32 1.1754944e-38, %v3235
  %v3237 = vsel %vm3234, %v3236, %v3232
  %v3238 = vmul.f32 %v3130, %v3237
  %3239 = vrot.lane.b32.xlu0 %v2640, 56
  %v3240 = vpop.permute.xlu0 %3239
  %3241 = vrot.lane.b32.xlu0 %v2643, 56
  %v3242 = vpop.permute.xlu0 %3241
  %3243 = vrot.lane.b32.xlu0 %v2646, 56
  %v3244 = vpop.permute.xlu0 %3243
  %v3249 = vsel %vm474, %v3163, 0
  %v3252 = vsel %vm474, %v3178, 0
  %v3255 = vsel %vm474, %v3193, 0
  %3257 = vmatpush.msra.mxu0 0.0
  %3258 = vmatpush.msra.mxu0 0.0
  %3259 = vmatpush.msra.mxu0 0.0
  %3260 = vmatpush.msra.mxu0 0.0
  %3261 = vmatpush.msra.mxu0 0.0
  %3262 = vmatpush.msra.mxu0 0.0
  %3263 = vmatpush.msra.mxu0 0.0
  %3264 = vmatpush.msra.mxu0 0.0
  %3265 = vmatpush.msra.mxu0 0.0
  %3266 = vmatpush.msra.mxu0 0.0
  %3267 = vmatpush.msra.mxu0 0.0
  %3268 = vmatpush.msra.mxu0 0.0
  %3269 = vmatpush.msra.mxu0 0.0
  %3270 = vmatpush.msra.mxu0 %v3244
  %3271 = vmatpush.msra.mxu0 %v3242
  %3272 = vmatpush.msra.mxu0 %v3240
  %3273 = vmatmul.f32.gmra.mxu0 %v3249
  %v3274 = vpop.f32.mrf.mxu0
  %v3275 = vadd.f32 0.0, %v3274
  %3276 = vmatmul.f32.gmra.mxu0 %v3252
  %v3277 = vpop.f32.mrf.mxu0
  %v3278 = vadd.f32 0.0, %v3277
  %3279 = vmatmul.f32.gmra.mxu0 %v3255
  %v3280 = vpop.f32.mrf.mxu0
  %v3281 = vadd.f32 0.0, %v3280
  %3282 = vdwg.mxu0
  %3283 = vrot.lane.b32.xlu0 %v2649, 56
  %v3284 = vpop.permute.xlu0 %3283
  %3285 = vrot.lane.b32.xlu0 %v2652, 56
  %v3286 = vpop.permute.xlu0 %3285
  %3287 = vrot.lane.b32.xlu0 %v2655, 56
  %v3288 = vpop.permute.xlu0 %3287
  %v3293 = vsel %vm474, %v3208, 0
  %v3296 = vsel %vm474, %v3223, 0
  %v3299 = vsel %vm474, %v3238, 0
  %3301 = vmatpush.msra.mxu0 0.0
  %3302 = vmatpush.msra.mxu0 0.0
  %3303 = vmatpush.msra.mxu0 0.0
  %3304 = vmatpush.msra.mxu0 0.0
  %3305 = vmatpush.msra.mxu0 0.0
  %3306 = vmatpush.msra.mxu0 0.0
  %3307 = vmatpush.msra.mxu0 0.0
  %3308 = vmatpush.msra.mxu0 0.0
  %3309 = vmatpush.msra.mxu0 0.0
  %3310 = vmatpush.msra.mxu0 0.0
  %3311 = vmatpush.msra.mxu0 0.0
  %3312 = vmatpush.msra.mxu0 0.0
  %3313 = vmatpush.msra.mxu0 0.0
  %3314 = vmatpush.msra.mxu0 %v3288
  %3315 = vmatpush.msra.mxu0 %v3286
  %3316 = vmatpush.msra.mxu0 %v3284
  %3317 = vmatmul.f32.gmra.mxu0 %v3293
  %v3318 = vpop.f32.mrf.mxu0
  %v3319 = vadd.f32 0.0, %v3318
  %3320 = vmatmul.f32.gmra.mxu0 %v3296
  %v3321 = vpop.f32.mrf.mxu0
  %v3322 = vadd.f32 0.0, %v3321
  %3323 = vmatmul.f32.gmra.mxu0 %v3299
  %v3324 = vpop.f32.mrf.mxu0
  %v3325 = vadd.f32 0.0, %v3324
  %3326 = vdwg.mxu0
  %3327 = vrot.lane.b32.xlu0 %v2640, 112
  %v3328 = vpop.permute.xlu0 %3327
  %3329 = vrot.lane.b32.xlu0 %v2643, 112
  %v3330 = vpop.permute.xlu0 %3329
  %3331 = vrot.lane.b32.xlu0 %v2646, 112
  %v3332 = vpop.permute.xlu0 %3331
  %3333 = vrot.lane.b32.xlu0 %v2640, 80
  %v3334 = vpop.permute.xlu0 %3333
  %3335 = vrot.lane.b32.xlu0 %v2643, 80
  %v3336 = vpop.permute.xlu0 %3335
  %3337 = vrot.lane.b32.xlu0 %v2646, 80
  %v3338 = vpop.permute.xlu0 %3337
  %v3339 = vsel %vm382, %v3328, 0
  %v3341 = vsel %vm382, %v3330, 0
  %v3343 = vsel %vm382, %v3332, 0
  %v3345 = vsel %vm382, %v3334, 0
  %v3347 = vsel %vm382, %v3336, 0
  %v3349 = vsel %vm382, %v3338, 0
  %3351 = vmatpush.xpose.msra.mxu0 0.0
  %3352 = vmatpush.xpose.msra.mxu0 0.0
  %3353 = vmatpush.xpose.msra.mxu0 0.0
  %3354 = vmatpush.xpose.msra.mxu0 0.0
  %3355 = vmatpush.xpose.msra.mxu0 0.0
  %3356 = vmatpush.xpose.msra.mxu0 0.0
  %3357 = vmatpush.xpose.msra.mxu0 0.0
  %3358 = vmatpush.xpose.msra.mxu0 0.0
  %3359 = vmatpush.xpose.msra.mxu0 0.0
  %3360 = vmatpush.xpose.msra.mxu0 0.0
  %3361 = vmatpush.xpose.msra.mxu0 0.0
  %3362 = vmatpush.xpose.msra.mxu0 0.0
  %3363 = vmatpush.xpose.msra.mxu0 0.0
  %3364 = vmatpush.xpose.msra.mxu0 %v3349
  %3365 = vmatpush.xpose.msra.mxu0 %v3347
  %3366 = vmatpush.xpose.msra.mxu0 %v3345
  %3367 = vmatmul.f32.gmra.mxu0 %v3339
  %v3368 = vpop.f32.mrf.mxu0
  %v3369 = vadd.f32 0.0, %v3368
  %3370 = vmatmul.f32.gmra.mxu0 %v3341
  %v3371 = vpop.f32.mrf.mxu0
  %v3372 = vadd.f32 0.0, %v3371
  %3373 = vmatmul.f32.gmra.mxu0 %v3343
  %v3374 = vpop.f32.mrf.mxu0
  %v3375 = vadd.f32 0.0, %v3374
  %3376 = vdwg.mxu0
  %3377 = vrot.lane.b32.xlu0 %v2649, 112
  %v3378 = vpop.permute.xlu0 %3377
  %3379 = vrot.lane.b32.xlu0 %v2652, 112
  %v3380 = vpop.permute.xlu0 %3379
  %3381 = vrot.lane.b32.xlu0 %v2655, 112
  %v3382 = vpop.permute.xlu0 %3381
  %3383 = vrot.lane.b32.xlu0 %v2649, 80
  %v3384 = vpop.permute.xlu0 %3383
  %3385 = vrot.lane.b32.xlu0 %v2652, 80
  %v3386 = vpop.permute.xlu0 %3385
  %3387 = vrot.lane.b32.xlu0 %v2655, 80
  %v3388 = vpop.permute.xlu0 %3387
  %v3389 = vsel %vm382, %v3378, 0
  %v3391 = vsel %vm382, %v3380, 0
  %v3393 = vsel %vm382, %v3382, 0
  %v3395 = vsel %vm382, %v3384, 0
  %v3397 = vsel %vm382, %v3386, 0
  %v3399 = vsel %vm382, %v3388, 0
  %3401 = vmatpush.xpose.msra.mxu0 0.0
  %3402 = vmatpush.xpose.msra.mxu0 0.0
  %3403 = vmatpush.xpose.msra.mxu0 0.0
  %3404 = vmatpush.xpose.msra.mxu0 0.0
  %3405 = vmatpush.xpose.msra.mxu0 0.0
  %3406 = vmatpush.xpose.msra.mxu0 0.0
  %3407 = vmatpush.xpose.msra.mxu0 0.0
  %3408 = vmatpush.xpose.msra.mxu0 0.0
  %3409 = vmatpush.xpose.msra.mxu0 0.0
  %3410 = vmatpush.xpose.msra.mxu0 0.0
  %3411 = vmatpush.xpose.msra.mxu0 0.0
  %3412 = vmatpush.xpose.msra.mxu0 0.0
  %3413 = vmatpush.xpose.msra.mxu0 0.0
  %3414 = vmatpush.xpose.msra.mxu0 %v3399
  %3415 = vmatpush.xpose.msra.mxu0 %v3397
  %3416 = vmatpush.xpose.msra.mxu0 %v3395
  %3417 = vmatmul.f32.gmra.mxu0 %v3389
  %v3418 = vpop.f32.mrf.mxu0
  %v3419 = vadd.f32 0.0, %v3418
  %3420 = vmatmul.f32.gmra.mxu0 %v3391
  %v3421 = vpop.f32.mrf.mxu0
  %v3422 = vadd.f32 0.0, %v3421
  %3423 = vmatmul.f32.gmra.mxu0 %v3393
  %v3424 = vpop.f32.mrf.mxu0
  %v3425 = vadd.f32 0.0, %v3424
  %3426 = vdwg.mxu0
  %v3427 = vsel %vm151, %v3369, -1e+30
  %v3428 = vsel %vm151, %v3372, -1e+30
  %v3429 = vsel %vm151, %v3375, -1e+30
  %v3430 = vsel %vm151, %v3419, -1e+30
  %v3431 = vsel %vm151, %v3422, -1e+30
  %v3432 = vsel %vm151, %v3425, -1e+30
  %v3433 = vsel %vm474, %v3427, -inf
  %3434 = vmax.xlane.f32.xlu0 %v3433
  %v3435 = vpop.xlane.xlu0 %3434
  %v3436 = vsel %vm474, %v3428, -inf
  %3437 = vmax.xlane.f32.xlu0 %v3436
  %v3438 = vpop.xlane.xlu0 %3437
  %v3439 = vsel %vm474, %v3429, -inf
  %3440 = vmax.xlane.f32.xlu0 %v3439
  %v3441 = vpop.xlane.xlu0 %3440
  %v3442 = vsel %vm474, %v3430, -inf
  %3443 = vmax.xlane.f32.xlu0 %v3442
  %v3444 = vpop.xlane.xlu0 %3443
  %v3445 = vsel %vm474, %v3431, -inf
  %3446 = vmax.xlane.f32.xlu0 %v3445
  %v3447 = vpop.xlane.xlu0 %3446
  %v3448 = vsel %vm474, %v3432, -inf
  %3449 = vmax.xlane.f32.xlu0 %v3448
  %v3450 = vpop.xlane.xlu0 %3449
  %v3451 = vsub.f32 %v3427, %v3435
  %v3452 = vsub.f32 %v3428, %v3438
  %v3453 = vsub.f32 %v3429, %v3441
  %v3454 = vsub.f32 %v3430, %v3444
  %v3455 = vsub.f32 %v3431, %v3447
  %v3456 = vsub.f32 %v3432, %v3450
  %v3457 = vmul.f32 %v3451, 1.442695
  %v3458 = vpow.pop %v3457
  %v3459 = vmul.f32 %v3452, 1.442695
  %v3460 = vpow.pop %v3459
  %v3461 = vmul.f32 %v3453, 1.442695
  %v3462 = vpow.pop %v3461
  %v3463 = vmul.f32 %v3454, 1.442695
  %v3464 = vpow.pop %v3463
  %v3465 = vmul.f32 %v3455, 1.442695
  %v3466 = vpow.pop %v3465
  %v3467 = vmul.f32 %v3456, 1.442695
  %v3468 = vpow.pop %v3467
  %v3469 = vsel %vm474, %v3458, 0.0
  %3470 = vadd.xlane.f32.xlu0 %v3469
  %v3471 = vpop.xlane.xlu0 %3470
  %v3472 = vsel %vm474, %v3460, 0.0
  %3473 = vadd.xlane.f32.xlu0 %v3472
  %v3474 = vpop.xlane.xlu0 %3473
  %v3475 = vsel %vm474, %v3462, 0.0
  %3476 = vadd.xlane.f32.xlu0 %v3475
  %v3477 = vpop.xlane.xlu0 %3476
  %v3478 = vsel %vm474, %v3464, 0.0
  %3479 = vadd.xlane.f32.xlu0 %v3478
  %v3480 = vpop.xlane.xlu0 %3479
  %v3481 = vsel %vm474, %v3466, 0.0
  %3482 = vadd.xlane.f32.xlu0 %v3481
  %v3483 = vpop.xlane.xlu0 %3482
  %v3484 = vsel %vm474, %v3468, 0.0
  %3485 = vadd.xlane.f32.xlu0 %v3484
  %v3486 = vpop.xlane.xlu0 %3485
  %v3487 = vrcp.pop %v3471
  %v3488 = vmul.f32 %v3471, %v3487
  %v3489 = vsub.f32 1.0, %v3488
  %v3490 = vmul.f32 %v3487, %v3489
  %v3491 = vadd.f32 %v3487, %v3490
  %vm3492 = vweird.f32 %v3471
  %vm3493 = vweird.f32 %v3487
  %vm3494 = vmor %vm3492, %vm3493
  %v3495 = vsel %vm3494, %v3487, %v3491
  %v3496 = vand.u32 2147483647, %v3471
  %vm3497 = vcmp.eq.f32.partialorder %v3496, 8.507059e+37
  %v3498 = vand.u32 %v3471, 2147483648
  %v3499 = vor.u32 1.1754944e-38, %v3498
  %v3500 = vsel %vm3497, %v3499, %v3495
  %v3501 = vmul.f32 %v3458, %v3500
  %v3502 = vrcp.pop %v3474
  %v3503 = vmul.f32 %v3474, %v3502
  %v3504 = vsub.f32 1.0, %v3503
  %v3505 = vmul.f32 %v3502, %v3504
  %v3506 = vadd.f32 %v3502, %v3505
  %vm3507 = vweird.f32 %v3474
  %vm3508 = vweird.f32 %v3502
  %vm3509 = vmor %vm3507, %vm3508
  %v3510 = vsel %vm3509, %v3502, %v3506
  %v3511 = vand.u32 2147483647, %v3474
  %vm3512 = vcmp.eq.f32.partialorder %v3511, 8.507059e+37
  %v3513 = vand.u32 %v3474, 2147483648
  %v3514 = vor.u32 1.1754944e-38, %v3513
  %v3515 = vsel %vm3512, %v3514, %v3510
  %v3516 = vmul.f32 %v3460, %v3515
  %v3517 = vrcp.pop %v3477
  %v3518 = vmul.f32 %v3477, %v3517
  %v3519 = vsub.f32 1.0, %v3518
  %v3520 = vmul.f32 %v3517, %v3519
  %v3521 = vadd.f32 %v3517, %v3520
  %vm3522 = vweird.f32 %v3477
  %vm3523 = vweird.f32 %v3517
  %vm3524 = vmor %vm3522, %vm3523
  %v3525 = vsel %vm3524, %v3517, %v3521
  %v3526 = vand.u32 2147483647, %v3477
  %vm3527 = vcmp.eq.f32.partialorder %v3526, 8.507059e+37
  %v3528 = vand.u32 %v3477, 2147483648
  %v3529 = vor.u32 1.1754944e-38, %v3528
  %v3530 = vsel %vm3527, %v3529, %v3525
  %v3531 = vmul.f32 %v3462, %v3530
  %v3532 = vrcp.pop %v3480
  %v3533 = vmul.f32 %v3480, %v3532
  %v3534 = vsub.f32 1.0, %v3533
  %v3535 = vmul.f32 %v3532, %v3534
  %v3536 = vadd.f32 %v3532, %v3535
  %vm3537 = vweird.f32 %v3480
  %vm3538 = vweird.f32 %v3532
  %vm3539 = vmor %vm3537, %vm3538
  %v3540 = vsel %vm3539, %v3532, %v3536
  %v3541 = vand.u32 2147483647, %v3480
  %vm3542 = vcmp.eq.f32.partialorder %v3541, 8.507059e+37
  %v3543 = vand.u32 %v3480, 2147483648
  %v3544 = vor.u32 1.1754944e-38, %v3543
  %v3545 = vsel %vm3542, %v3544, %v3540
  %v3546 = vmul.f32 %v3464, %v3545
  %v3547 = vrcp.pop %v3483
  %v3548 = vmul.f32 %v3483, %v3547
  %v3549 = vsub.f32 1.0, %v3548
  %v3550 = vmul.f32 %v3547, %v3549
  %v3551 = vadd.f32 %v3547, %v3550
  %vm3552 = vweird.f32 %v3483
  %vm3553 = vweird.f32 %v3547
  %vm3554 = vmor %vm3552, %vm3553
  %v3555 = vsel %vm3554, %v3547, %v3551
  %v3556 = vand.u32 2147483647, %v3483
  %vm3557 = vcmp.eq.f32.partialorder %v3556, 8.507059e+37
  %v3558 = vand.u32 %v3483, 2147483648
  %v3559 = vor.u32 1.1754944e-38, %v3558
  %v3560 = vsel %vm3557, %v3559, %v3555
  %v3561 = vmul.f32 %v3466, %v3560
  %v3562 = vrcp.pop %v3486
  %v3563 = vmul.f32 %v3486, %v3562
  %v3564 = vsub.f32 1.0, %v3563
  %v3565 = vmul.f32 %v3562, %v3564
  %v3566 = vadd.f32 %v3562, %v3565
  %vm3567 = vweird.f32 %v3486
  %vm3568 = vweird.f32 %v3562
  %vm3569 = vmor %vm3567, %vm3568
  %v3570 = vsel %vm3569, %v3562, %v3566
  %v3571 = vand.u32 2147483647, %v3486
  %vm3572 = vcmp.eq.f32.partialorder %v3571, 8.507059e+37
  %v3573 = vand.u32 %v3486, 2147483648
  %v3574 = vor.u32 1.1754944e-38, %v3573
  %v3575 = vsel %vm3572, %v3574, %v3570
  %v3576 = vmul.f32 %v3468, %v3575
  %3577 = vrot.lane.b32.xlu0 %v2640, 48
  %v3578 = vpop.permute.xlu0 %3577
  %3579 = vrot.lane.b32.xlu0 %v2643, 48
  %v3580 = vpop.permute.xlu0 %3579
  %3581 = vrot.lane.b32.xlu0 %v2646, 48
  %v3582 = vpop.permute.xlu0 %3581
  %v3587 = vsel %vm474, %v3501, 0
  %v3590 = vsel %vm474, %v3516, 0
  %v3593 = vsel %vm474, %v3531, 0
  %3595 = vmatpush.msra.mxu0 0.0
  %3596 = vmatpush.msra.mxu0 0.0
  %3597 = vmatpush.msra.mxu0 0.0
  %3598 = vmatpush.msra.mxu0 0.0
  %3599 = vmatpush.msra.mxu0 0.0
  %3600 = vmatpush.msra.mxu0 0.0
  %3601 = vmatpush.msra.mxu0 0.0
  %3602 = vmatpush.msra.mxu0 0.0
  %3603 = vmatpush.msra.mxu0 0.0
  %3604 = vmatpush.msra.mxu0 0.0
  %3605 = vmatpush.msra.mxu0 0.0
  %3606 = vmatpush.msra.mxu0 0.0
  %3607 = vmatpush.msra.mxu0 0.0
  %3608 = vmatpush.msra.mxu0 %v3582
  %3609 = vmatpush.msra.mxu0 %v3580
  %3610 = vmatpush.msra.mxu0 %v3578
  %3611 = vmatmul.f32.gmra.mxu0 %v3587
  %v3612 = vpop.f32.mrf.mxu0
  %v3613 = vadd.f32 0.0, %v3612
  %3614 = vmatmul.f32.gmra.mxu0 %v3590
  %v3615 = vpop.f32.mrf.mxu0
  %v3616 = vadd.f32 0.0, %v3615
  %3617 = vmatmul.f32.gmra.mxu0 %v3593
  %v3618 = vpop.f32.mrf.mxu0
  %v3619 = vadd.f32 0.0, %v3618
  %3620 = vdwg.mxu0
  %3621 = vrot.lane.b32.xlu0 %v2649, 48
  %v3622 = vpop.permute.xlu0 %3621
  %3623 = vrot.lane.b32.xlu0 %v2652, 48
  %v3624 = vpop.permute.xlu0 %3623
  %3625 = vrot.lane.b32.xlu0 %v2655, 48
  %v3626 = vpop.permute.xlu0 %3625
  %v3631 = vsel %vm474, %v3546, 0
  %v3634 = vsel %vm474, %v3561, 0
  %v3637 = vsel %vm474, %v3576, 0
  %3639 = vmatpush.msra.mxu0 0.0
  %3640 = vmatpush.msra.mxu0 0.0
  %3641 = vmatpush.msra.mxu0 0.0
  %3642 = vmatpush.msra.mxu0 0.0
  %3643 = vmatpush.msra.mxu0 0.0
  %3644 = vmatpush.msra.mxu0 0.0
  %3645 = vmatpush.msra.mxu0 0.0
  %3646 = vmatpush.msra.mxu0 0.0
  %3647 = vmatpush.msra.mxu0 0.0
  %3648 = vmatpush.msra.mxu0 0.0
  %3649 = vmatpush.msra.mxu0 0.0
  %3650 = vmatpush.msra.mxu0 0.0
  %3651 = vmatpush.msra.mxu0 0.0
  %3652 = vmatpush.msra.mxu0 %v3626
  %3653 = vmatpush.msra.mxu0 %v3624
  %3654 = vmatpush.msra.mxu0 %v3622
  %3655 = vmatmul.f32.gmra.mxu0 %v3631
  %v3656 = vpop.f32.mrf.mxu0
  %v3657 = vadd.f32 0.0, %v3656
  %3658 = vmatmul.f32.gmra.mxu0 %v3634
  %v3659 = vpop.f32.mrf.mxu0
  %v3660 = vadd.f32 0.0, %v3659
  %3661 = vmatmul.f32.gmra.mxu0 %v3637
  %v3662 = vpop.f32.mrf.mxu0
  %v3663 = vadd.f32 0.0, %v3662
  %3664 = vdwg.mxu0
  %3665 = vrot.lane.b32.xlu0 %v2640, 104
  %v3666 = vpop.permute.xlu0 %3665
  %3667 = vrot.lane.b32.xlu0 %v2643, 104
  %v3668 = vpop.permute.xlu0 %3667
  %3669 = vrot.lane.b32.xlu0 %v2646, 104
  %v3670 = vpop.permute.xlu0 %3669
  %3671 = vrot.lane.b32.xlu0 %v2640, 72
  %v3672 = vpop.permute.xlu0 %3671
  %3673 = vrot.lane.b32.xlu0 %v2643, 72
  %v3674 = vpop.permute.xlu0 %3673
  %3675 = vrot.lane.b32.xlu0 %v2646, 72
  %v3676 = vpop.permute.xlu0 %3675
  %v3677 = vsel %vm382, %v3666, 0
  %v3679 = vsel %vm382, %v3668, 0
  %v3681 = vsel %vm382, %v3670, 0
  %v3683 = vsel %vm382, %v3672, 0
  %v3685 = vsel %vm382, %v3674, 0
  %v3687 = vsel %vm382, %v3676, 0
  %3689 = vmatpush.xpose.msra.mxu0 0.0
  %3690 = vmatpush.xpose.msra.mxu0 0.0
  %3691 = vmatpush.xpose.msra.mxu0 0.0
  %3692 = vmatpush.xpose.msra.mxu0 0.0
  %3693 = vmatpush.xpose.msra.mxu0 0.0
  %3694 = vmatpush.xpose.msra.mxu0 0.0
  %3695 = vmatpush.xpose.msra.mxu0 0.0
  %3696 = vmatpush.xpose.msra.mxu0 0.0
  %3697 = vmatpush.xpose.msra.mxu0 0.0
  %3698 = vmatpush.xpose.msra.mxu0 0.0
  %3699 = vmatpush.xpose.msra.mxu0 0.0
  %3700 = vmatpush.xpose.msra.mxu0 0.0
  %3701 = vmatpush.xpose.msra.mxu0 0.0
  %3702 = vmatpush.xpose.msra.mxu0 %v3687
  %3703 = vmatpush.xpose.msra.mxu0 %v3685
  %3704 = vmatpush.xpose.msra.mxu0 %v3683
  %3705 = vmatmul.f32.gmra.mxu0 %v3677
  %v3706 = vpop.f32.mrf.mxu0
  %v3707 = vadd.f32 0.0, %v3706
  %3708 = vmatmul.f32.gmra.mxu0 %v3679
  %v3709 = vpop.f32.mrf.mxu0
  %v3710 = vadd.f32 0.0, %v3709
  %3711 = vmatmul.f32.gmra.mxu0 %v3681
  %v3712 = vpop.f32.mrf.mxu0
  %v3713 = vadd.f32 0.0, %v3712
  %3714 = vdwg.mxu0
  %3715 = vrot.lane.b32.xlu0 %v2649, 104
  %v3716 = vpop.permute.xlu0 %3715
  %3717 = vrot.lane.b32.xlu0 %v2652, 104
  %v3718 = vpop.permute.xlu0 %3717
  %3719 = vrot.lane.b32.xlu0 %v2655, 104
  %v3720 = vpop.permute.xlu0 %3719
  %3721 = vrot.lane.b32.xlu0 %v2649, 72
  %v3722 = vpop.permute.xlu0 %3721
  %3723 = vrot.lane.b32.xlu0 %v2652, 72
  %v3724 = vpop.permute.xlu0 %3723
  %3725 = vrot.lane.b32.xlu0 %v2655, 72
  %v3726 = vpop.permute.xlu0 %3725
  %v3727 = vsel %vm382, %v3716, 0
  %v3729 = vsel %vm382, %v3718, 0
  %v3731 = vsel %vm382, %v3720, 0
  %v3733 = vsel %vm382, %v3722, 0
  %v3735 = vsel %vm382, %v3724, 0
  %v3737 = vsel %vm382, %v3726, 0
  %3739 = vmatpush.xpose.msra.mxu0 0.0
  %3740 = vmatpush.xpose.msra.mxu0 0.0
  %3741 = vmatpush.xpose.msra.mxu0 0.0
  %3742 = vmatpush.xpose.msra.mxu0 0.0
  %3743 = vmatpush.xpose.msra.mxu0 0.0
  %3744 = vmatpush.xpose.msra.mxu0 0.0
  %3745 = vmatpush.xpose.msra.mxu0 0.0
  %3746 = vmatpush.xpose.msra.mxu0 0.0
  %3747 = vmatpush.xpose.msra.mxu0 0.0
  %3748 = vmatpush.xpose.msra.mxu0 0.0
  %3749 = vmatpush.xpose.msra.mxu0 0.0
  %3750 = vmatpush.xpose.msra.mxu0 0.0
  %3751 = vmatpush.xpose.msra.mxu0 0.0
  %3752 = vmatpush.xpose.msra.mxu0 %v3737
  %3753 = vmatpush.xpose.msra.mxu0 %v3735
  %3754 = vmatpush.xpose.msra.mxu0 %v3733
  %3755 = vmatmul.f32.gmra.mxu0 %v3727
  %v3756 = vpop.f32.mrf.mxu0
  %v3757 = vadd.f32 0.0, %v3756
  %3758 = vmatmul.f32.gmra.mxu0 %v3729
  %v3759 = vpop.f32.mrf.mxu0
  %v3760 = vadd.f32 0.0, %v3759
  %3761 = vmatmul.f32.gmra.mxu0 %v3731
  %v3762 = vpop.f32.mrf.mxu0
  %v3763 = vadd.f32 0.0, %v3762
  %3764 = vdwg.mxu0
  %v3765 = vsel %vm151, %v3707, -1e+30
  %v3766 = vsel %vm151, %v3710, -1e+30
  %v3767 = vsel %vm151, %v3713, -1e+30
  %v3768 = vsel %vm151, %v3757, -1e+30
  %v3769 = vsel %vm151, %v3760, -1e+30
  %v3770 = vsel %vm151, %v3763, -1e+30
  %v3771 = vsel %vm474, %v3765, -inf
  %3772 = vmax.xlane.f32.xlu0 %v3771
  %v3773 = vpop.xlane.xlu0 %3772
  %v3774 = vsel %vm474, %v3766, -inf
  %3775 = vmax.xlane.f32.xlu0 %v3774
  %v3776 = vpop.xlane.xlu0 %3775
  %v3777 = vsel %vm474, %v3767, -inf
  %3778 = vmax.xlane.f32.xlu0 %v3777
  %v3779 = vpop.xlane.xlu0 %3778
  %v3780 = vsel %vm474, %v3768, -inf
  %3781 = vmax.xlane.f32.xlu0 %v3780
  %v3782 = vpop.xlane.xlu0 %3781
  %v3783 = vsel %vm474, %v3769, -inf
  %3784 = vmax.xlane.f32.xlu0 %v3783
  %v3785 = vpop.xlane.xlu0 %3784
  %v3786 = vsel %vm474, %v3770, -inf
  %3787 = vmax.xlane.f32.xlu0 %v3786
  %v3788 = vpop.xlane.xlu0 %3787
  %v3789 = vsub.f32 %v3765, %v3773
  %v3790 = vsub.f32 %v3766, %v3776
  %v3791 = vsub.f32 %v3767, %v3779
  %v3792 = vsub.f32 %v3768, %v3782
  %v3793 = vsub.f32 %v3769, %v3785
  %v3794 = vsub.f32 %v3770, %v3788
  %v3795 = vmul.f32 %v3789, 1.442695
  %v3796 = vpow.pop %v3795
  %v3797 = vmul.f32 %v3790, 1.442695
  %v3798 = vpow.pop %v3797
  %v3799 = vmul.f32 %v3791, 1.442695
  %v3800 = vpow.pop %v3799
  %v3801 = vmul.f32 %v3792, 1.442695
  %v3802 = vpow.pop %v3801
  %v3803 = vmul.f32 %v3793, 1.442695
  %v3804 = vpow.pop %v3803
  %v3805 = vmul.f32 %v3794, 1.442695
  %v3806 = vpow.pop %v3805
  %v3807 = vsel %vm474, %v3796, 0.0
  %3808 = vadd.xlane.f32.xlu0 %v3807
  %v3809 = vpop.xlane.xlu0 %3808
  %v3810 = vsel %vm474, %v3798, 0.0
  %3811 = vadd.xlane.f32.xlu0 %v3810
  %v3812 = vpop.xlane.xlu0 %3811
  %v3813 = vsel %vm474, %v3800, 0.0
  %3814 = vadd.xlane.f32.xlu0 %v3813
  %v3815 = vpop.xlane.xlu0 %3814
  %v3816 = vsel %vm474, %v3802, 0.0
  %3817 = vadd.xlane.f32.xlu0 %v3816
  %v3818 = vpop.xlane.xlu0 %3817
  %v3819 = vsel %vm474, %v3804, 0.0
  %3820 = vadd.xlane.f32.xlu0 %v3819
  %v3821 = vpop.xlane.xlu0 %3820
  %v3822 = vsel %vm474, %v3806, 0.0
  %3823 = vadd.xlane.f32.xlu0 %v3822
  %v3824 = vpop.xlane.xlu0 %3823
  %v3825 = vrcp.pop %v3809
  %v3826 = vmul.f32 %v3809, %v3825
  %v3827 = vsub.f32 1.0, %v3826
  %v3828 = vmul.f32 %v3825, %v3827
  %v3829 = vadd.f32 %v3825, %v3828
  %vm3830 = vweird.f32 %v3809
  %vm3831 = vweird.f32 %v3825
  %vm3832 = vmor %vm3830, %vm3831
  %v3833 = vsel %vm3832, %v3825, %v3829
  %v3834 = vand.u32 2147483647, %v3809
  %vm3835 = vcmp.eq.f32.partialorder %v3834, 8.507059e+37
  %v3836 = vand.u32 %v3809, 2147483648
  %v3837 = vor.u32 1.1754944e-38, %v3836
  %v3838 = vsel %vm3835, %v3837, %v3833
  %v3839 = vmul.f32 %v3796, %v3838
  %v3840 = vrcp.pop %v3812
  %v3841 = vmul.f32 %v3812, %v3840
  %v3842 = vsub.f32 1.0, %v3841
  %v3843 = vmul.f32 %v3840, %v3842
  %v3844 = vadd.f32 %v3840, %v3843
  %vm3845 = vweird.f32 %v3812
  %vm3846 = vweird.f32 %v3840
  %vm3847 = vmor %vm3845, %vm3846
  %v3848 = vsel %vm3847, %v3840, %v3844
  %v3849 = vand.u32 2147483647, %v3812
  %vm3850 = vcmp.eq.f32.partialorder %v3849, 8.507059e+37
  %v3851 = vand.u32 %v3812, 2147483648
  %v3852 = vor.u32 1.1754944e-38, %v3851
  %v3853 = vsel %vm3850, %v3852, %v3848
  %v3854 = vmul.f32 %v3798, %v3853
  %v3855 = vrcp.pop %v3815
  %v3856 = vmul.f32 %v3815, %v3855
  %v3857 = vsub.f32 1.0, %v3856
  %v3858 = vmul.f32 %v3855, %v3857
  %v3859 = vadd.f32 %v3855, %v3858
  %vm3860 = vweird.f32 %v3815
  %vm3861 = vweird.f32 %v3855
  %vm3862 = vmor %vm3860, %vm3861
  %v3863 = vsel %vm3862, %v3855, %v3859
  %v3864 = vand.u32 2147483647, %v3815
  %vm3865 = vcmp.eq.f32.partialorder %v3864, 8.507059e+37
  %v3866 = vand.u32 %v3815, 2147483648
  %v3867 = vor.u32 1.1754944e-38, %v3866
  %v3868 = vsel %vm3865, %v3867, %v3863
  %v3869 = vmul.f32 %v3800, %v3868
  %v3870 = vrcp.pop %v3818
  %v3871 = vmul.f32 %v3818, %v3870
  %v3872 = vsub.f32 1.0, %v3871
  %v3873 = vmul.f32 %v3870, %v3872
  %v3874 = vadd.f32 %v3870, %v3873
  %vm3875 = vweird.f32 %v3818
  %vm3876 = vweird.f32 %v3870
  %vm3877 = vmor %vm3875, %vm3876
  %v3878 = vsel %vm3877, %v3870, %v3874
  %v3879 = vand.u32 2147483647, %v3818
  %vm3880 = vcmp.eq.f32.partialorder %v3879, 8.507059e+37
  %v3881 = vand.u32 %v3818, 2147483648
  %v3882 = vor.u32 1.1754944e-38, %v3881
  %v3883 = vsel %vm3880, %v3882, %v3878
  %v3884 = vmul.f32 %v3802, %v3883
  %v3885 = vrcp.pop %v3821
  %v3886 = vmul.f32 %v3821, %v3885
  %v3887 = vsub.f32 1.0, %v3886
  %v3888 = vmul.f32 %v3885, %v3887
  %v3889 = vadd.f32 %v3885, %v3888
  %vm3890 = vweird.f32 %v3821
  %vm3891 = vweird.f32 %v3885
  %vm3892 = vmor %vm3890, %vm3891
  %v3893 = vsel %vm3892, %v3885, %v3889
  %v3894 = vand.u32 2147483647, %v3821
  %vm3895 = vcmp.eq.f32.partialorder %v3894, 8.507059e+37
  %v3896 = vand.u32 %v3821, 2147483648
  %v3897 = vor.u32 1.1754944e-38, %v3896
  %v3898 = vsel %vm3895, %v3897, %v3893
  %v3899 = vmul.f32 %v3804, %v3898
  %v3900 = vrcp.pop %v3824
  %v3901 = vmul.f32 %v3824, %v3900
  %v3902 = vsub.f32 1.0, %v3901
  %v3903 = vmul.f32 %v3900, %v3902
  %v3904 = vadd.f32 %v3900, %v3903
  %vm3905 = vweird.f32 %v3824
  %vm3906 = vweird.f32 %v3900
  %vm3907 = vmor %vm3905, %vm3906
  %v3908 = vsel %vm3907, %v3900, %v3904
  %v3909 = vand.u32 2147483647, %v3824
  %vm3910 = vcmp.eq.f32.partialorder %v3909, 8.507059e+37
  %v3911 = vand.u32 %v3824, 2147483648
  %v3912 = vor.u32 1.1754944e-38, %v3911
  %v3913 = vsel %vm3910, %v3912, %v3908
  %v3914 = vmul.f32 %v3806, %v3913
  %3915 = vrot.lane.b32.xlu0 %v2640, 40
  %v3916 = vpop.permute.xlu0 %3915
  %3917 = vrot.lane.b32.xlu0 %v2643, 40
  %v3918 = vpop.permute.xlu0 %3917
  %3919 = vrot.lane.b32.xlu0 %v2646, 40
  %v3920 = vpop.permute.xlu0 %3919
  %v3925 = vsel %vm474, %v3839, 0
  %v3928 = vsel %vm474, %v3854, 0
  %v3931 = vsel %vm474, %v3869, 0
  %3933 = vmatpush.msra.mxu0 0.0
  %3934 = vmatpush.msra.mxu0 0.0
  %3935 = vmatpush.msra.mxu0 0.0
  %3936 = vmatpush.msra.mxu0 0.0
  %3937 = vmatpush.msra.mxu0 0.0
  %3938 = vmatpush.msra.mxu0 0.0
  %3939 = vmatpush.msra.mxu0 0.0
  %3940 = vmatpush.msra.mxu0 0.0
  %3941 = vmatpush.msra.mxu0 0.0
  %3942 = vmatpush.msra.mxu0 0.0
  %3943 = vmatpush.msra.mxu0 0.0
  %3944 = vmatpush.msra.mxu0 0.0
  %3945 = vmatpush.msra.mxu0 0.0
  %3946 = vmatpush.msra.mxu0 %v3920
  %3947 = vmatpush.msra.mxu0 %v3918
  %3948 = vmatpush.msra.mxu0 %v3916
  %3949 = vmatmul.f32.gmra.mxu0 %v3925
  %v3950 = vpop.f32.mrf.mxu0
  %v3951 = vadd.f32 0.0, %v3950
  %3952 = vmatmul.f32.gmra.mxu0 %v3928
  %v3953 = vpop.f32.mrf.mxu0
  %v3954 = vadd.f32 0.0, %v3953
  %3955 = vmatmul.f32.gmra.mxu0 %v3931
  %v3956 = vpop.f32.mrf.mxu0
  %v3957 = vadd.f32 0.0, %v3956
  %3958 = vdwg.mxu0
  %3959 = vrot.lane.b32.xlu0 %v2649, 40
  %v3960 = vpop.permute.xlu0 %3959
  %3961 = vrot.lane.b32.xlu0 %v2652, 40
  %v3962 = vpop.permute.xlu0 %3961
  %3963 = vrot.lane.b32.xlu0 %v2655, 40
  %v3964 = vpop.permute.xlu0 %3963
  %v3969 = vsel %vm474, %v3884, 0
  %v3972 = vsel %vm474, %v3899, 0
  %v3975 = vsel %vm474, %v3914, 0
  %3977 = vmatpush.msra.mxu0 0.0
  %3978 = vmatpush.msra.mxu0 0.0
  %3979 = vmatpush.msra.mxu0 0.0
  %3980 = vmatpush.msra.mxu0 0.0
  %3981 = vmatpush.msra.mxu0 0.0
  %3982 = vmatpush.msra.mxu0 0.0
  %3983 = vmatpush.msra.mxu0 0.0
  %3984 = vmatpush.msra.mxu0 0.0
  %3985 = vmatpush.msra.mxu0 0.0
  %3986 = vmatpush.msra.mxu0 0.0
  %3987 = vmatpush.msra.mxu0 0.0
  %3988 = vmatpush.msra.mxu0 0.0
  %3989 = vmatpush.msra.mxu0 0.0
  %3990 = vmatpush.msra.mxu0 %v3964
  %3991 = vmatpush.msra.mxu0 %v3962
  %3992 = vmatpush.msra.mxu0 %v3960
  %3993 = vmatmul.f32.gmra.mxu0 %v3969
  %v3994 = vpop.f32.mrf.mxu0
  %v3995 = vadd.f32 0.0, %v3994
  %3996 = vmatmul.f32.gmra.mxu0 %v3972
  %v3997 = vpop.f32.mrf.mxu0
  %v3998 = vadd.f32 0.0, %v3997
  %3999 = vmatmul.f32.gmra.mxu0 %v3975
  %v4000 = vpop.f32.mrf.mxu0
  %v4001 = vadd.f32 0.0, %v4000
  %4002 = vdwg.mxu0
  %4009 = vrot.lane.b32.xlu0 %v3275, 8
  %v4010 = vpop.permute.xlu0 %4009
  %4011 = vrot.lane.b32.xlu0 %v3278, 8
  %v4012 = vpop.permute.xlu0 %4011
  %4013 = vrot.lane.b32.xlu0 %v3281, 8
  %v4014 = vpop.permute.xlu0 %4013
  %4015 = vrot.lane.b32.xlu0 %v3319, 8
  %v4016 = vpop.permute.xlu0 %4015
  %4017 = vrot.lane.b32.xlu0 %v3322, 8
  %v4018 = vpop.permute.xlu0 %4017
  %4019 = vrot.lane.b32.xlu0 %v3325, 8
  %v4020 = vpop.permute.xlu0 %4019
  %4033 = vrot.lane.b32.xlu0 %v3613, 16
  %v4034 = vpop.permute.xlu0 %4033
  %4035 = vrot.lane.b32.xlu0 %v3616, 16
  %v4036 = vpop.permute.xlu0 %4035
  %4037 = vrot.lane.b32.xlu0 %v3619, 16
  %v4038 = vpop.permute.xlu0 %4037
  %4039 = vrot.lane.b32.xlu0 %v3657, 16
  %v4040 = vpop.permute.xlu0 %4039
  %4041 = vrot.lane.b32.xlu0 %v3660, 16
  %v4042 = vpop.permute.xlu0 %4041
  %4043 = vrot.lane.b32.xlu0 %v3663, 16
  %v4044 = vpop.permute.xlu0 %4043
  %4057 = vrot.lane.b32.xlu0 %v3951, 24
  %v4058 = vpop.permute.xlu0 %4057
  %4059 = vrot.lane.b32.xlu0 %v3954, 24
  %v4060 = vpop.permute.xlu0 %4059
  %4061 = vrot.lane.b32.xlu0 %v3957, 24
  %v4062 = vpop.permute.xlu0 %4061
  %4063 = vrot.lane.b32.xlu0 %v3995, 24
  %v4064 = vpop.permute.xlu0 %4063
  %4065 = vrot.lane.b32.xlu0 %v3998, 24
  %v4066 = vpop.permute.xlu0 %4065
  %4067 = vrot.lane.b32.xlu0 %v4001, 24
  %v4068 = vpop.permute.xlu0 %4067
  %v4075 = vsel %vm382, %v2937, %v4010
  %v4076 = vsel %vm382, %v2940, %v4012
  %v4077 = vsel %vm382, %v2943, %v4014
  %v4078 = vsel %vm382, %v2981, %v4016
  %v4079 = vsel %vm382, %v2984, %v4018
  %v4080 = vsel %vm382, %v2987, %v4020
  %v4081 = vsel %vm1799, %v4075, %v4034
  %v4082 = vsel %vm1799, %v4076, %v4036
  %v4083 = vsel %vm1799, %v4077, %v4038
  %v4084 = vsel %vm1799, %v4078, %v4040
  %v4085 = vsel %vm1799, %v4079, %v4042
  %v4086 = vsel %vm1799, %v4080, %v4044
  %v4087 = vsel %vm474, %v4081, %v4058
  %v4088 = vsel %vm474, %v4082, %v4060
  %v4089 = vsel %vm474, %v4083, %v4062
  %v4090 = vsel %vm474, %v4084, %v4064
  %v4091 = vsel %vm474, %v4085, %v4066
  %v4092 = vsel %vm474, %v4086, %v4068
  %s4093 = scalar_lea.vmem %s9, 32
  %v4094 = vld [vmem:[%s4093] sm:$0xff]
  %v4095 = vld [vmem:[%s4093 + $0x8] sm:$0xff]
  %v4096 = vld [vmem:[%s4093 + $0x10] sm:$0xff]
  %v4097 = vld [vmem:[%s4093 + $0x18] sm:$0xff]
  %v4099 = vsel %vm154, %v4087, 0
  %v4102 = vsel %vm154, %v4088, 0
  %v4105 = vsel %vm154, %v4089, 0
  %v4108 = vsel %vm154, %v4090, 0
  %v4111 = vsel %vm154, %v4091, 0
  %v4114 = vsel %vm154, %v4092, 0
  %4116 = vmatpush.msra.mxu0 0.0
  %4117 = vmatpush.msra.mxu0 0.0
  %4118 = vmatpush.msra.mxu0 0.0
  %4119 = vmatpush.msra.mxu0 0.0
  %4120 = vmatpush.msra.mxu0 0.0
  %4121 = vmatpush.msra.mxu0 0.0
  %4122 = vmatpush.msra.mxu0 0.0
  %4123 = vmatpush.msra.mxu0 0.0
  %4124 = vmatpush.msra.mxu0 0.0
  %4125 = vmatpush.msra.mxu0 0.0
  %4126 = vmatpush.msra.mxu0 0.0
  %4127 = vmatpush.msra.mxu0 0.0
  %4128 = vmatpush.msra.mxu0 %v4097
  %4129 = vmatpush.msra.mxu0 %v4096
  %4130 = vmatpush.msra.mxu0 %v4095
  %4131 = vmatpush.msra.mxu0 %v4094
  %4132 = vmatmul.f32.gmra.mxu0 %v4099
  %v4133 = vpop.f32.mrf.mxu0
  %v4134 = vadd.f32 0.0, %v4133
  %4135 = vmatmul.f32.gmra.mxu0 %v4102
  %v4136 = vpop.f32.mrf.mxu0
  %v4137 = vadd.f32 0.0, %v4136
  %4138 = vmatmul.f32.gmra.mxu0 %v4105
  %v4139 = vpop.f32.mrf.mxu0
  %v4140 = vadd.f32 0.0, %v4139
  %4141 = vmatmul.f32.gmra.mxu0 %v4108
  %v4142 = vpop.f32.mrf.mxu0
  %v4143 = vadd.f32 0.0, %v4142
  %4144 = vmatmul.f32.gmra.mxu0 %v4111
  %v4145 = vpop.f32.mrf.mxu0
  %v4146 = vadd.f32 0.0, %v4145
  %4147 = vmatmul.f32.gmra.mxu0 %v4114
  %v4148 = vpop.f32.mrf.mxu0
  %v4149 = vadd.f32 0.0, %v4148
  %4150 = vdwg.mxu0
  %v4151 = vadd.f32 %v2434, %v4134
  %v4152 = vadd.f32 %v2435, %v4137
  %v4153 = vadd.f32 %v2436, %v4140
  %v4154 = vadd.f32 %v2437, %v4143
  %v4155 = vadd.f32 %v2438, %v4146
  %v4156 = vadd.f32 %v2439, %v4149
  %s4157 = scalar_lea.vmem %s10, 1
  %v4158 = vld [vmem:[%s4157] sm:$0x1]
  %v4160 = vperm.slane %v4158, 0
  %v4162 = vadd.f32 %v4151, %v4160
  %v4163 = vadd.f32 %v4152, %v4160
  %v4164 = vadd.f32 %v4153, %v4160
  %v4165 = vadd.f32 %v4154, %v4160
  %v4166 = vadd.f32 %v4155, %v4160
  %v4167 = vadd.f32 %v4156, %v4160
  %s4168 = scalar_lea.vmem %s11, 1
  %v4169 = vld [vmem:[%s4168] sm:$0x1]
  %s4170 = scalar_lea.vmem %s12, 1
  %v4171 = vld [vmem:[%s4170] sm:$0x1]
  %v4172 = vsel %vm154, %v4162, 0.0
  %4173 = vadd.xlane.f32.xlu0 %v4172
  %v4174 = vpop.xlane.xlu0 %4173
  %v4175 = vsel %vm154, %v4163, 0.0
  %4176 = vadd.xlane.f32.xlu0 %v4175
  %v4177 = vpop.xlane.xlu0 %4176
  %v4178 = vsel %vm154, %v4164, 0.0
  %4179 = vadd.xlane.f32.xlu0 %v4178
  %v4180 = vpop.xlane.xlu0 %4179
  %v4181 = vsel %vm154, %v4165, 0.0
  %4182 = vadd.xlane.f32.xlu0 %v4181
  %v4183 = vpop.xlane.xlu0 %4182
  %v4184 = vsel %vm154, %v4166, 0.0
  %4185 = vadd.xlane.f32.xlu0 %v4184
  %v4186 = vpop.xlane.xlu0 %4185
  %v4187 = vsel %vm154, %v4167, 0.0
  %4188 = vadd.xlane.f32.xlu0 %v4187
  %v4189 = vpop.xlane.xlu0 %4188
  %v4190 = vmul.f32 %v4174, %v179
  %v4191 = vmul.f32 %v4177, %v179
  %v4192 = vmul.f32 %v4180, %v179
  %v4193 = vmul.f32 %v4183, %v179
  %v4194 = vmul.f32 %v4186, %v179
  %v4195 = vmul.f32 %v4189, %v179
  %v4196 = vsub.f32 %v4162, %v4190
  %v4197 = vsub.f32 %v4163, %v4191
  %v4198 = vsub.f32 %v4164, %v4192
  %v4199 = vsub.f32 %v4165, %v4193
  %v4200 = vsub.f32 %v4166, %v4194
  %v4201 = vsub.f32 %v4167, %v4195
  %v4202 = vmul.f32 %v4196, %v4196
  %v4203 = vmul.f32 %v4197, %v4197
  %v4204 = vmul.f32 %v4198, %v4198
  %v4205 = vmul.f32 %v4199, %v4199
  %v4206 = vmul.f32 %v4200, %v4200
  %v4207 = vmul.f32 %v4201, %v4201
  %v4208 = vsel %vm154, %v4202, 0.0
  %4209 = vadd.xlane.f32.xlu0 %v4208
  %v4210 = vpop.xlane.xlu0 %4209
  %v4211 = vsel %vm154, %v4203, 0.0
  %4212 = vadd.xlane.f32.xlu0 %v4211
  %v4213 = vpop.xlane.xlu0 %4212
  %v4214 = vsel %vm154, %v4204, 0.0
  %4215 = vadd.xlane.f32.xlu0 %v4214
  %v4216 = vpop.xlane.xlu0 %4215
  %v4217 = vsel %vm154, %v4205, 0.0
  %4218 = vadd.xlane.f32.xlu0 %v4217
  %v4219 = vpop.xlane.xlu0 %4218
  %v4220 = vsel %vm154, %v4206, 0.0
  %4221 = vadd.xlane.f32.xlu0 %v4220
  %v4222 = vpop.xlane.xlu0 %4221
  %v4223 = vsel %vm154, %v4207, 0.0
  %4224 = vadd.xlane.f32.xlu0 %v4223
  %v4225 = vpop.xlane.xlu0 %4224
  %v4226 = vmul.f32 %v4210, %v179
  %v4227 = vmul.f32 %v4213, %v179
  %v4228 = vmul.f32 %v4216, %v179
  %v4229 = vmul.f32 %v4219, %v179
  %v4230 = vmul.f32 %v4222, %v179
  %v4231 = vmul.f32 %v4225, %v179
  %v4232 = vadd.f32 %v4226, 1e-12
  %v4233 = vadd.f32 %v4227, 1e-12
  %v4234 = vadd.f32 %v4228, 1e-12
  %v4235 = vadd.f32 %v4229, 1e-12
  %v4236 = vadd.f32 %v4230, 1e-12
  %v4237 = vadd.f32 %v4231, 1e-12
  %v4238 = vrsqrt.pop %v4232
  %v4239 = vmul.f32 %v4238, %v4232
  %v4240 = vmul.f32 %v4239, %v4238
  %v4241 = vmul.f32 0.5, %v4240
  %v4242 = vsub.f32 1.5, %v4241
  %v4243 = vmul.f32 %v4238, %v4242
  %vm4244 = vweird.f32 %v4232
  %vm4245 = vweird.f32 %v4238
  %vm4246 = vmor %vm4244, %vm4245
  %v4247 = vsel %vm4246, %v4238, %v4243
  %v4248 = vrsqrt.pop %v4233
  %v4249 = vmul.f32 %v4248, %v4233
  %v4250 = vmul.f32 %v4249, %v4248
  %v4251 = vmul.f32 0.5, %v4250
  %v4252 = vsub.f32 1.5, %v4251
  %v4253 = vmul.f32 %v4248, %v4252
  %vm4254 = vweird.f32 %v4233
  %vm4255 = vweird.f32 %v4248
  %vm4256 = vmor %vm4254, %vm4255
  %v4257 = vsel %vm4256, %v4248, %v4253
  %v4258 = vrsqrt.pop %v4234
  %v4259 = vmul.f32 %v4258, %v4234
  %v4260 = vmul.f32 %v4259, %v4258
  %v4261 = vmul.f32 0.5, %v4260
  %v4262 = vsub.f32 1.5, %v4261
  %v4263 = vmul.f32 %v4258, %v4262
  %vm4264 = vweird.f32 %v4234
  %vm4265 = vweird.f32 %v4258
  %vm4266 = vmor %vm4264, %vm4265
  %v4267 = vsel %vm4266, %v4258, %v4263
  %v4268 = vrsqrt.pop %v4235
  %v4269 = vmul.f32 %v4268, %v4235
  %v4270 = vmul.f32 %v4269, %v4268
  %v4271 = vmul.f32 0.5, %v4270
  %v4272 = vsub.f32 1.5, %v4271
  %v4273 = vmul.f32 %v4268, %v4272
  %vm4274 = vweird.f32 %v4235
  %vm4275 = vweird.f32 %v4268
  %vm4276 = vmor %vm4274, %vm4275
  %v4277 = vsel %vm4276, %v4268, %v4273
  %v4278 = vrsqrt.pop %v4236
  %v4279 = vmul.f32 %v4278, %v4236
  %v4280 = vmul.f32 %v4279, %v4278
  %v4281 = vmul.f32 0.5, %v4280
  %v4282 = vsub.f32 1.5, %v4281
  %v4283 = vmul.f32 %v4278, %v4282
  %vm4284 = vweird.f32 %v4236
  %vm4285 = vweird.f32 %v4278
  %vm4286 = vmor %vm4284, %vm4285
  %v4287 = vsel %vm4286, %v4278, %v4283
  %v4288 = vrsqrt.pop %v4237
  %v4289 = vmul.f32 %v4288, %v4237
  %v4290 = vmul.f32 %v4289, %v4288
  %v4291 = vmul.f32 0.5, %v4290
  %v4292 = vsub.f32 1.5, %v4291
  %v4293 = vmul.f32 %v4288, %v4292
  %vm4294 = vweird.f32 %v4237
  %vm4295 = vweird.f32 %v4288
  %vm4296 = vmor %vm4294, %vm4295
  %v4297 = vsel %vm4296, %v4288, %v4293
  %v4298 = vmul.f32 %v4196, %v4247
  %v4299 = vmul.f32 %v4197, %v4257
  %v4300 = vmul.f32 %v4198, %v4267
  %v4301 = vmul.f32 %v4199, %v4277
  %v4302 = vmul.f32 %v4200, %v4287
  %v4303 = vmul.f32 %v4201, %v4297
  %v4305 = vperm.slane %v4169, 0
  %v4307 = vmul.f32 %v4298, %v4305
  %v4308 = vmul.f32 %v4299, %v4305
  %v4309 = vmul.f32 %v4300, %v4305
  %v4310 = vmul.f32 %v4301, %v4305
  %v4311 = vmul.f32 %v4302, %v4305
  %v4312 = vmul.f32 %v4303, %v4305
  %v4314 = vperm.slane %v4171, 0
  %v4316 = vadd.f32 %v4307, %v4314
  %v4317 = vadd.f32 %v4308, %v4314
  %v4318 = vadd.f32 %v4309, %v4314
  %v4319 = vadd.f32 %v4310, %v4314
  %v4320 = vadd.f32 %v4311, %v4314
  %v4321 = vadd.f32 %v4312, %v4314
  %s4322 = scalar_lea.vmem %s13, 32
  %v4323 = vld [vmem:[%s4322] sm:$0xff]
  %v4324 = vld [vmem:[%s4322 + $0x8] sm:$0xff]
  %v4325 = vld [vmem:[%s4322 + $0x10] sm:$0xff]
  %v4326 = vld [vmem:[%s4322 + $0x18] sm:$0xff]
  %s4327 = scalar_lea.vmem %s14, 1
  %v4328 = vld [vmem:[%s4327] sm:$0x1]
  %v4330 = vperm.slane %v4328, 0
  %v4333 = vsel %vm154, %v4316, 0
  %v4336 = vsel %vm154, %v4317, 0
  %v4339 = vsel %vm154, %v4318, 0
  %v4342 = vsel %vm154, %v4319, 0
  %v4345 = vsel %vm154, %v4320, 0
  %v4348 = vsel %vm154, %v4321, 0
  %4350 = vmatpush.msra.mxu0 0.0
  %4351 = vmatpush.msra.mxu0 0.0
  %4352 = vmatpush.msra.mxu0 0.0
  %4353 = vmatpush.msra.mxu0 0.0
  %4354 = vmatpush.msra.mxu0 0.0
  %4355 = vmatpush.msra.mxu0 0.0
  %4356 = vmatpush.msra.mxu0 0.0
  %4357 = vmatpush.msra.mxu0 0.0
  %4358 = vmatpush.msra.mxu0 0.0
  %4359 = vmatpush.msra.mxu0 0.0
  %4360 = vmatpush.msra.mxu0 0.0
  %4361 = vmatpush.msra.mxu0 0.0
  %4362 = vmatpush.msra.mxu0 %v4326
  %4363 = vmatpush.msra.mxu0 %v4325
  %4364 = vmatpush.msra.mxu0 %v4324
  %4365 = vmatpush.msra.mxu0 %v4323
  %4366 = vmatmul.f32.gmra.mxu0 %v4333
  %v4367 = vpop.f32.mrf.mxu0
  %v4368 = vadd.f32 %v4330, %v4367
  %4369 = vmatmul.f32.gmra.mxu0 %v4336
  %v4370 = vpop.f32.mrf.mxu0
  %v4371 = vadd.f32 %v4330, %v4370
  %4372 = vmatmul.f32.gmra.mxu0 %v4339
  %v4373 = vpop.f32.mrf.mxu0
  %v4374 = vadd.f32 %v4330, %v4373
  %4375 = vmatmul.f32.gmra.mxu0 %v4342
  %v4376 = vpop.f32.mrf.mxu0
  %v4377 = vadd.f32 %v4330, %v4376
  %4378 = vmatmul.f32.gmra.mxu0 %v4345
  %v4379 = vpop.f32.mrf.mxu0
  %v4380 = vadd.f32 %v4330, %v4379
  %4381 = vmatmul.f32.gmra.mxu0 %v4348
  %v4382 = vpop.f32.mrf.mxu0
  %v4383 = vadd.f32 %v4330, %v4382
  %4384 = vdwg.mxu0
  %v4385 = vmul.f32 %v4368, 0.5
  %v4386 = vmul.f32 %v4371, 0.5
  %v4387 = vmul.f32 %v4374, 0.5
  %v4388 = vmul.f32 %v4377, 0.5
  %v4389 = vmul.f32 %v4380, 0.5
  %v4390 = vmul.f32 %v4383, 0.5
  %v4391 = vmul.f32 %v4368, 0.70710677
  %v4392 = vmul.f32 %v4371, 0.70710677
  %v4393 = vmul.f32 %v4374, 0.70710677
  %v4394 = vmul.f32 %v4377, 0.70710677
  %v4395 = vmul.f32 %v4380, 0.70710677
  %v4396 = vmul.f32 %v4383, 0.70710677
  %v4397 = vmul.f32 %v4391, %v4391
  %v4398 = vmin.f32 16.0, %v4397
  %v4399 = vmul.f32 %v4398, 2.1237322e-06
  %v4400 = vadd.f32 %v4399, 0.00028619796
  %v4401 = vmul.f32 %v4398, %v4400
  %v4402 = vadd.f32 %v4401, 0.0036580483
  %v4403 = vmul.f32 %v4398, %v4402
  %v4404 = vadd.f32 %v4403, 0.05243302
  %v4405 = vmul.f32 %v4398, %v4404
  %v4406 = vadd.f32 %v4405, 0.18741608
  %v4407 = vmul.f32 %v4398, %v4406
  %v4408 = vadd.f32 %v4407, 1.1283791
  %v4409 = vmul.f32 %v4391, %v4408
  %v4410 = vmul.f32 %v4398, 3.8918573e-05
  %v4411 = vadd.f32 %v4410, 0.001143296
  %v4412 = vmul.f32 %v4398, %v4411
  %v4413 = vadd.f32 %v4412, 0.014752088
  %v4414 = vmul.f32 %v4398, %v4413
  %v4415 = vadd.f32 %v4414, 0.112945676
  %v4416 = vmul.f32 %v4398, %v4415
  %v4417 = vadd.f32 %v4416, 0.4994258
  %v4418 = vmul.f32 %v4398, %v4417
  %v4419 = vadd.f32 %v4418, 1.0
  %v4420 = vrcp.pop %v4419
  %v4421 = vmul.f32 %v4419, %v4420
  %v4422 = vsub.f32 1.0, %v4421
  %v4423 = vmul.f32 %v4420, %v4422
  %v4424 = vadd.f32 %v4420, %v4423
  %vm4425 = vweird.f32 %v4419
  %vm4426 = vweird.f32 %v4420
  %vm4427 = vmor %vm4425, %vm4426
  %v4428 = vsel %vm4427, %v4420, %v4424
  %v4429 = vand.u32 2147483647, %v4419
  %vm4430 = vcmp.eq.f32.partialorder %v4429, 8.507059e+37
  %v4431 = vand.u32 %v4419, 2147483648
  %v4432 = vor.u32 1.1754944e-38, %v4431
  %v4433 = vsel %vm4430, %v4432, %v4428
  %v4434 = vmul.f32 %v4409, %v4433
  %v4435 = vmin.f32 %v4434, 1.0
  %v4436 = vmax.f32 %v4435, -1.0
  %v4437 = vmul.f32 %v4392, %v4392
  %v4438 = vmin.f32 16.0, %v4437
  %v4439 = vmul.f32 %v4438, 2.1237322e-06
  %v4440 = vadd.f32 %v4439, 0.00028619796
  %v4441 = vmul.f32 %v4438, %v4440
  %v4442 = vadd.f32 %v4441, 0.0036580483
  %v4443 = vmul.f32 %v4438, %v4442
  %v4444 = vadd.f32 %v4443, 0.05243302
  %v4445 = vmul.f32 %v4438, %v4444
  %v4446 = vadd.f32 %v4445, 0.18741608
  %v4447 = vmul.f32 %v4438, %v4446
  %v4448 = vadd.f32 %v4447, 1.1283791
  %v4449 = vmul.f32 %v4392, %v4448
  %v4450 = vmul.f32 %v4438, 3.8918573e-05
  %v4451 = vadd.f32 %v4450, 0.001143296
  %v4452 = vmul.f32 %v4438, %v4451
  %v4453 = vadd.f32 %v4452, 0.014752088
  %v4454 = vmul.f32 %v4438, %v4453
  %v4455 = vadd.f32 %v4454, 0.112945676
  %v4456 = vmul.f32 %v4438, %v4455
  %v4457 = vadd.f32 %v4456, 0.4994258
  %v4458 = vmul.f32 %v4438, %v4457
  %v4459 = vadd.f32 %v4458, 1.0
  %v4460 = vrcp.pop %v4459
  %v4461 = vmul.f32 %v4459, %v4460
  %v4462 = vsub.f32 1.0, %v4461
  %v4463 = vmul.f32 %v4460, %v4462
  %v4464 = vadd.f32 %v4460, %v4463
  %vm4465 = vweird.f32 %v4459
  %vm4466 = vweird.f32 %v4460
  %vm4467 = vmor %vm4465, %vm4466
  %v4468 = vsel %vm4467, %v4460, %v4464
  %v4469 = vand.u32 2147483647, %v4459
  %vm4470 = vcmp.eq.f32.partialorder %v4469, 8.507059e+37
  %v4471 = vand.u32 %v4459, 2147483648
  %v4472 = vor.u32 1.1754944e-38, %v4471
  %v4473 = vsel %vm4470, %v4472, %v4468
  %v4474 = vmul.f32 %v4449, %v4473
  %v4475 = vmin.f32 %v4474, 1.0
  %v4476 = vmax.f32 %v4475, -1.0
  %v4477 = vmul.f32 %v4393, %v4393
  %v4478 = vmin.f32 16.0, %v4477
  %v4479 = vmul.f32 %v4478, 2.1237322e-06
  %v4480 = vadd.f32 %v4479, 0.00028619796
  %v4481 = vmul.f32 %v4478, %v4480
  %v4482 = vadd.f32 %v4481, 0.0036580483
  %v4483 = vmul.f32 %v4478, %v4482
  %v4484 = vadd.f32 %v4483, 0.05243302
  %v4485 = vmul.f32 %v4478, %v4484
  %v4486 = vadd.f32 %v4485, 0.18741608
  %v4487 = vmul.f32 %v4478, %v4486
  %v4488 = vadd.f32 %v4487, 1.1283791
  %v4489 = vmul.f32 %v4393, %v4488
  %v4490 = vmul.f32 %v4478, 3.8918573e-05
  %v4491 = vadd.f32 %v4490, 0.001143296
  %v4492 = vmul.f32 %v4478, %v4491
  %v4493 = vadd.f32 %v4492, 0.014752088
  %v4494 = vmul.f32 %v4478, %v4493
  %v4495 = vadd.f32 %v4494, 0.112945676
  %v4496 = vmul.f32 %v4478, %v4495
  %v4497 = vadd.f32 %v4496, 0.4994258
  %v4498 = vmul.f32 %v4478, %v4497
  %v4499 = vadd.f32 %v4498, 1.0
  %v4500 = vrcp.pop %v4499
  %v4501 = vmul.f32 %v4499, %v4500
  %v4502 = vsub.f32 1.0, %v4501
  %v4503 = vmul.f32 %v4500, %v4502
  %v4504 = vadd.f32 %v4500, %v4503
  %vm4505 = vweird.f32 %v4499
  %vm4506 = vweird.f32 %v4500
  %vm4507 = vmor %vm4505, %vm4506
  %v4508 = vsel %vm4507, %v4500, %v4504
  %v4509 = vand.u32 2147483647, %v4499
  %vm4510 = vcmp.eq.f32.partialorder %v4509, 8.507059e+37
  %v4511 = vand.u32 %v4499, 2147483648
  %v4512 = vor.u32 1.1754944e-38, %v4511
  %v4513 = vsel %vm4510, %v4512, %v4508
  %v4514 = vmul.f32 %v4489, %v4513
  %v4515 = vmin.f32 %v4514, 1.0
  %v4516 = vmax.f32 %v4515, -1.0
  %v4517 = vmul.f32 %v4394, %v4394
  %v4518 = vmin.f32 16.0, %v4517
  %v4519 = vmul.f32 %v4518, 2.1237322e-06
  %v4520 = vadd.f32 %v4519, 0.00028619796
  %v4521 = vmul.f32 %v4518, %v4520
  %v4522 = vadd.f32 %v4521, 0.0036580483
  %v4523 = vmul.f32 %v4518, %v4522
  %v4524 = vadd.f32 %v4523, 0.05243302
  %v4525 = vmul.f32 %v4518, %v4524
  %v4526 = vadd.f32 %v4525, 0.18741608
  %v4527 = vmul.f32 %v4518, %v4526
  %v4528 = vadd.f32 %v4527, 1.1283791
  %v4529 = vmul.f32 %v4394, %v4528
  %v4530 = vmul.f32 %v4518, 3.8918573e-05
  %v4531 = vadd.f32 %v4530, 0.001143296
  %v4532 = vmul.f32 %v4518, %v4531
  %v4533 = vadd.f32 %v4532, 0.014752088
  %v4534 = vmul.f32 %v4518, %v4533
  %v4535 = vadd.f32 %v4534, 0.112945676
  %v4536 = vmul.f32 %v4518, %v4535
  %v4537 = vadd.f32 %v4536, 0.4994258
  %v4538 = vmul.f32 %v4518, %v4537
  %v4539 = vadd.f32 %v4538, 1.0
  %v4540 = vrcp.pop %v4539
  %v4541 = vmul.f32 %v4539, %v4540
  %v4542 = vsub.f32 1.0, %v4541
  %v4543 = vmul.f32 %v4540, %v4542
  %v4544 = vadd.f32 %v4540, %v4543
  %vm4545 = vweird.f32 %v4539
  %vm4546 = vweird.f32 %v4540
  %vm4547 = vmor %vm4545, %vm4546
  %v4548 = vsel %vm4547, %v4540, %v4544
  %v4549 = vand.u32 2147483647, %v4539
  %vm4550 = vcmp.eq.f32.partialorder %v4549, 8.507059e+37
  %v4551 = vand.u32 %v4539, 2147483648
  %v4552 = vor.u32 1.1754944e-38, %v4551
  %v4553 = vsel %vm4550, %v4552, %v4548
  %v4554 = vmul.f32 %v4529, %v4553
  %v4555 = vmin.f32 %v4554, 1.0
  %v4556 = vmax.f32 %v4555, -1.0
  %v4557 = vmul.f32 %v4395, %v4395
  %v4558 = vmin.f32 16.0, %v4557
  %v4559 = vmul.f32 %v4558, 2.1237322e-06
  %v4560 = vadd.f32 %v4559, 0.00028619796
  %v4561 = vmul.f32 %v4558, %v4560
  %v4562 = vadd.f32 %v4561, 0.0036580483
  %v4563 = vmul.f32 %v4558, %v4562
  %v4564 = vadd.f32 %v4563, 0.05243302
  %v4565 = vmul.f32 %v4558, %v4564
  %v4566 = vadd.f32 %v4565, 0.18741608
  %v4567 = vmul.f32 %v4558, %v4566
  %v4568 = vadd.f32 %v4567, 1.1283791
  %v4569 = vmul.f32 %v4395, %v4568
  %v4570 = vmul.f32 %v4558, 3.8918573e-05
  %v4571 = vadd.f32 %v4570, 0.001143296
  %v4572 = vmul.f32 %v4558, %v4571
  %v4573 = vadd.f32 %v4572, 0.014752088
  %v4574 = vmul.f32 %v4558, %v4573
  %v4575 = vadd.f32 %v4574, 0.112945676
  %v4576 = vmul.f32 %v4558, %v4575
  %v4577 = vadd.f32 %v4576, 0.4994258
  %v4578 = vmul.f32 %v4558, %v4577
  %v4579 = vadd.f32 %v4578, 1.0
  %v4580 = vrcp.pop %v4579
  %v4581 = vmul.f32 %v4579, %v4580
  %v4582 = vsub.f32 1.0, %v4581
  %v4583 = vmul.f32 %v4580, %v4582
  %v4584 = vadd.f32 %v4580, %v4583
  %vm4585 = vweird.f32 %v4579
  %vm4586 = vweird.f32 %v4580
  %vm4587 = vmor %vm4585, %vm4586
  %v4588 = vsel %vm4587, %v4580, %v4584
  %v4589 = vand.u32 2147483647, %v4579
  %vm4590 = vcmp.eq.f32.partialorder %v4589, 8.507059e+37
  %v4591 = vand.u32 %v4579, 2147483648
  %v4592 = vor.u32 1.1754944e-38, %v4591
  %v4593 = vsel %vm4590, %v4592, %v4588
  %v4594 = vmul.f32 %v4569, %v4593
  %v4595 = vmin.f32 %v4594, 1.0
  %v4596 = vmax.f32 %v4595, -1.0
  %v4597 = vmul.f32 %v4396, %v4396
  %v4598 = vmin.f32 16.0, %v4597
  %v4599 = vmul.f32 %v4598, 2.1237322e-06
  %v4600 = vadd.f32 %v4599, 0.00028619796
  %v4601 = vmul.f32 %v4598, %v4600
  %v4602 = vadd.f32 %v4601, 0.0036580483
  %v4603 = vmul.f32 %v4598, %v4602
  %v4604 = vadd.f32 %v4603, 0.05243302
  %v4605 = vmul.f32 %v4598, %v4604
  %v4606 = vadd.f32 %v4605, 0.18741608
  %v4607 = vmul.f32 %v4598, %v4606
  %v4608 = vadd.f32 %v4607, 1.1283791
  %v4609 = vmul.f32 %v4396, %v4608
  %v4610 = vmul.f32 %v4598, 3.8918573e-05
  %v4611 = vadd.f32 %v4610, 0.001143296
  %v4612 = vmul.f32 %v4598, %v4611
  %v4613 = vadd.f32 %v4612, 0.014752088
  %v4614 = vmul.f32 %v4598, %v4613
  %v4615 = vadd.f32 %v4614, 0.112945676
  %v4616 = vmul.f32 %v4598, %v4615
  %v4617 = vadd.f32 %v4616, 0.4994258
  %v4618 = vmul.f32 %v4598, %v4617
  %v4619 = vadd.f32 %v4618, 1.0
  %v4620 = vrcp.pop %v4619
  %v4621 = vmul.f32 %v4619, %v4620
  %v4622 = vsub.f32 1.0, %v4621
  %v4623 = vmul.f32 %v4620, %v4622
  %v4624 = vadd.f32 %v4620, %v4623
  %vm4625 = vweird.f32 %v4619
  %vm4626 = vweird.f32 %v4620
  %vm4627 = vmor %vm4625, %vm4626
  %v4628 = vsel %vm4627, %v4620, %v4624
  %v4629 = vand.u32 2147483647, %v4619
  %vm4630 = vcmp.eq.f32.partialorder %v4629, 8.507059e+37
  %v4631 = vand.u32 %v4619, 2147483648
  %v4632 = vor.u32 1.1754944e-38, %v4631
  %v4633 = vsel %vm4630, %v4632, %v4628
  %v4634 = vmul.f32 %v4609, %v4633
  %v4635 = vmin.f32 %v4634, 1.0
  %v4636 = vmax.f32 %v4635, -1.0
  %v4637 = vadd.f32 %v4436, 1.0
  %v4638 = vadd.f32 %v4476, 1.0
  %v4639 = vadd.f32 %v4516, 1.0
  %v4640 = vadd.f32 %v4556, 1.0
  %v4641 = vadd.f32 %v4596, 1.0
  %v4642 = vadd.f32 %v4636, 1.0
  %v4643 = vmul.f32 %v4385, %v4637
  %v4644 = vmul.f32 %v4386, %v4638
  %v4645 = vmul.f32 %v4387, %v4639
  %v4646 = vmul.f32 %v4388, %v4640
  %v4647 = vmul.f32 %v4389, %v4641
  %v4648 = vmul.f32 %v4390, %v4642
  %s4649 = scalar_lea.vmem %s15, 64
  %v4650 = vld [vmem:[%s4649] sm:$0xff]
  %v4651 = vld [vmem:[%s4649 + $0x8] sm:$0xff]
  %v4652 = vld [vmem:[%s4649 + $0x10] sm:$0xff]
  %v4653 = vld [vmem:[%s4649 + $0x18] sm:$0xff]
  %v4654 = vld [vmem:[%s4649 + $0x20] sm:$0xff]
  %v4655 = vld [vmem:[%s4649 + $0x28] sm:$0xff]
  %v4656 = vld [vmem:[%s4649 + $0x30] sm:$0xff]
  %v4657 = vld [vmem:[%s4649 + $0x38] sm:$0xff]
  %v4659 = vsel %vm2370, %v4643, 0
  %v4662 = vsel %vm2370, %v4644, 0
  %v4665 = vsel %vm2370, %v4645, 0
  %v4668 = vsel %vm2370, %v4646, 0
  %v4671 = vsel %vm2370, %v4647, 0
  %v4674 = vsel %vm2370, %v4648, 0
  %4676 = vmatpush.msra.mxu0 0.0
  %4677 = vmatpush.msra.mxu0 0.0
  %4678 = vmatpush.msra.mxu0 0.0
  %4679 = vmatpush.msra.mxu0 0.0
  %4680 = vmatpush.msra.mxu0 0.0
  %4681 = vmatpush.msra.mxu0 0.0
  %4682 = vmatpush.msra.mxu0 0.0
  %4683 = vmatpush.msra.mxu0 0.0
  %4684 = vmatpush.msra.mxu0 %v4657
  %4685 = vmatpush.msra.mxu0 %v4656
  %4686 = vmatpush.msra.mxu0 %v4655
  %4687 = vmatpush.msra.mxu0 %v4654
  %4688 = vmatpush.msra.mxu0 %v4653
  %4689 = vmatpush.msra.mxu0 %v4652
  %4690 = vmatpush.msra.mxu0 %v4651
  %4691 = vmatpush.msra.mxu0 %v4650
  %4692 = vmatmul.f32.gmra.mxu0 %v4659
  %v4693 = vpop.f32.mrf.mxu0
  %v4694 = vadd.f32 0.0, %v4693
  %4695 = vmatmul.f32.gmra.mxu0 %v4662
  %v4696 = vpop.f32.mrf.mxu0
  %v4697 = vadd.f32 0.0, %v4696
  %4698 = vmatmul.f32.gmra.mxu0 %v4665
  %v4699 = vpop.f32.mrf.mxu0
  %v4700 = vadd.f32 0.0, %v4699
  %4701 = vmatmul.f32.gmra.mxu0 %v4668
  %v4702 = vpop.f32.mrf.mxu0
  %v4703 = vadd.f32 0.0, %v4702
  %4704 = vmatmul.f32.gmra.mxu0 %v4671
  %v4705 = vpop.f32.mrf.mxu0
  %v4706 = vadd.f32 0.0, %v4705
  %4707 = vmatmul.f32.gmra.mxu0 %v4674
  %v4708 = vpop.f32.mrf.mxu0
  %v4709 = vadd.f32 0.0, %v4708
  %4710 = vdwg.mxu0
  %v4711 = vadd.f32 %v4162, %v4694
  %v4712 = vadd.f32 %v4163, %v4697
  %v4713 = vadd.f32 %v4164, %v4700
  %v4714 = vadd.f32 %v4165, %v4703
  %v4715 = vadd.f32 %v4166, %v4706
  %v4716 = vadd.f32 %v4167, %v4709
  %s4717 = scalar_lea.vmem %s16, 1
  %v4718 = vld [vmem:[%s4717] sm:$0x1]
  %v4720 = vperm.slane %v4718, 0
  %v4722 = vadd.f32 %v4711, %v4720
  %v4723 = vadd.f32 %v4712, %v4720
  %v4724 = vadd.f32 %v4713, %v4720
  %v4725 = vadd.f32 %v4714, %v4720
  %v4726 = vadd.f32 %v4715, %v4720
  %v4727 = vadd.f32 %v4716, %v4720
  %v4728 = vld [vmem:[%s17] sm:$0x1]
  %v4729 = vld [vmem:[%s18] sm:$0x1]
  %v4730 = vsel %vm154, %v4722, 0.0
  %4731 = vadd.xlane.f32.xlu0 %v4730
  %v4732 = vpop.xlane.xlu0 %4731
  %v4733 = vsel %vm154, %v4723, 0.0
  %4734 = vadd.xlane.f32.xlu0 %v4733
  %v4735 = vpop.xlane.xlu0 %4734
  %v4736 = vsel %vm154, %v4724, 0.0
  %4737 = vadd.xlane.f32.xlu0 %v4736
  %v4738 = vpop.xlane.xlu0 %4737
  %v4739 = vsel %vm154, %v4725, 0.0
  %4740 = vadd.xlane.f32.xlu0 %v4739
  %v4741 = vpop.xlane.xlu0 %4740
  %v4742 = vsel %vm154, %v4726, 0.0
  %4743 = vadd.xlane.f32.xlu0 %v4742
  %v4744 = vpop.xlane.xlu0 %4743
  %v4745 = vsel %vm154, %v4727, 0.0
  %4746 = vadd.xlane.f32.xlu0 %v4745
  %v4747 = vpop.xlane.xlu0 %4746
  %v4748 = vmul.f32 %v4732, %v179
  %v4749 = vmul.f32 %v4735, %v179
  %v4750 = vmul.f32 %v4738, %v179
  %v4751 = vmul.f32 %v4741, %v179
  %v4752 = vmul.f32 %v4744, %v179
  %v4753 = vmul.f32 %v4747, %v179
  %v4754 = vsub.f32 %v4722, %v4748
  %v4755 = vsub.f32 %v4723, %v4749
  %v4756 = vsub.f32 %v4724, %v4750
  %v4757 = vsub.f32 %v4725, %v4751
  %v4758 = vsub.f32 %v4726, %v4752
  %v4759 = vsub.f32 %v4727, %v4753
  %v4760 = vmul.f32 %v4754, %v4754
  %v4761 = vmul.f32 %v4755, %v4755
  %v4762 = vmul.f32 %v4756, %v4756
  %v4763 = vmul.f32 %v4757, %v4757
  %v4764 = vmul.f32 %v4758, %v4758
  %v4765 = vmul.f32 %v4759, %v4759
  %v4766 = vsel %vm154, %v4760, 0.0
  %4767 = vadd.xlane.f32.xlu0 %v4766
  %v4768 = vpop.xlane.xlu0 %4767
  %v4769 = vsel %vm154, %v4761, 0.0
  %4770 = vadd.xlane.f32.xlu0 %v4769
  %v4771 = vpop.xlane.xlu0 %4770
  %v4772 = vsel %vm154, %v4762, 0.0
  %4773 = vadd.xlane.f32.xlu0 %v4772
  %v4774 = vpop.xlane.xlu0 %4773
  %v4775 = vsel %vm154, %v4763, 0.0
  %4776 = vadd.xlane.f32.xlu0 %v4775
  %v4777 = vpop.xlane.xlu0 %4776
  %v4778 = vsel %vm154, %v4764, 0.0
  %4779 = vadd.xlane.f32.xlu0 %v4778
  %v4780 = vpop.xlane.xlu0 %4779
  %v4781 = vsel %vm154, %v4765, 0.0
  %4782 = vadd.xlane.f32.xlu0 %v4781
  %v4783 = vpop.xlane.xlu0 %4782
  %v4784 = vmul.f32 %v4768, %v179
  %v4785 = vmul.f32 %v4771, %v179
  %v4786 = vmul.f32 %v4774, %v179
  %v4787 = vmul.f32 %v4777, %v179
  %v4788 = vmul.f32 %v4780, %v179
  %v4789 = vmul.f32 %v4783, %v179
  %v4790 = vadd.f32 %v4784, 1e-12
  %v4791 = vadd.f32 %v4785, 1e-12
  %v4792 = vadd.f32 %v4786, 1e-12
  %v4793 = vadd.f32 %v4787, 1e-12
  %v4794 = vadd.f32 %v4788, 1e-12
  %v4795 = vadd.f32 %v4789, 1e-12
  %v4796 = vrsqrt.pop %v4790
  %v4797 = vmul.f32 %v4796, %v4790
  %v4798 = vmul.f32 %v4797, %v4796
  %v4799 = vmul.f32 0.5, %v4798
  %v4800 = vsub.f32 1.5, %v4799
  %v4801 = vmul.f32 %v4796, %v4800
  %vm4802 = vweird.f32 %v4790
  %vm4803 = vweird.f32 %v4796
  %vm4804 = vmor %vm4802, %vm4803
  %v4805 = vsel %vm4804, %v4796, %v4801
  %v4806 = vrsqrt.pop %v4791
  %v4807 = vmul.f32 %v4806, %v4791
  %v4808 = vmul.f32 %v4807, %v4806
  %v4809 = vmul.f32 0.5, %v4808
  %v4810 = vsub.f32 1.5, %v4809
  %v4811 = vmul.f32 %v4806, %v4810
  %vm4812 = vweird.f32 %v4791
  %vm4813 = vweird.f32 %v4806
  %vm4814 = vmor %vm4812, %vm4813
  %v4815 = vsel %vm4814, %v4806, %v4811
  %v4816 = vrsqrt.pop %v4792
  %v4817 = vmul.f32 %v4816, %v4792
  %v4818 = vmul.f32 %v4817, %v4816
  %v4819 = vmul.f32 0.5, %v4818
  %v4820 = vsub.f32 1.5, %v4819
  %v4821 = vmul.f32 %v4816, %v4820
  %vm4822 = vweird.f32 %v4792
  %vm4823 = vweird.f32 %v4816
  %vm4824 = vmor %vm4822, %vm4823
  %v4825 = vsel %vm4824, %v4816, %v4821
  %v4826 = vrsqrt.pop %v4793
  %v4827 = vmul.f32 %v4826, %v4793
  %v4828 = vmul.f32 %v4827, %v4826
  %v4829 = vmul.f32 0.5, %v4828
  %v4830 = vsub.f32 1.5, %v4829
  %v4831 = vmul.f32 %v4826, %v4830
  %vm4832 = vweird.f32 %v4793
  %vm4833 = vweird.f32 %v4826
  %vm4834 = vmor %vm4832, %vm4833
  %v4835 = vsel %vm4834, %v4826, %v4831
  %v4836 = vrsqrt.pop %v4794
  %v4837 = vmul.f32 %v4836, %v4794
  %v4838 = vmul.f32 %v4837, %v4836
  %v4839 = vmul.f32 0.5, %v4838
  %v4840 = vsub.f32 1.5, %v4839
  %v4841 = vmul.f32 %v4836, %v4840
  %vm4842 = vweird.f32 %v4794
  %vm4843 = vweird.f32 %v4836
  %vm4844 = vmor %vm4842, %vm4843
  %v4845 = vsel %vm4844, %v4836, %v4841
  %v4846 = vrsqrt.pop %v4795
  %v4847 = vmul.f32 %v4846, %v4795
  %v4848 = vmul.f32 %v4847, %v4846
  %v4849 = vmul.f32 0.5, %v4848
  %v4850 = vsub.f32 1.5, %v4849
  %v4851 = vmul.f32 %v4846, %v4850
  %vm4852 = vweird.f32 %v4795
  %vm4853 = vweird.f32 %v4846
  %vm4854 = vmor %vm4852, %vm4853
  %v4855 = vsel %vm4854, %v4846, %v4851
  %v4856 = vmul.f32 %v4754, %v4805
  %v4857 = vmul.f32 %v4755, %v4815
  %v4858 = vmul.f32 %v4756, %v4825
  %v4859 = vmul.f32 %v4757, %v4835
  %v4860 = vmul.f32 %v4758, %v4845
  %v4861 = vmul.f32 %v4759, %v4855
  %v4863 = vperm.slane %v4728, 0
  %v4865 = vmul.f32 %v4856, %v4863
  %v4866 = vmul.f32 %v4857, %v4863
  %v4867 = vmul.f32 %v4858, %v4863
  %v4868 = vmul.f32 %v4859, %v4863
  %v4869 = vmul.f32 %v4860, %v4863
  %v4870 = vmul.f32 %v4861, %v4863
  %v4872 = vperm.slane %v4729, 0
  %v4874 = vadd.f32 %v4865, %v4872
  %v4875 = vadd.f32 %v4866, %v4872
  %v4876 = vadd.f32 %v4867, %v4872
  %v4877 = vadd.f32 %v4868, %v4872
  %v4878 = vadd.f32 %v4869, %v4872
  %v4879 = vadd.f32 %v4870, %v4872
  %4880 = vst.msk [vmem:[%s19] sm:$0xff] %vm154, %v4874
  %4881 = vst.msk [vmem:[%s19 + $0x8] sm:$0xff] %vm154, %v4875
  %4882 = vst.msk [vmem:[%s19 + $0x10] sm:$0xff] %vm154, %v4876
  %4883 = vst.msk [vmem:[%s19 + $0x18] sm:$0xff] %vm154, %v4877
  %4884 = vst.msk [vmem:[%s19 + $0x20] sm:$0xff] %vm154, %v4878
  %4885 = vst.msk [vmem:[%s19 + $0x28] sm:$0xff] %vm154, %v4879
  // Predicated region
  $region78: #{vit_adapter_forward.1} parent=0 // pred_check
    _
  $region79: #{vit_adapter_forward.1} parent=0 // pred_check_branch
    %4887 = sbr.rel (0) target = $region81
  $region80: #{vit_adapter_forward.1} parent=0 // pred_region
    _
  $region81: #{vit_adapter_forward.1} parent=0 // pred_fallthru
    _
  // Predicated region
  $region82: #{vit_adapter_forward.1} parent=0 // pred_check
    _
  $region83: #{vit_adapter_forward.1} parent=0 // pred_check_branch
    %4889 = sbr.rel (0) target = $region85
  $region84: #{vit_adapter_forward.1} parent=0 // pred_region
    _
  $region85: #{vit_adapter_forward.1} parent=0 // pred_fallthru
    _

</llo_original>
